<compile_context>
chip_gen: v6e
topology: v6e:2x2x1
jax: 0.10.0
libtpu: 0.0.40
codegen_flags: <defaults>
</compile_context>

<pallas_src>
import functools
import math

import jax
import jax.numpy as jnp
from jax import lax
from jax.experimental import pallas as pl
from jax.experimental.pallas import tpu as pltpu


def _layernorm(x, g, b, eps=1e-5):
    mu = jnp.mean(x, axis=-1, keepdims=True)
    var = jnp.mean(jnp.square(x - mu), axis=-1, keepdims=True)
    return (x - mu) * lax.rsqrt(var + eps) * g + b


def transformer_albert_kernel(n_layers, exp_in_bf16,
                              tok_ref, pos_ref, seg_oh_ref, seg_tab_ref, nbias_ref,
                              w_tok2, b_tok2, g0, be0,
                              wq, bq, wk, bk, wv, bv, wo, bo,
                              wp, bp, g1, be1,
                              w1, b1, w2, b2, g2, be2,
                              out_ref):
    f32, bf16 = jnp.float32, jnp.bfloat16
    H = out_ref.shape[-1]

    # ---- hoist all weight / bias / gain loads out of the layer loop ----------
    W_tok2 = w_tok2[...]                                   # bf16 (cast in wrapper)
    Wq, Wk, Wv, Wo = wq[...], wk[...], wv[...], wo[...]    # bf16
    Wp, W1, W2 = wp[...], w1[...], w2[...]                 # bf16
    Bq, Bk, Bv, Bo = bq[...], bk[...], bv[...], bo[...]    # f32
    Bp, B1, B2 = bp[...], b1[...], b2[...]
    G0, BE0 = g0[...], be0[...]
    G1, BE1 = g1[...], be1[...]
    G2, BE2 = g2[...], be2[...]

    # ---- ALBERT embeddings: tok_embed2(tok_embed1(x)) + pos + seg, then norm0 -
    tok = tok_ref[...]                                     # (bt, S, E) bf16
    e = lax.dot_general(tok, W_tok2, (((2,), (0,)), ((), ())),
                        preferred_element_type=f32) + b_tok2[...]
    # segment lookup in-kernel: (bt,S,n_seg) one-hot @ (n_seg,H) table (MXU, f32 acc)
    seg_e = lax.dot_general(seg_oh_ref[...], seg_tab_ref[...],
                            (((2,), (0,)), ((), ())), preferred_element_type=f32)
    e = e + pos_ref[...][None] + seg_e                     # shared (S,H) pos table
    h = _layernorm(e, G0, BE0)                             # (bt, S, H) f32

    neg_bias = nbias_ref[...]                              # (bt, 1, S) additive mask (hoisted)
    scale = 1.0 / math.sqrt(H)                             # single head -> d_k == H

    def linear_f32(x, W, Bb):
        """(bt,S,In) @ (In,Out) bf16 -> f32 (MXU, f32 acc) + bias."""
        return lax.dot_general(x.astype(bf16), W, (((x.ndim - 1,), (0,)), ((), ())),
                               preferred_element_type=f32) + Bb

    def linear_bf16(x, W, Bb, s=None):
        """Same, but the result is materialized directly in bf16 (VMEM saver)."""
        y = linear_f32(x, W, Bb)
        if s is not None:
            y = y * s
        return y.astype(bf16)

    def layer(_, h):
        q = linear_bf16(h, Wq, Bq, scale)                  # fold 1/sqrt(H) into q
        k = linear_bf16(h, Wk, Bk)
        v = linear_bf16(h, Wv, Bv)

        # scores: contract last dims directly (no k.T -> no XLU transpose)
        scores = lax.dot_general(q, k, (((2,), (2,)), ((0,), (0,))),
                                 preferred_element_type=f32)       # (bt, S, S) f32
        scores = scores + neg_bias                                 # additive mask (single VPU add)
        scores = scores - jnp.max(scores, axis=-1, keepdims=True)
        if exp_in_bf16:                                    # bf16 EUP on v6e/v7x
            p = jnp.exp(scores.astype(bf16))
            l = jnp.sum(p.astype(f32), axis=-1, keepdims=True)
        else:                                              # f32 exp elsewhere (v5e has no bf16 EUP)
            p_f = jnp.exp(scores)
            l = jnp.sum(p_f, axis=-1, keepdims=True)
            p = p_f.astype(bf16)
        inv_l = pl.reciprocal(l, approx=True)              # EUP slot, ~free

        # normalize after p@v: (p @ v) * (1/l) rescales (bt,S,H) instead of (bt,S,S)
        a = lax.dot_general(p, v, (((2,), (1,)), ((0,), (0,))),
                            preferred_element_type=f32) * inv_l    # (bt, S, H) f32
        h = linear_f32(a, Wo, Bo)                                  # attn out proj

        # h = norm1(h + proj(h))   -- exact PyTorch forward ordering
        h = _layernorm(h + linear_f32(h, Wp, Bp), G1, BE1)

        # h = norm2(h + pwff(h)), ReLU FFN with bf16 hidden activation
        ff = jnp.maximum(linear_f32(h, W1, B1), 0.0).astype(bf16)  # (bt, S, FF) bf16
        ff = lax.dot_general(ff, W2, (((2,), (0,)), ((), ())),
                             preferred_element_type=f32) + B2
        h = _layernorm(h + ff, G2, BE2)
        return h

    h = lax.fori_loop(0, n_layers, layer, h)               # shared (ALBERT) weights
    out_ref[...] = h.astype(out_ref.dtype)


def init_params(key, vocab, embed, hidden, hidden_ff, max_len, n_segments):
    ks = jax.random.split(key, 12)
    s = 0.02
    p = {}
    p["tok1"] = jax.random.normal(ks[0], (vocab, embed)) * s
    p["pos"] = jax.random.normal(ks[1], (max_len, hidden)) * s
    p["seg"] = jax.random.normal(ks[2], (n_segments, hidden)) * s
    p["w_tok2"] = jax.random.normal(ks[3], (embed, hidden)) * s
    p["b_tok2"] = jnp.zeros((1, hidden))
    p["g0"], p["be0"] = jnp.ones((1, hidden)), jnp.zeros((1, hidden))
    p["wq"] = jax.random.normal(ks[4], (hidden, hidden)) * s
    p["wk"] = jax.random.normal(ks[5], (hidden, hidden)) * s
    p["wv"] = jax.random.normal(ks[6], (hidden, hidden)) * s
    p["wo"] = jax.random.normal(ks[7], (hidden, hidden)) * s
    p["bq"] = p["bk"] = p["bv"] = p["bo"] = jnp.zeros((1, hidden))
    p["wp"] = jax.random.normal(ks[8], (hidden, hidden)) * s
    p["bp"] = jnp.zeros((1, hidden))
    p["g1"], p["be1"] = jnp.ones((1, hidden)), jnp.zeros((1, hidden))
    p["w1"] = jax.random.normal(ks[9], (hidden, hidden_ff)) * s
    p["b1"] = jnp.zeros((1, hidden_ff))
    p["w2"] = jax.random.normal(ks[10], (hidden_ff, hidden)) * s
    p["b2"] = jnp.zeros((1, hidden))
    p["g2"], p["be2"] = jnp.ones((1, hidden)), jnp.zeros((1, hidden))
    return p


def _vmem_limit_bytes():
    """Generation-aware scoped-VMEM limit: ~75% of physical per-core VMEM."""
    try:
        cap = getattr(pltpu.get_tpu_info(), "vmem_capacity_bytes", None)
    except Exception:
        cap = None
    if not cap:
        cap = 64 * 1024 * 1024          # conservative fallback (v7x per-core VMEM)
    return int(cap * 0.75)


def _exp_in_bf16():
    """bf16 EUP exp only on v6/v7-class chips (v5e has no bf16 EUP/VPU)."""
    try:
        kind = jax.devices()[0].device_kind.lower()
    except Exception:
        kind = ""
    return ("v6" in kind) or ("v7" in kind) or ("7x" in kind)


def _pick_bt(B, S, E, H, FF, n_seg, act_budget, target_rows):
    """Largest divisor of B whose (bt,S,*) activation slab fits the VMEM budget,
    keeps bt*S <= target_rows, and leaves >=2 grid steps (v7x megacore)."""
    per_seq = (2 * S * (2 * E + 2 * n_seg + 4 + 4 * H)                 # dbl-buffered per-batch I/O blocks
               + 2 * (S * (4 * 4 * H + 3 * 2 * H + 2 * FF + 4)         # h/e/residual f32, qkv bf16, ff bf16
                      + S * S * 6))                                    # scores f32 + p bf16
    min_steps = 2 if B >= 2 else 1
    bt = 1
    for d in range(1, B + 1):
        if B % d or (B // d) < min_steps:
            continue
        if d * S > max(target_rows, S):
            continue
        if d * per_seq > act_budget:
            continue
        bt = d
    return bt


def transformer_albert(params, x, seg, mask, n_layers, *, target_rows=512):
    B, S = x.shape
    E = params["tok1"].shape[1]
    H = params["pos"].shape[1]
    FF = params["w1"].shape[1]
    n_seg = params["seg"].shape[0]
    bf16 = jnp.bfloat16

    vmem_limit = _vmem_limit_bytes()
    exp_bf16 = _exp_in_bf16()

    # resident weight bytes (conservatively assume double-buffered) -> activation budget
    w_bytes = 2 * (E * H + 5 * H * H + 2 * H * FF)          # bf16 matmul weights
    w_bytes += 4 * (9 * H + FF) + 4 * S * H + 2 * n_seg * H  # f32 biases/gains + pos/seg tables
    act_budget = max(vmem_limit - 2 * w_bytes - (4 << 20), 1 << 20)
    bt = _pick_bt(B, S, E, H, FF, n_seg, act_budget, target_rows)
    grid = (B // bt,)

    # ---- host-side prep (embedding gather is data-dependent -> JAX glue) -----
    tok1_e = params["tok1"][x].astype(bf16)                 # (B, S, E) MXU operand
    seg_oh = jax.nn.one_hot(seg, n_seg, dtype=bf16)         # (B, S, n_seg) tiny, bf16
    pos_e = params["pos"][:S]                               # (S, H) f32, shared (no B-bcast)
    seg_tab = params["seg"].astype(bf16)                    # (n_seg, H) shared
    neg_bias = jnp.where(mask[:, None, :] > 0, 0.0, -1e9).astype(jnp.float32)  # (B,1,S)

    def wcast(name):                                        # bf16 MXU weights
        return params[name].astype(bf16)

    ordered = [tok1_e, pos_e, seg_oh, seg_tab, neg_bias,
               wcast("w_tok2"), params["b_tok2"], params["g0"], params["be0"],
               wcast("wq"), params["bq"], wcast("wk"), params["bk"],
               wcast("wv"), params["bv"], wcast("wo"), params["bo"],
               wcast("wp"), params["bp"], params["g1"], params["be1"],
               wcast("w1"), params["b1"], wcast("w2"), params["b2"],
               params["g2"], params["be2"]]

    def batch_spec(a):
        nd = a.ndim
        return pl.BlockSpec((bt,) + a.shape[1:],
                            lambda i, nd=nd: (i,) + (0,) * (nd - 1))

    def make_call(single_buffer_weights):
        def shared_spec(a):
            nd = a.ndim
            kw = {}
            if single_buffer_weights:
                # block index never changes -> one VMEM buffer, no double-buffering
                kw["pipeline_mode"] = pl.Buffered(1)
            return pl.BlockSpec(a.shape, lambda i, nd=nd: (0,) * nd, **kw)

        in_specs = [batch_spec(tok1_e), shared_spec(pos_e), batch_spec(seg_oh),
                    shared_spec(seg_tab), batch_spec(neg_bias)]
        in_specs += [shared_spec(a) for a in ordered[5:]]

        return pl.pallas_call(
            functools.partial(transformer_albert_kernel, n_layers, exp_bf16),
            out_shape=jax.ShapeDtypeStruct((B, S, H), jnp.float32),
            grid=grid,
            in_specs=in_specs,
            out_specs=pl.BlockSpec((bt, S, H), lambda i: (i, 0, 0)),
            compiler_params=pltpu.CompilerParams(
                dimension_semantics=("parallel",),
                vmem_limit_bytes=vmem_limit),
        )

    try:
        return make_call(True)(*ordered)
    except Exception:
        # Fallback if this JAX build rejects Buffered(1) on a pallas_call BlockSpec.
        return make_call(False)(*ordered)


def reference(params, x, seg, mask, n_layers):
    """Pure-JAX f32 reference of the same forward pass (for correctness check)."""
    B, S = x.shape
    H = params["pos"].shape[1]

    def ln(a, g, b):
        mu = a.mean(-1, keepdims=True)
        var = ((a - mu) ** 2).mean(-1, keepdims=True)
        return (a - mu) / jnp.sqrt(var + 1e-5) * g + b

    e = params["tok1"][x] @ params["w_tok2"] + params["b_tok2"]
    e = e + params["pos"][:S][None] + params["seg"][seg]
    h = ln(e, params["g0"], params["be0"])
    for _ in range(n_layers):
        q = h @ params["wq"] + params["bq"]
        k = h @ params["wk"] + params["bk"]
        v = h @ params["wv"] + params["bv"]
        scores = jnp.einsum("bqd,bkd->bqk", q, k) / jnp.sqrt(jnp.float32(H))
        scores = jnp.where(mask[:, None, :] > 0, scores, -1e9)
        p = jax.nn.softmax(scores, axis=-1)
        a = jnp.einsum("bqk,bkd->bqd", p, v)
        h = a @ params["wo"] + params["bo"]
        h = ln(h + h @ params["wp"] + params["bp"], params["g1"], params["be1"])
        ff = jax.nn.relu(h @ params["w1"] + params["b1"]) @ params["w2"] + params["b2"]
        h = ln(h + ff, params["g2"], params["be2"])
    return h


if __name__ == "__main__":
    # cfg: vocab_size=32, embedding=16, hidden=32, hidden_ff=64,
    #      max_len=16, n_segments=2, n_layers=2
    vocab, embed, hidden, hidden_ff = 32, 16, 32, 64
    max_len, n_segments, n_layers = 16, 2, 2
    B, S = 2, 8

    key = jax.random.PRNGKey(0)
    kp, kx, ks = jax.random.split(key, 3)
    params = init_params(kp, vocab, embed, hidden, hidden_ff, max_len, n_segments)

    x = jax.random.randint(kx, (B, S), 0, vocab, dtype=jnp.int32)
    seg = jax.random.randint(ks, (B, S), 0, n_segments, dtype=jnp.int32)
    mask = jnp.ones((B, S), dtype=jnp.int32).at[:, S - 2:].set(0)   # pad last 2 tokens

    out = jax.block_until_ready(transformer_albert(params, x, seg, mask, n_layers))

    ref = reference(params, x, seg, mask, n_layers)
    assert out.shape == (B, S, hidden)
    # bf16 MXU inputs + bf16 exp (v6/v7) + approx reciprocal -> looser tolerance than pure f32
    assert jnp.allclose(out, ref, rtol=4e-2, atol=4e-2), float(jnp.max(jnp.abs(out - ref)))

    print("KERNEL_OK")
</pallas_src>

<mosaic_0001>
module attributes {stable_mosaic.version = 11 : i64} {
  func.func @transformer_albert_kernel(%arg0: i32, %arg1: memref<1x8x16xbf16, #tpu.memory_space<vmem>>, %arg2: memref<8x32xf32, #tpu.memory_space<vmem>>, %arg3: memref<1x8x2xbf16, #tpu.memory_space<vmem>>, %arg4: memref<2x32xbf16, #tpu.memory_space<vmem>>, %arg5: memref<1x1x8xf32, #tpu.memory_space<vmem>>, %arg6: memref<16x32xbf16, #tpu.memory_space<vmem>>, %arg7: memref<1x32xf32, #tpu.memory_space<vmem>>, %arg8: memref<1x32xf32, #tpu.memory_space<vmem>>, %arg9: memref<1x32xf32, #tpu.memory_space<vmem>>, %arg10: memref<32x32xbf16, #tpu.memory_space<vmem>>, %arg11: memref<1x32xf32, #tpu.memory_space<vmem>>, %arg12: memref<32x32xbf16, #tpu.memory_space<vmem>>, %arg13: memref<1x32xf32, #tpu.memory_space<vmem>>, %arg14: memref<32x32xbf16, #tpu.memory_space<vmem>>, %arg15: memref<1x32xf32, #tpu.memory_space<vmem>>, %arg16: memref<32x32xbf16, #tpu.memory_space<vmem>>, %arg17: memref<1x32xf32, #tpu.memory_space<vmem>>, %arg18: memref<32x32xbf16, #tpu.memory_space<vmem>>, %arg19: memref<1x32xf32, #tpu.memory_space<vmem>>, %arg20: memref<1x32xf32, #tpu.memory_space<vmem>>, %arg21: memref<1x32xf32, #tpu.memory_space<vmem>>, %arg22: memref<32x64xbf16, #tpu.memory_space<vmem>>, %arg23: memref<1x64xf32, #tpu.memory_space<vmem>>, %arg24: memref<64x32xbf16, #tpu.memory_space<vmem>>, %arg25: memref<1x32xf32, #tpu.memory_space<vmem>>, %arg26: memref<1x32xf32, #tpu.memory_space<vmem>>, %arg27: memref<1x32xf32, #tpu.memory_space<vmem>>, %arg28: memref<1x8x32xf32, #tpu.memory_space<vmem>>) attributes {dimension_semantics = [#tpu.dimension_semantics<parallel>], iteration_bounds = array<i64: 2>, scalar_prefetch = 0 : i64, scratch_operands = 0 : i64, tpu.core_type = #tpu.core_type<tc>, window_params = [{transform_indices = @transform_0, window_bounds = array<i64: 1, 8, 16>}, {pipeline_mode = #tpu.pipeline_mode<synchronous>, transform_indices = @transform_1, window_bounds = array<i64: 8, 32>}, {transform_indices = @transform_2, window_bounds = array<i64: 1, 8, 2>}, {pipeline_mode = #tpu.pipeline_mode<synchronous>, transform_indices = @transform_3, window_bounds = array<i64: 2, 32>}, {transform_indices = @transform_4, window_bounds = array<i64: 1, 1, 8>}, {pipeline_mode = #tpu.pipeline_mode<synchronous>, transform_indices = @transform_5, window_bounds = array<i64: 16, 32>}, {pipeline_mode = #tpu.pipeline_mode<synchronous>, transform_indices = @transform_6, window_bounds = array<i64: 1, 32>}, {pipeline_mode = #tpu.pipeline_mode<synchronous>, transform_indices = @transform_7, window_bounds = array<i64: 1, 32>}, {pipeline_mode = #tpu.pipeline_mode<synchronous>, transform_indices = @transform_8, window_bounds = array<i64: 1, 32>}, {pipeline_mode = #tpu.pipeline_mode<synchronous>, transform_indices = @transform_9, window_bounds = array<i64: 32, 32>}, {pipeline_mode = #tpu.pipeline_mode<synchronous>, transform_indices = @transform_10, window_bounds = array<i64: 1, 32>}, {pipeline_mode = #tpu.pipeline_mode<synchronous>, transform_indices = @transform_11, window_bounds = array<i64: 32, 32>}, {pipeline_mode = #tpu.pipeline_mode<synchronous>, transform_indices = @transform_12, window_bounds = array<i64: 1, 32>}, {pipeline_mode = #tpu.pipeline_mode<synchronous>, transform_indices = @transform_13, window_bounds = array<i64: 32, 32>}, {pipeline_mode = #tpu.pipeline_mode<synchronous>, transform_indices = @transform_14, window_bounds = array<i64: 1, 32>}, {pipeline_mode = #tpu.pipeline_mode<synchronous>, transform_indices = @transform_15, window_bounds = array<i64: 32, 32>}, {pipeline_mode = #tpu.pipeline_mode<synchronous>, transform_indices = @transform_16, window_bounds = array<i64: 1, 32>}, {pipeline_mode = #tpu.pipeline_mode<synchronous>, transform_indices = @transform_17, window_bounds = array<i64: 32, 32>}, {pipeline_mode = #tpu.pipeline_mode<synchronous>, transform_indices = @transform_18, window_bounds = array<i64: 1, 32>}, {pipeline_mode = #tpu.pipeline_mode<synchronous>, transform_indices = @transform_19, window_bounds = array<i64: 1, 32>}, {pipeline_mode = #tpu.pipeline_mode<synchronous>, transform_indices = @transform_20, window_bounds = array<i64: 1, 32>}, {pipeline_mode = #tpu.pipeline_mode<synchronous>, transform_indices = @transform_21, window_bounds = array<i64: 32, 64>}, {pipeline_mode = #tpu.pipeline_mode<synchronous>, transform_indices = @transform_22, window_bounds = array<i64: 1, 64>}, {pipeline_mode = #tpu.pipeline_mode<synchronous>, transform_indices = @transform_23, window_bounds = array<i64: 64, 32>}, {pipeline_mode = #tpu.pipeline_mode<synchronous>, transform_indices = @transform_24, window_bounds = array<i64: 1, 32>}, {pipeline_mode = #tpu.pipeline_mode<synchronous>, transform_indices = @transform_25, window_bounds = array<i64: 1, 32>}, {pipeline_mode = #tpu.pipeline_mode<synchronous>, transform_indices = @transform_26, window_bounds = array<i64: 1, 32>}, {transform_indices = @transform_27, window_bounds = array<i64: 1, 8, 32>}]} {
    %c0 = arith.constant 0 : index
    %c0_0 = arith.constant 0 : index
    %0 = vector.load %arg6[%c0, %c0_0] : memref<16x32xbf16, #tpu.memory_space<vmem>>, vector<16x32xbf16>
    %c0_1 = arith.constant 0 : index
    %c0_2 = arith.constant 0 : index
    %1 = vector.load %arg10[%c0_1, %c0_2] : memref<32x32xbf16, #tpu.memory_space<vmem>>, vector<32x32xbf16>
    %c0_3 = arith.constant 0 : index
    %c0_4 = arith.constant 0 : index
    %2 = vector.load %arg12[%c0_3, %c0_4] : memref<32x32xbf16, #tpu.memory_space<vmem>>, vector<32x32xbf16>
    %c0_5 = arith.constant 0 : index
    %c0_6 = arith.constant 0 : index
    %3 = vector.load %arg14[%c0_5, %c0_6] : memref<32x32xbf16, #tpu.memory_space<vmem>>, vector<32x32xbf16>
    %c0_7 = arith.constant 0 : index
    %c0_8 = arith.constant 0 : index
    %4 = vector.load %arg16[%c0_7, %c0_8] : memref<32x32xbf16, #tpu.memory_space<vmem>>, vector<32x32xbf16>
    %c0_9 = arith.constant 0 : index
    %c0_10 = arith.constant 0 : index
    %5 = vector.load %arg18[%c0_9, %c0_10] : memref<32x32xbf16, #tpu.memory_space<vmem>>, vector<32x32xbf16>
    %c0_11 = arith.constant 0 : index
    %c0_12 = arith.constant 0 : index
    %6 = vector.load %arg22[%c0_11, %c0_12] : memref<32x64xbf16, #tpu.memory_space<vmem>>, vector<32x64xbf16>
    %c0_13 = arith.constant 0 : index
    %c0_14 = arith.constant 0 : index
    %7 = vector.load %arg24[%c0_13, %c0_14] : memref<64x32xbf16, #tpu.memory_space<vmem>>, vector<64x32xbf16>
    %c0_15 = arith.constant 0 : index
    %c0_16 = arith.constant 0 : index
    %8 = vector.load %arg11[%c0_15, %c0_16] : memref<1x32xf32, #tpu.memory_space<vmem>>, vector<1x32xf32>
    %c0_17 = arith.constant 0 : index
    %c0_18 = arith.constant 0 : index
    %9 = vector.load %arg13[%c0_17, %c0_18] : memref<1x32xf32, #tpu.memory_space<vmem>>, vector<1x32xf32>
    %c0_19 = arith.constant 0 : index
    %c0_20 = arith.constant 0 : index
    %10 = vector.load %arg15[%c0_19, %c0_20] : memref<1x32xf32, #tpu.memory_space<vmem>>, vector<1x32xf32>
    %c0_21 = arith.constant 0 : index
    %c0_22 = arith.constant 0 : index
    %11 = vector.load %arg17[%c0_21, %c0_22] : memref<1x32xf32, #tpu.memory_space<vmem>>, vector<1x32xf32>
    %c0_23 = arith.constant 0 : index
    %c0_24 = arith.constant 0 : index
    %12 = vector.load %arg19[%c0_23, %c0_24] : memref<1x32xf32, #tpu.memory_space<vmem>>, vector<1x32xf32>
    %c0_25 = arith.constant 0 : index
    %c0_26 = arith.constant 0 : index
    %13 = vector.load %arg23[%c0_25, %c0_26] : memref<1x64xf32, #tpu.memory_space<vmem>>, vector<1x64xf32>
    %c0_27 = arith.constant 0 : index
    %c0_28 = arith.constant 0 : index
    %14 = vector.load %arg25[%c0_27, %c0_28] : memref<1x32xf32, #tpu.memory_space<vmem>>, vector<1x32xf32>
    %c0_29 = arith.constant 0 : index
    %c0_30 = arith.constant 0 : index
    %15 = vector.load %arg8[%c0_29, %c0_30] : memref<1x32xf32, #tpu.memory_space<vmem>>, vector<1x32xf32>
    %c0_31 = arith.constant 0 : index
    %c0_32 = arith.constant 0 : index
    %16 = vector.load %arg9[%c0_31, %c0_32] : memref<1x32xf32, #tpu.memory_space<vmem>>, vector<1x32xf32>
    %c0_33 = arith.constant 0 : index
    %c0_34 = arith.constant 0 : index
    %17 = vector.load %arg20[%c0_33, %c0_34] : memref<1x32xf32, #tpu.memory_space<vmem>>, vector<1x32xf32>
    %c0_35 = arith.constant 0 : index
    %c0_36 = arith.constant 0 : index
    %18 = vector.load %arg21[%c0_35, %c0_36] : memref<1x32xf32, #tpu.memory_space<vmem>>, vector<1x32xf32>
    %c0_37 = arith.constant 0 : index
    %c0_38 = arith.constant 0 : index
    %19 = vector.load %arg26[%c0_37, %c0_38] : memref<1x32xf32, #tpu.memory_space<vmem>>, vector<1x32xf32>
    %c0_39 = arith.constant 0 : index
    %c0_40 = arith.constant 0 : index
    %20 = vector.load %arg27[%c0_39, %c0_40] : memref<1x32xf32, #tpu.memory_space<vmem>>, vector<1x32xf32>
    %c0_41 = arith.constant 0 : index
    %c0_42 = arith.constant 0 : index
    %c0_43 = arith.constant 0 : index
    %21 = vector.load %arg1[%c0_41, %c0_42, %c0_43] : memref<1x8x16xbf16, #tpu.memory_space<vmem>>, vector<1x8x16xbf16>
    %cst = arith.constant dense<0.000000e+00> : vector<1x8x32xf32>
    %22 = tpu.matmul %21, %0, %cst {dimension_numbers = #tpu.dot_dimension_numbers<[2], [0], [0, 1], [1], [0, 0, 0, 1, 1, 1], [], []>} : vector<1x8x16xbf16>, vector<16x32xbf16>, vector<1x8x32xf32> -> vector<1x8x32xf32>
    %c0_44 = arith.constant 0 : index
    %c0_45 = arith.constant 0 : index
    %23 = vector.load %arg7[%c0_44, %c0_45] : memref<1x32xf32, #tpu.memory_space<vmem>>, vector<1x32xf32>
    %24 = vector.shape_cast %23 : vector<1x32xf32> to vector<1x1x32xf32>
    %25 = vector.broadcast %24 : vector<1x1x32xf32> to vector<1x8x32xf32>
    %26 = arith.addf %22, %25 : vector<1x8x32xf32>
    %c0_46 = arith.constant 0 : index
    %c0_47 = arith.constant 0 : index
    %c0_48 = arith.constant 0 : index
    %27 = vector.load %arg3[%c0_46, %c0_47, %c0_48] : memref<1x8x2xbf16, #tpu.memory_space<vmem>>, vector<1x8x2xbf16>
    %c0_49 = arith.constant 0 : index
    %c0_50 = arith.constant 0 : index
    %28 = vector.load %arg4[%c0_49, %c0_50] : memref<2x32xbf16, #tpu.memory_space<vmem>>, vector<2x32xbf16>
    %cst_51 = arith.constant dense<0.000000e+00> : vector<1x8x32xf32>
    %29 = tpu.matmul %27, %28, %cst_51 {dimension_numbers = #tpu.dot_dimension_numbers<[2], [0], [0, 1], [1], [0, 0, 0, 1, 1, 1], [], []>} : vector<1x8x2xbf16>, vector<2x32xbf16>, vector<1x8x32xf32> -> vector<1x8x32xf32>
    %c0_52 = arith.constant 0 : index
    %c0_53 = arith.constant 0 : index
    %30 = vector.load %arg2[%c0_52, %c0_53] : memref<8x32xf32, #tpu.memory_space<vmem>>, vector<8x32xf32>
    %31 = vector.shape_cast %30 : vector<8x32xf32> to vector<1x8x32xf32>
    %32 = arith.addf %26, %31 : vector<1x8x32xf32>
    %33 = arith.addf %32, %29 : vector<1x8x32xf32>
    %cst_54 = arith.constant dense<0.000000e+00> : vector<1x8xf32>
    %34 = vector.multi_reduction <add>, %33, %cst_54 [2] : vector<1x8x32xf32> to vector<1x8xf32>
    %35 = vector.shape_cast %34 : vector<1x8xf32> to vector<1x8x1xf32>
    %cst_55 = arith.constant 3.200000e+01 : f32
    %36 = vector.broadcast %cst_55 : f32 to vector<1x8x1xf32>
    %37 = arith.divf %35, %36 : vector<1x8x1xf32>
    %38 = vector.broadcast %37 : vector<1x8x1xf32> to vector<1x8x32xf32>
    %39 = arith.subf %33, %38 : vector<1x8x32xf32>
    %40 = arith.mulf %39, %39 : vector<1x8x32xf32>
    %cst_56 = arith.constant dense<0.000000e+00> : vector<1x8xf32>
    %41 = vector.multi_reduction <add>, %40, %cst_56 [2] : vector<1x8x32xf32> to vector<1x8xf32>
    %42 = vector.shape_cast %41 : vector<1x8xf32> to vector<1x8x1xf32>
    %cst_57 = arith.constant 3.200000e+01 : f32
    %43 = vector.broadcast %cst_57 : f32 to vector<1x8x1xf32>
    %44 = arith.divf %42, %43 : vector<1x8x1xf32>
    %45 = vector.broadcast %37 : vector<1x8x1xf32> to vector<1x8x32xf32>
    %46 = arith.subf %33, %45 : vector<1x8x32xf32>
    %cst_58 = arith.constant 9.99999974E-6 : f32
    %47 = vector.broadcast %cst_58 : f32 to vector<1x8x1xf32>
    %48 = arith.addf %44, %47 : vector<1x8x1xf32>
    %49 = math.rsqrt %48 : vector<1x8x1xf32>
    %50 = vector.broadcast %49 : vector<1x8x1xf32> to vector<1x8x32xf32>
    %51 = arith.mulf %46, %50 : vector<1x8x32xf32>
    %52 = vector.shape_cast %15 : vector<1x32xf32> to vector<1x1x32xf32>
    %53 = vector.broadcast %52 : vector<1x1x32xf32> to vector<1x8x32xf32>
    %54 = arith.mulf %51, %53 : vector<1x8x32xf32>
    %55 = vector.shape_cast %16 : vector<1x32xf32> to vector<1x1x32xf32>
    %56 = vector.broadcast %55 : vector<1x1x32xf32> to vector<1x8x32xf32>
    %57 = arith.addf %54, %56 : vector<1x8x32xf32>
    %c0_59 = arith.constant 0 : index
    %c0_60 = arith.constant 0 : index
    %c0_61 = arith.constant 0 : index
    %58 = vector.load %arg5[%c0_59, %c0_60, %c0_61] : memref<1x1x8xf32, #tpu.memory_space<vmem>>, vector<1x1x8xf32>
    %c0_i32 = arith.constant 0 : i32
    %c2_i32 = arith.constant 2 : i32
    %59 = arith.addi %c0_i32, %c2_i32 : i32
    %c1_i32 = arith.constant 1 : i32
    %60 = scf.for %arg29 = %c0_i32 to %59 step %c1_i32 iter_args(%arg30 = %57) -> (vector<1x8x32xf32>)  : i32 {
      %62 = arith.truncf %arg30 : vector<1x8x32xf32> to vector<1x8x32xbf16>
      %cst_65 = arith.constant dense<0.000000e+00> : vector<1x8x32xf32>
      %63 = tpu.matmul %62, %1, %cst_65 {dimension_numbers = #tpu.dot_dimension_numbers<[2], [0], [0, 1], [1], [0, 0, 0, 1, 1, 1], [], []>} : vector<1x8x32xbf16>, vector<32x32xbf16>, vector<1x8x32xf32> -> vector<1x8x32xf32>
      %64 = vector.shape_cast %8 : vector<1x32xf32> to vector<1x1x32xf32>
      %65 = vector.broadcast %64 : vector<1x1x32xf32> to vector<1x8x32xf32>
      %66 = arith.addf %63, %65 : vector<1x8x32xf32>
      %cst_66 = arith.constant 0.176776692 : f32
      %67 = vector.broadcast %cst_66 : f32 to vector<1x8x32xf32>
      %68 = arith.mulf %66, %67 : vector<1x8x32xf32>
      %69 = arith.truncf %68 : vector<1x8x32xf32> to vector<1x8x32xbf16>
      %70 = arith.truncf %arg30 : vector<1x8x32xf32> to vector<1x8x32xbf16>
      %cst_67 = arith.constant dense<0.000000e+00> : vector<1x8x32xf32>
      %71 = tpu.matmul %70, %2, %cst_67 {dimension_numbers = #tpu.dot_dimension_numbers<[2], [0], [0, 1], [1], [0, 0, 0, 1, 1, 1], [], []>} : vector<1x8x32xbf16>, vector<32x32xbf16>, vector<1x8x32xf32> -> vector<1x8x32xf32>
      %72 = vector.shape_cast %9 : vector<1x32xf32> to vector<1x1x32xf32>
      %73 = vector.broadcast %72 : vector<1x1x32xf32> to vector<1x8x32xf32>
      %74 = arith.addf %71, %73 : vector<1x8x32xf32>
      %75 = arith.truncf %74 : vector<1x8x32xf32> to vector<1x8x32xbf16>
      %76 = arith.truncf %arg30 : vector<1x8x32xf32> to vector<1x8x32xbf16>
      %cst_68 = arith.constant dense<0.000000e+00> : vector<1x8x32xf32>
      %77 = tpu.matmul %76, %3, %cst_68 {dimension_numbers = #tpu.dot_dimension_numbers<[2], [0], [0, 1], [1], [0, 0, 0, 1, 1, 1], [], []>} : vector<1x8x32xbf16>, vector<32x32xbf16>, vector<1x8x32xf32> -> vector<1x8x32xf32>
      %78 = vector.shape_cast %10 : vector<1x32xf32> to vector<1x1x32xf32>
      %79 = vector.broadcast %78 : vector<1x1x32xf32> to vector<1x8x32xf32>
      %80 = arith.addf %77, %79 : vector<1x8x32xf32>
      %81 = arith.truncf %80 : vector<1x8x32xf32> to vector<1x8x32xbf16>
      %cst_69 = arith.constant dense<0.000000e+00> : vector<1x8x8xf32>
      %82 = tpu.matmul %69, %75, %cst_69 {dimension_numbers = #tpu.dot_dimension_numbers<[2], [2], [1], [1], [0, 0, 0, 1, 1, 1], [0], [0]>} : vector<1x8x32xbf16>, vector<1x8x32xbf16>, vector<1x8x8xf32> -> vector<1x8x8xf32>
      %83 = vector.broadcast %58 : vector<1x1x8xf32> to vector<1x8x8xf32>
      %84 = arith.addf %82, %83 : vector<1x8x8xf32>
      %cst_70 = arith.constant dense<0xFF800000> : vector<1x8xf32>
      %85 = vector.multi_reduction <maximumf>, %84, %cst_70 [2] : vector<1x8x8xf32> to vector<1x8xf32>
      %86 = vector.shape_cast %85 : vector<1x8xf32> to vector<1x8x1xf32>
      %87 = vector.broadcast %86 : vector<1x8x1xf32> to vector<1x8x8xf32>
      %88 = arith.subf %84, %87 : vector<1x8x8xf32>
      %89 = math.exp %88 : vector<1x8x8xf32>
      %cst_71 = arith.constant dense<0.000000e+00> : vector<1x8xf32>
      %90 = vector.multi_reduction <add>, %89, %cst_71 [2] : vector<1x8x8xf32> to vector<1x8xf32>
      %91 = vector.shape_cast %90 : vector<1x8xf32> to vector<1x8x1xf32>
      %92 = arith.truncf %89 : vector<1x8x8xf32> to vector<1x8x8xbf16>
      %93 = tpu.reciprocal %91 {approx = true} : vector<1x8x1xf32> -> vector<1x8x1xf32>
      %cst_72 = arith.constant dense<0.000000e+00> : vector<1x8x32xf32>
      %94 = tpu.matmul %92, %81, %cst_72 {dimension_numbers = #tpu.dot_dimension_numbers<[2], [1], [1], [2], [0, 0, 0, 1, 1, 2], [0], [0]>} : vector<1x8x8xbf16>, vector<1x8x32xbf16>, vector<1x8x32xf32> -> vector<1x8x32xf32>
      %95 = vector.broadcast %93 : vector<1x8x1xf32> to vector<1x8x32xf32>
      %96 = arith.mulf %94, %95 : vector<1x8x32xf32>
      %97 = arith.truncf %96 : vector<1x8x32xf32> to vector<1x8x32xbf16>
      %cst_73 = arith.constant dense<0.000000e+00> : vector<1x8x32xf32>
      %98 = tpu.matmul %97, %4, %cst_73 {dimension_numbers = #tpu.dot_dimension_numbers<[2], [0], [0, 1], [1], [0, 0, 0, 1, 1, 1], [], []>} : vector<1x8x32xbf16>, vector<32x32xbf16>, vector<1x8x32xf32> -> vector<1x8x32xf32>
      %99 = vector.shape_cast %11 : vector<1x32xf32> to vector<1x1x32xf32>
      %100 = vector.broadcast %99 : vector<1x1x32xf32> to vector<1x8x32xf32>
      %101 = arith.addf %98, %100 : vector<1x8x32xf32>
      %102 = arith.truncf %101 : vector<1x8x32xf32> to vector<1x8x32xbf16>
      %cst_74 = arith.constant dense<0.000000e+00> : vector<1x8x32xf32>
      %103 = tpu.matmul %102, %5, %cst_74 {dimension_numbers = #tpu.dot_dimension_numbers<[2], [0], [0, 1], [1], [0, 0, 0, 1, 1, 1], [], []>} : vector<1x8x32xbf16>, vector<32x32xbf16>, vector<1x8x32xf32> -> vector<1x8x32xf32>
      %104 = vector.shape_cast %12 : vector<1x32xf32> to vector<1x1x32xf32>
      %105 = vector.broadcast %104 : vector<1x1x32xf32> to vector<1x8x32xf32>
      %106 = arith.addf %103, %105 : vector<1x8x32xf32>
      %107 = arith.addf %101, %106 : vector<1x8x32xf32>
      %cst_75 = arith.constant dense<0.000000e+00> : vector<1x8xf32>
      %108 = vector.multi_reduction <add>, %107, %cst_75 [2] : vector<1x8x32xf32> to vector<1x8xf32>
      %109 = vector.shape_cast %108 : vector<1x8xf32> to vector<1x8x1xf32>
      %cst_76 = arith.constant 3.200000e+01 : f32
      %110 = vector.broadcast %cst_76 : f32 to vector<1x8x1xf32>
      %111 = arith.divf %109, %110 : vector<1x8x1xf32>
      %112 = vector.broadcast %111 : vector<1x8x1xf32> to vector<1x8x32xf32>
      %113 = arith.subf %107, %112 : vector<1x8x32xf32>
      %114 = arith.mulf %113, %113 : vector<1x8x32xf32>
      %cst_77 = arith.constant dense<0.000000e+00> : vector<1x8xf32>
      %115 = vector.multi_reduction <add>, %114, %cst_77 [2] : vector<1x8x32xf32> to vector<1x8xf32>
      %116 = vector.shape_cast %115 : vector<1x8xf32> to vector<1x8x1xf32>
      %cst_78 = arith.constant 3.200000e+01 : f32
      %117 = vector.broadcast %cst_78 : f32 to vector<1x8x1xf32>
      %118 = arith.divf %116, %117 : vector<1x8x1xf32>
      %119 = vector.broadcast %111 : vector<1x8x1xf32> to vector<1x8x32xf32>
      %120 = arith.subf %107, %119 : vector<1x8x32xf32>
      %cst_79 = arith.constant 9.99999974E-6 : f32
      %121 = vector.broadcast %cst_79 : f32 to vector<1x8x1xf32>
      %122 = arith.addf %118, %121 : vector<1x8x1xf32>
      %123 = math.rsqrt %122 : vector<1x8x1xf32>
      %124 = vector.broadcast %123 : vector<1x8x1xf32> to vector<1x8x32xf32>
      %125 = arith.mulf %120, %124 : vector<1x8x32xf32>
      %126 = vector.shape_cast %17 : vector<1x32xf32> to vector<1x1x32xf32>
      %127 = vector.broadcast %126 : vector<1x1x32xf32> to vector<1x8x32xf32>
      %128 = arith.mulf %125, %127 : vector<1x8x32xf32>
      %129 = vector.shape_cast %18 : vector<1x32xf32> to vector<1x1x32xf32>
      %130 = vector.broadcast %129 : vector<1x1x32xf32> to vector<1x8x32xf32>
      %131 = arith.addf %128, %130 : vector<1x8x32xf32>
      %132 = arith.truncf %131 : vector<1x8x32xf32> to vector<1x8x32xbf16>
      %cst_80 = arith.constant dense<0.000000e+00> : vector<1x8x64xf32>
      %133 = tpu.matmul %132, %6, %cst_80 {dimension_numbers = #tpu.dot_dimension_numbers<[2], [0], [0, 1], [1], [0, 0, 0, 1, 1, 1], [], []>} : vector<1x8x32xbf16>, vector<32x64xbf16>, vector<1x8x64xf32> -> vector<1x8x64xf32>
      %134 = vector.shape_cast %13 : vector<1x64xf32> to vector<1x1x64xf32>
      %135 = vector.broadcast %134 : vector<1x1x64xf32> to vector<1x8x64xf32>
      %136 = arith.addf %133, %135 : vector<1x8x64xf32>
      %cst_81 = arith.constant 0.000000e+00 : f32
      %137 = vector.broadcast %cst_81 : f32 to vector<1x8x64xf32>
      %138 = arith.maximumf %136, %137 : vector<1x8x64xf32>
      %139 = arith.truncf %138 : vector<1x8x64xf32> to vector<1x8x64xbf16>
      %cst_82 = arith.constant dense<0.000000e+00> : vector<1x8x32xf32>
      %140 = tpu.matmul %139, %7, %cst_82 {dimension_numbers = #tpu.dot_dimension_numbers<[2], [0], [0, 1], [1], [0, 0, 0, 1, 1, 1], [], []>} : vector<1x8x64xbf16>, vector<64x32xbf16>, vector<1x8x32xf32> -> vector<1x8x32xf32>
      %141 = vector.shape_cast %14 : vector<1x32xf32> to vector<1x1x32xf32>
      %142 = vector.broadcast %141 : vector<1x1x32xf32> to vector<1x8x32xf32>
      %143 = arith.addf %140, %142 : vector<1x8x32xf32>
      %144 = arith.addf %131, %143 : vector<1x8x32xf32>
      %cst_83 = arith.constant dense<0.000000e+00> : vector<1x8xf32>
      %145 = vector.multi_reduction <add>, %144, %cst_83 [2] : vector<1x8x32xf32> to vector<1x8xf32>
      %146 = vector.shape_cast %145 : vector<1x8xf32> to vector<1x8x1xf32>
      %cst_84 = arith.constant 3.200000e+01 : f32
      %147 = vector.broadcast %cst_84 : f32 to vector<1x8x1xf32>
      %148 = arith.divf %146, %147 : vector<1x8x1xf32>
      %149 = vector.broadcast %148 : vector<1x8x1xf32> to vector<1x8x32xf32>
      %150 = arith.subf %144, %149 : vector<1x8x32xf32>
      %151 = arith.mulf %150, %150 : vector<1x8x32xf32>
      %cst_85 = arith.constant dense<0.000000e+00> : vector<1x8xf32>
      %152 = vector.multi_reduction <add>, %151, %cst_85 [2] : vector<1x8x32xf32> to vector<1x8xf32>
      %153 = vector.shape_cast %152 : vector<1x8xf32> to vector<1x8x1xf32>
      %cst_86 = arith.constant 3.200000e+01 : f32
      %154 = vector.broadcast %cst_86 : f32 to vector<1x8x1xf32>
      %155 = arith.divf %153, %154 : vector<1x8x1xf32>
      %156 = vector.broadcast %148 : vector<1x8x1xf32> to vector<1x8x32xf32>
      %157 = arith.subf %144, %156 : vector<1x8x32xf32>
      %cst_87 = arith.constant 9.99999974E-6 : f32
      %158 = vector.broadcast %cst_87 : f32 to vector<1x8x1xf32>
      %159 = arith.addf %155, %158 : vector<1x8x1xf32>
      %160 = math.rsqrt %159 : vector<1x8x1xf32>
      %161 = vector.broadcast %160 : vector<1x8x1xf32> to vector<1x8x32xf32>
      %162 = arith.mulf %157, %161 : vector<1x8x32xf32>
      %163 = vector.shape_cast %19 : vector<1x32xf32> to vector<1x1x32xf32>
      %164 = vector.broadcast %163 : vector<1x1x32xf32> to vector<1x8x32xf32>
      %165 = arith.mulf %162, %164 : vector<1x8x32xf32>
      %166 = vector.shape_cast %20 : vector<1x32xf32> to vector<1x1x32xf32>
      %167 = vector.broadcast %166 : vector<1x1x32xf32> to vector<1x8x32xf32>
      %168 = arith.addf %165, %167 : vector<1x8x32xf32>
      scf.yield %168 : vector<1x8x32xf32>
    }
    %c0_62 = arith.constant 0 : index
    %c0_63 = arith.constant 0 : index
    %c0_64 = arith.constant 0 : index
    %61 = vector.load %arg28[%c0_62, %c0_63, %c0_64] : memref<1x8x32xf32, #tpu.memory_space<vmem>>, vector<1x8x32xf32>
    tpu.vector_store %arg28[%c0_62, %c0_63, %c0_64], %60 {strides = array<i32>} : memref<1x8x32xf32, #tpu.memory_space<vmem>>, vector<1x8x32xf32>,
    return
  }
  func.func @transform_0(%arg0: i32) -> (i32, i32, i32) {
    %c0_i32 = arith.constant 0 : i32
    %c0_i32_0 = arith.constant 0 : i32
    %c0_i32_1 = arith.constant 0 : i32
    return %arg0, %c0_i32, %c0_i32_0 : i32, i32, i32
  }
  func.func @transform_1(%arg0: i32) -> (i32, i32) {
    %c0_i32 = arith.constant 0 : i32
    %c0_i32_0 = arith.constant 0 : i32
    %c0_i32_1 = arith.constant 0 : i32
    return %c0_i32, %c0_i32_0 : i32, i32
  }
  func.func @transform_2(%arg0: i32) -> (i32, i32, i32) {
    %c0_i32 = arith.constant 0 : i32
    %c0_i32_0 = arith.constant 0 : i32
    %c0_i32_1 = arith.constant 0 : i32
    return %arg0, %c0_i32, %c0_i32_0 : i32, i32, i32
  }
  func.func @transform_3(%arg0: i32) -> (i32, i32) {
    %c0_i32 = arith.constant 0 : i32
    %c0_i32_0 = arith.constant 0 : i32
    %c0_i32_1 = arith.constant 0 : i32
    return %c0_i32, %c0_i32_0 : i32, i32
  }
  func.func @transform_4(%arg0: i32) -> (i32, i32, i32) {
    %c0_i32 = arith.constant 0 : i32
    %c0_i32_0 = arith.constant 0 : i32
    %c0_i32_1 = arith.constant 0 : i32
    return %arg0, %c0_i32, %c0_i32_0 : i32, i32, i32
  }
  func.func @transform_5(%arg0: i32) -> (i32, i32) {
    %c0_i32 = arith.constant 0 : i32
    %c0_i32_0 = arith.constant 0 : i32
    %c0_i32_1 = arith.constant 0 : i32
    return %c0_i32, %c0_i32_0 : i32, i32
  }
  func.func @transform_6(%arg0: i32) -> (i32, i32) {
    %c0_i32 = arith.constant 0 : i32
    %c0_i32_0 = arith.constant 0 : i32
    %c0_i32_1 = arith.constant 0 : i32
    return %c0_i32, %c0_i32_0 : i32, i32
  }
  func.func @transform_7(%arg0: i32) -> (i32, i32) {
    %c0_i32 = arith.constant 0 : i32
    %c0_i32_0 = arith.constant 0 : i32
    %c0_i32_1 = arith.constant 0 : i32
    return %c0_i32, %c0_i32_0 : i32, i32
  }
  func.func @transform_8(%arg0: i32) -> (i32, i32) {
    %c0_i32 = arith.constant 0 : i32
    %c0_i32_0 = arith.constant 0 : i32
    %c0_i32_1 = arith.constant 0 : i32
    return %c0_i32, %c0_i32_0 : i32, i32
  }
  func.func @transform_9(%arg0: i32) -> (i32, i32) {
    %c0_i32 = arith.constant 0 : i32
    %c0_i32_0 = arith.constant 0 : i32
    %c0_i32_1 = arith.constant 0 : i32
    return %c0_i32, %c0_i32_0 : i32, i32
  }
  func.func @transform_10(%arg0: i32) -> (i32, i32) {
    %c0_i32 = arith.constant 0 : i32
    %c0_i32_0 = arith.constant 0 : i32
    %c0_i32_1 = arith.constant 0 : i32
    return %c0_i32, %c0_i32_0 : i32, i32
  }
  func.func @transform_11(%arg0: i32) -> (i32, i32) {
    %c0_i32 = arith.constant 0 : i32
    %c0_i32_0 = arith.constant 0 : i32
    %c0_i32_1 = arith.constant 0 : i32
    return %c0_i32, %c0_i32_0 : i32, i32
  }
  func.func @transform_12(%arg0: i32) -> (i32, i32) {
    %c0_i32 = arith.constant 0 : i32
    %c0_i32_0 = arith.constant 0 : i32
    %c0_i32_1 = arith.constant 0 : i32
    return %c0_i32, %c0_i32_0 : i32, i32
  }
  func.func @transform_13(%arg0: i32) -> (i32, i32) {
    %c0_i32 = arith.constant 0 : i32
    %c0_i32_0 = arith.constant 0 : i32
    %c0_i32_1 = arith.constant 0 : i32
    return %c0_i32, %c0_i32_0 : i32, i32
  }
  func.func @transform_14(%arg0: i32) -> (i32, i32) {
    %c0_i32 = arith.constant 0 : i32
    %c0_i32_0 = arith.constant 0 : i32
    %c0_i32_1 = arith.constant 0 : i32
    return %c0_i32, %c0_i32_0 : i32, i32
  }
  func.func @transform_15(%arg0: i32) -> (i32, i32) {
    %c0_i32 = arith.constant 0 : i32
    %c0_i32_0 = arith.constant 0 : i32
    %c0_i32_1 = arith.constant 0 : i32
    return %c0_i32, %c0_i32_0 : i32, i32
  }
  func.func @transform_16(%arg0: i32) -> (i32, i32) {
    %c0_i32 = arith.constant 0 : i32
    %c0_i32_0 = arith.constant 0 : i32
    %c0_i32_1 = arith.constant 0 : i32
    return %c0_i32, %c0_i32_0 : i32, i32
  }
  func.func @transform_17(%arg0: i32) -> (i32, i32) {
    %c0_i32 = arith.constant 0 : i32
    %c0_i32_0 = arith.constant 0 : i32
    %c0_i32_1 = arith.constant 0 : i32
    return %c0_i32, %c0_i32_0 : i32, i32
  }
  func.func @transform_18(%arg0: i32) -> (i32, i32) {
    %c0_i32 = arith.constant 0 : i32
    %c0_i32_0 = arith.constant 0 : i32
    %c0_i32_1 = arith.constant 0 : i32
    return %c0_i32, %c0_i32_0 : i32, i32
  }
  func.func @transform_19(%arg0: i32) -> (i32, i32) {
    %c0_i32 = arith.constant 0 : i32
    %c0_i32_0 = arith.constant 0 : i32
    %c0_i32_1 = arith.constant 0 : i32
    return %c0_i32, %c0_i32_0 : i32, i32
  }
  func.func @transform_20(%arg0: i32) -> (i32, i32) {
    %c0_i32 = arith.constant 0 : i32
    %c0_i32_0 = arith.constant 0 : i32
    %c0_i32_1 = arith.constant 0 : i32
    return %c0_i32, %c0_i32_0 : i32, i32
  }
  func.func @transform_21(%arg0: i32) -> (i32, i32) {
    %c0_i32 = arith.constant 0 : i32
    %c0_i32_0 = arith.constant 0 : i32
    %c0_i32_1 = arith.constant 0 : i32
    return %c0_i32, %c0_i32_0 : i32, i32
  }
  func.func @transform_22(%arg0: i32) -> (i32, i32) {
    %c0_i32 = arith.constant 0 : i32
    %c0_i32_0 = arith.constant 0 : i32
    %c0_i32_1 = arith.constant 0 : i32
    return %c0_i32, %c0_i32_0 : i32, i32
  }
  func.func @transform_23(%arg0: i32) -> (i32, i32) {
    %c0_i32 = arith.constant 0 : i32
    %c0_i32_0 = arith.constant 0 : i32
    %c0_i32_1 = arith.constant 0 : i32
    return %c0_i32, %c0_i32_0 : i32, i32
  }
  func.func @transform_24(%arg0: i32) -> (i32, i32) {
    %c0_i32 = arith.constant 0 : i32
    %c0_i32_0 = arith.constant 0 : i32
    %c0_i32_1 = arith.constant 0 : i32
    return %c0_i32, %c0_i32_0 : i32, i32
  }
  func.func @transform_25(%arg0: i32) -> (i32, i32) {
    %c0_i32 = arith.constant 0 : i32
    %c0_i32_0 = arith.constant 0 : i32
    %c0_i32_1 = arith.constant 0 : i32
    return %c0_i32, %c0_i32_0 : i32, i32
  }
  func.func @transform_26(%arg0: i32) -> (i32, i32) {
    %c0_i32 = arith.constant 0 : i32
    %c0_i32_0 = arith.constant 0 : i32
    %c0_i32_1 = arith.constant 0 : i32
    return %c0_i32, %c0_i32_0 : i32, i32
  }
  func.func @transform_27(%arg0: i32) -> (i32, i32, i32) {
    %c0_i32 = arith.constant 0 : i32
    %c0_i32_0 = arith.constant 0 : i32
    %c0_i32_1 = arith.constant 0 : i32
    return %arg0, %c0_i32, %c0_i32_0 : i32, i32, i32
  }
}

module attributes {stable_mosaic.version = 11 : i64} {
  func.func @transformer_albert_kernel(%arg0: i32, %arg1: memref<1x8x16xbf16, #tpu.memory_space<vmem>>, %arg2: memref<8x32xf32, #tpu.memory_space<vmem>>, %arg3: memref<1x8x2xbf16, #tpu.memory_space<vmem>>, %arg4: memref<2x32xbf16, #tpu.memory_space<vmem>>, %arg5: memref<1x1x8xf32, #tpu.memory_space<vmem>>, %arg6: memref<16x32xbf16, #tpu.memory_space<vmem>>, %arg7: memref<1x32xf32, #tpu.memory_space<vmem>>, %arg8: memref<1x32xf32, #tpu.memory_space<vmem>>, %arg9: memref<1x32xf32, #tpu.memory_space<vmem>>, %arg10: memref<32x32xbf16, #tpu.memory_space<vmem>>, %arg11: memref<1x32xf32, #tpu.memory_space<vmem>>, %arg12: memref<32x32xbf16, #tpu.memory_space<vmem>>, %arg13: memref<1x32xf32, #tpu.memory_space<vmem>>, %arg14: memref<32x32xbf16, #tpu.memory_space<vmem>>, %arg15: memref<1x32xf32, #tpu.memory_space<vmem>>, %arg16: memref<32x32xbf16, #tpu.memory_space<vmem>>, %arg17: memref<1x32xf32, #tpu.memory_space<vmem>>, %arg18: memref<32x32xbf16, #tpu.memory_space<vmem>>, %arg19: memref<1x32xf32, #tpu.memory_space<vmem>>, %arg20: memref<1x32xf32, #tpu.memory_space<vmem>>, %arg21: memref<1x32xf32, #tpu.memory_space<vmem>>, %arg22: memref<32x64xbf16, #tpu.memory_space<vmem>>, %arg23: memref<1x64xf32, #tpu.memory_space<vmem>>, %arg24: memref<64x32xbf16, #tpu.memory_space<vmem>>, %arg25: memref<1x32xf32, #tpu.memory_space<vmem>>, %arg26: memref<1x32xf32, #tpu.memory_space<vmem>>, %arg27: memref<1x32xf32, #tpu.memory_space<vmem>>, %arg28: memref<1x8x32xf32, #tpu.memory_space<vmem>>) attributes {dimension_semantics = [#tpu.dimension_semantics<parallel>], iteration_bounds = array<i64: 2>, scalar_prefetch = 0 : i64, scratch_operands = 0 : i64, tpu.core_type = #tpu.core_type<tc>, window_params = [{transform_indices = @transform_0, window_bounds = array<i64: 1, 8, 16>}, {pipeline_mode = #tpu.pipeline_mode<synchronous>, transform_indices = @transform_1, window_bounds = array<i64: 8, 32>}, {transform_indices = @transform_2, window_bounds = array<i64: 1, 8, 2>}, {pipeline_mode = #tpu.pipeline_mode<synchronous>, transform_indices = @transform_3, window_bounds = array<i64: 2, 32>}, {transform_indices = @transform_4, window_bounds = array<i64: 1, 1, 8>}, {pipeline_mode = #tpu.pipeline_mode<synchronous>, transform_indices = @transform_5, window_bounds = array<i64: 16, 32>}, {pipeline_mode = #tpu.pipeline_mode<synchronous>, transform_indices = @transform_6, window_bounds = array<i64: 1, 32>}, {pipeline_mode = #tpu.pipeline_mode<synchronous>, transform_indices = @transform_7, window_bounds = array<i64: 1, 32>}, {pipeline_mode = #tpu.pipeline_mode<synchronous>, transform_indices = @transform_8, window_bounds = array<i64: 1, 32>}, {pipeline_mode = #tpu.pipeline_mode<synchronous>, transform_indices = @transform_9, window_bounds = array<i64: 32, 32>}, {pipeline_mode = #tpu.pipeline_mode<synchronous>, transform_indices = @transform_10, window_bounds = array<i64: 1, 32>}, {pipeline_mode = #tpu.pipeline_mode<synchronous>, transform_indices = @transform_11, window_bounds = array<i64: 32, 32>}, {pipeline_mode = #tpu.pipeline_mode<synchronous>, transform_indices = @transform_12, window_bounds = array<i64: 1, 32>}, {pipeline_mode = #tpu.pipeline_mode<synchronous>, transform_indices = @transform_13, window_bounds = array<i64: 32, 32>}, {pipeline_mode = #tpu.pipeline_mode<synchronous>, transform_indices = @transform_14, window_bounds = array<i64: 1, 32>}, {pipeline_mode = #tpu.pipeline_mode<synchronous>, transform_indices = @transform_15, window_bounds = array<i64: 32, 32>}, {pipeline_mode = #tpu.pipeline_mode<synchronous>, transform_indices = @transform_16, window_bounds = array<i64: 1, 32>}, {pipeline_mode = #tpu.pipeline_mode<synchronous>, transform_indices = @transform_17, window_bounds = array<i64: 32, 32>}, {pipeline_mode = #tpu.pipeline_mode<synchronous>, transform_indices = @transform_18, window_bounds = array<i64: 1, 32>}, {pipeline_mode = #tpu.pipeline_mode<synchronous>, transform_indices = @transform_19, window_bounds = array<i64: 1, 32>}, {pipeline_mode = #tpu.pipeline_mode<synchronous>, transform_indices = @transform_20, window_bounds = array<i64: 1, 32>}, {pipeline_mode = #tpu.pipeline_mode<synchronous>, transform_indices = @transform_21, window_bounds = array<i64: 32, 64>}, {pipeline_mode = #tpu.pipeline_mode<synchronous>, transform_indices = @transform_22, window_bounds = array<i64: 1, 64>}, {pipeline_mode = #tpu.pipeline_mode<synchronous>, transform_indices = @transform_23, window_bounds = array<i64: 64, 32>}, {pipeline_mode = #tpu.pipeline_mode<synchronous>, transform_indices = @transform_24, window_bounds = array<i64: 1, 32>}, {pipeline_mode = #tpu.pipeline_mode<synchronous>, transform_indices = @transform_25, window_bounds = array<i64: 1, 32>}, {pipeline_mode = #tpu.pipeline_mode<synchronous>, transform_indices = @transform_26, window_bounds = array<i64: 1, 32>}, {transform_indices = @transform_27, window_bounds = array<i64: 1, 8, 32>}]} {
    %c0 = arith.constant 0 : index
    %c0_0 = arith.constant 0 : index
    %0 = vector.load %arg6[%c0, %c0_0] : memref<16x32xbf16, #tpu.memory_space<vmem>>, vector<16x32xbf16>
    %c0_1 = arith.constant 0 : index
    %c0_2 = arith.constant 0 : index
    %1 = vector.load %arg10[%c0_1, %c0_2] : memref<32x32xbf16, #tpu.memory_space<vmem>>, vector<32x32xbf16>
    %c0_3 = arith.constant 0 : index
    %c0_4 = arith.constant 0 : index
    %2 = vector.load %arg12[%c0_3, %c0_4] : memref<32x32xbf16, #tpu.memory_space<vmem>>, vector<32x32xbf16>
    %c0_5 = arith.constant 0 : index
    %c0_6 = arith.constant 0 : index
    %3 = vector.load %arg14[%c0_5, %c0_6] : memref<32x32xbf16, #tpu.memory_space<vmem>>, vector<32x32xbf16>
    %c0_7 = arith.constant 0 : index
    %c0_8 = arith.constant 0 : index
    %4 = vector.load %arg16[%c0_7, %c0_8] : memref<32x32xbf16, #tpu.memory_space<vmem>>, vector<32x32xbf16>
    %c0_9 = arith.constant 0 : index
    %c0_10 = arith.constant 0 : index
    %5 = vector.load %arg18[%c0_9, %c0_10] : memref<32x32xbf16, #tpu.memory_space<vmem>>, vector<32x32xbf16>
    %c0_11 = arith.constant 0 : index
    %c0_12 = arith.constant 0 : index
    %6 = vector.load %arg22[%c0_11, %c0_12] : memref<32x64xbf16, #tpu.memory_space<vmem>>, vector<32x64xbf16>
    %c0_13 = arith.constant 0 : index
    %c0_14 = arith.constant 0 : index
    %7 = vector.load %arg24[%c0_13, %c0_14] : memref<64x32xbf16, #tpu.memory_space<vmem>>, vector<64x32xbf16>
    %c0_15 = arith.constant 0 : index
    %c0_16 = arith.constant 0 : index
    %8 = vector.load %arg11[%c0_15, %c0_16] : memref<1x32xf32, #tpu.memory_space<vmem>>, vector<1x32xf32>
    %c0_17 = arith.constant 0 : index
    %c0_18 = arith.constant 0 : index
    %9 = vector.load %arg13[%c0_17, %c0_18] : memref<1x32xf32, #tpu.memory_space<vmem>>, vector<1x32xf32>
    %c0_19 = arith.constant 0 : index
    %c0_20 = arith.constant 0 : index
    %10 = vector.load %arg15[%c0_19, %c0_20] : memref<1x32xf32, #tpu.memory_space<vmem>>, vector<1x32xf32>
    %c0_21 = arith.constant 0 : index
    %c0_22 = arith.constant 0 : index
    %11 = vector.load %arg17[%c0_21, %c0_22] : memref<1x32xf32, #tpu.memory_space<vmem>>, vector<1x32xf32>
    %c0_23 = arith.constant 0 : index
    %c0_24 = arith.constant 0 : index
    %12 = vector.load %arg19[%c0_23, %c0_24] : memref<1x32xf32, #tpu.memory_space<vmem>>, vector<1x32xf32>
    %c0_25 = arith.constant 0 : index
    %c0_26 = arith.constant 0 : index
    %13 = vector.load %arg23[%c0_25, %c0_26] : memref<1x64xf32, #tpu.memory_space<vmem>>, vector<1x64xf32>
    %c0_27 = arith.constant 0 : index
    %c0_28 = arith.constant 0 : index
    %14 = vector.load %arg25[%c0_27, %c0_28] : memref<1x32xf32, #tpu.memory_space<vmem>>, vector<1x32xf32>
    %c0_29 = arith.constant 0 : index
    %c0_30 = arith.constant 0 : index
    %15 = vector.load %arg8[%c0_29, %c0_30] : memref<1x32xf32, #tpu.memory_space<vmem>>, vector<1x32xf32>
    %c0_31 = arith.constant 0 : index
    %c0_32 = arith.constant 0 : index
    %16 = vector.load %arg9[%c0_31, %c0_32] : memref<1x32xf32, #tpu.memory_space<vmem>>, vector<1x32xf32>
    %c0_33 = arith.constant 0 : index
    %c0_34 = arith.constant 0 : index
    %17 = vector.load %arg20[%c0_33, %c0_34] : memref<1x32xf32, #tpu.memory_space<vmem>>, vector<1x32xf32>
    %c0_35 = arith.constant 0 : index
    %c0_36 = arith.constant 0 : index
    %18 = vector.load %arg21[%c0_35, %c0_36] : memref<1x32xf32, #tpu.memory_space<vmem>>, vector<1x32xf32>
    %c0_37 = arith.constant 0 : index
    %c0_38 = arith.constant 0 : index
    %19 = vector.load %arg26[%c0_37, %c0_38] : memref<1x32xf32, #tpu.memory_space<vmem>>, vector<1x32xf32>
    %c0_39 = arith.constant 0 : index
    %c0_40 = arith.constant 0 : index
    %20 = vector.load %arg27[%c0_39, %c0_40] : memref<1x32xf32, #tpu.memory_space<vmem>>, vector<1x32xf32>
    %c0_41 = arith.constant 0 : index
    %c0_42 = arith.constant 0 : index
    %c0_43 = arith.constant 0 : index
    %21 = vector.load %arg1[%c0_41, %c0_42, %c0_43] : memref<1x8x16xbf16, #tpu.memory_space<vmem>>, vector<1x8x16xbf16>
    %cst = arith.constant dense<0.000000e+00> : vector<1x8x32xf32>
    %22 = tpu.matmul %21, %0, %cst {dimension_numbers = #tpu.dot_dimension_numbers<[2], [0], [0, 1], [1], [0, 0, 0, 1, 1, 1], [], []>} : vector<1x8x16xbf16>, vector<16x32xbf16>, vector<1x8x32xf32> -> vector<1x8x32xf32>
    %c0_44 = arith.constant 0 : index
    %c0_45 = arith.constant 0 : index
    %23 = vector.load %arg7[%c0_44, %c0_45] : memref<1x32xf32, #tpu.memory_space<vmem>>, vector<1x32xf32>
    %24 = vector.shape_cast %23 : vector<1x32xf32> to vector<1x1x32xf32>
    %25 = vector.broadcast %24 : vector<1x1x32xf32> to vector<1x8x32xf32>
    %26 = arith.addf %22, %25 : vector<1x8x32xf32>
    %c0_46 = arith.constant 0 : index
    %c0_47 = arith.constant 0 : index
    %c0_48 = arith.constant 0 : index
    %27 = vector.load %arg3[%c0_46, %c0_47, %c0_48] : memref<1x8x2xbf16, #tpu.memory_space<vmem>>, vector<1x8x2xbf16>
    %c0_49 = arith.constant 0 : index
    %c0_50 = arith.constant 0 : index
    %28 = vector.load %arg4[%c0_49, %c0_50] : memref<2x32xbf16, #tpu.memory_space<vmem>>, vector<2x32xbf16>
    %cst_51 = arith.constant dense<0.000000e+00> : vector<1x8x32xf32>
    %29 = tpu.matmul %27, %28, %cst_51 {dimension_numbers = #tpu.dot_dimension_numbers<[2], [0], [0, 1], [1], [0, 0, 0, 1, 1, 1], [], []>} : vector<1x8x2xbf16>, vector<2x32xbf16>, vector<1x8x32xf32> -> vector<1x8x32xf32>
    %c0_52 = arith.constant 0 : index
    %c0_53 = arith.constant 0 : index
    %30 = vector.load %arg2[%c0_52, %c0_53] : memref<8x32xf32, #tpu.memory_space<vmem>>, vector<8x32xf32>
    %31 = vector.shape_cast %30 : vector<8x32xf32> to vector<1x8x32xf32>
    %32 = arith.addf %26, %31 : vector<1x8x32xf32>
    %33 = arith.addf %32, %29 : vector<1x8x32xf32>
    %cst_54 = arith.constant dense<0.000000e+00> : vector<1x8xf32>
    %34 = vector.multi_reduction <add>, %33, %cst_54 [2] : vector<1x8x32xf32> to vector<1x8xf32>
    %35 = vector.shape_cast %34 : vector<1x8xf32> to vector<1x8x1xf32>
    %cst_55 = arith.constant 3.200000e+01 : f32
    %36 = vector.broadcast %cst_55 : f32 to vector<1x8x1xf32>
    %37 = arith.divf %35, %36 : vector<1x8x1xf32>
    %38 = vector.broadcast %37 : vector<1x8x1xf32> to vector<1x8x32xf32>
    %39 = arith.subf %33, %38 : vector<1x8x32xf32>
    %40 = arith.mulf %39, %39 : vector<1x8x32xf32>
    %cst_56 = arith.constant dense<0.000000e+00> : vector<1x8xf32>
    %41 = vector.multi_reduction <add>, %40, %cst_56 [2] : vector<1x8x32xf32> to vector<1x8xf32>
    %42 = vector.shape_cast %41 : vector<1x8xf32> to vector<1x8x1xf32>
    %cst_57 = arith.constant 3.200000e+01 : f32
    %43 = vector.broadcast %cst_57 : f32 to vector<1x8x1xf32>
    %44 = arith.divf %42, %43 : vector<1x8x1xf32>
    %45 = vector.broadcast %37 : vector<1x8x1xf32> to vector<1x8x32xf32>
    %46 = arith.subf %33, %45 : vector<1x8x32xf32>
    %cst_58 = arith.constant 9.99999974E-6 : f32
    %47 = vector.broadcast %cst_58 : f32 to vector<1x8x1xf32>
    %48 = arith.addf %44, %47 : vector<1x8x1xf32>
    %49 = math.rsqrt %48 : vector<1x8x1xf32>
    %50 = vector.broadcast %49 : vector<1x8x1xf32> to vector<1x8x32xf32>
    %51 = arith.mulf %46, %50 : vector<1x8x32xf32>
    %52 = vector.shape_cast %15 : vector<1x32xf32> to vector<1x1x32xf32>
    %53 = vector.broadcast %52 : vector<1x1x32xf32> to vector<1x8x32xf32>
    %54 = arith.mulf %51, %53 : vector<1x8x32xf32>
    %55 = vector.shape_cast %16 : vector<1x32xf32> to vector<1x1x32xf32>
    %56 = vector.broadcast %55 : vector<1x1x32xf32> to vector<1x8x32xf32>
    %57 = arith.addf %54, %56 : vector<1x8x32xf32>
    %c0_59 = arith.constant 0 : index
    %c0_60 = arith.constant 0 : index
    %c0_61 = arith.constant 0 : index
    %58 = vector.load %arg5[%c0_59, %c0_60, %c0_61] : memref<1x1x8xf32, #tpu.memory_space<vmem>>, vector<1x1x8xf32>
    %c0_i32 = arith.constant 0 : i32
    %c2_i32 = arith.constant 2 : i32
    %59 = arith.addi %c0_i32, %c2_i32 : i32
    %c1_i32 = arith.constant 1 : i32
    %60 = scf.for %arg29 = %c0_i32 to %59 step %c1_i32 iter_args(%arg30 = %57) -> (vector<1x8x32xf32>)  : i32 {
      %62 = arith.truncf %arg30 : vector<1x8x32xf32> to vector<1x8x32xbf16>
      %cst_65 = arith.constant dense<0.000000e+00> : vector<1x8x32xf32>
      %63 = tpu.matmul %62, %1, %cst_65 {dimension_numbers = #tpu.dot_dimension_numbers<[2], [0], [0, 1], [1], [0, 0, 0, 1, 1, 1], [], []>} : vector<1x8x32xbf16>, vector<32x32xbf16>, vector<1x8x32xf32> -> vector<1x8x32xf32>
      %64 = vector.shape_cast %8 : vector<1x32xf32> to vector<1x1x32xf32>
      %65 = vector.broadcast %64 : vector<1x1x32xf32> to vector<1x8x32xf32>
      %66 = arith.addf %63, %65 : vector<1x8x32xf32>
      %cst_66 = arith.constant 0.176776692 : f32
      %67 = vector.broadcast %cst_66 : f32 to vector<1x8x32xf32>
      %68 = arith.mulf %66, %67 : vector<1x8x32xf32>
      %69 = arith.truncf %68 : vector<1x8x32xf32> to vector<1x8x32xbf16>
      %70 = arith.truncf %arg30 : vector<1x8x32xf32> to vector<1x8x32xbf16>
      %cst_67 = arith.constant dense<0.000000e+00> : vector<1x8x32xf32>
      %71 = tpu.matmul %70, %2, %cst_67 {dimension_numbers = #tpu.dot_dimension_numbers<[2], [0], [0, 1], [1], [0, 0, 0, 1, 1, 1], [], []>} : vector<1x8x32xbf16>, vector<32x32xbf16>, vector<1x8x32xf32> -> vector<1x8x32xf32>
      %72 = vector.shape_cast %9 : vector<1x32xf32> to vector<1x1x32xf32>
      %73 = vector.broadcast %72 : vector<1x1x32xf32> to vector<1x8x32xf32>
      %74 = arith.addf %71, %73 : vector<1x8x32xf32>
      %75 = arith.truncf %74 : vector<1x8x32xf32> to vector<1x8x32xbf16>
      %76 = arith.truncf %arg30 : vector<1x8x32xf32> to vector<1x8x32xbf16>
      %cst_68 = arith.constant dense<0.000000e+00> : vector<1x8x32xf32>
      %77 = tpu.matmul %76, %3, %cst_68 {dimension_numbers = #tpu.dot_dimension_numbers<[2], [0], [0, 1], [1], [0, 0, 0, 1, 1, 1], [], []>} : vector<1x8x32xbf16>, vector<32x32xbf16>, vector<1x8x32xf32> -> vector<1x8x32xf32>
      %78 = vector.shape_cast %10 : vector<1x32xf32> to vector<1x1x32xf32>
      %79 = vector.broadcast %78 : vector<1x1x32xf32> to vector<1x8x32xf32>
      %80 = arith.addf %77, %79 : vector<1x8x32xf32>
      %81 = arith.truncf %80 : vector<1x8x32xf32> to vector<1x8x32xbf16>
      %cst_69 = arith.constant dense<0.000000e+00> : vector<1x8x8xf32>
      %82 = tpu.matmul %69, %75, %cst_69 {dimension_numbers = #tpu.dot_dimension_numbers<[2], [2], [1], [1], [0, 0, 0, 1, 1, 1], [0], [0]>} : vector<1x8x32xbf16>, vector<1x8x32xbf16>, vector<1x8x8xf32> -> vector<1x8x8xf32>
      %83 = vector.broadcast %58 : vector<1x1x8xf32> to vector<1x8x8xf32>
      %84 = arith.addf %82, %83 : vector<1x8x8xf32>
      %cst_70 = arith.constant dense<0xFF800000> : vector<1x8xf32>
      %85 = vector.multi_reduction <maximumf>, %84, %cst_70 [2] : vector<1x8x8xf32> to vector<1x8xf32>
      %86 = vector.shape_cast %85 : vector<1x8xf32> to vector<1x8x1xf32>
      %87 = vector.broadcast %86 : vector<1x8x1xf32> to vector<1x8x8xf32>
      %88 = arith.subf %84, %87 : vector<1x8x8xf32>
      %89 = math.exp %88 : vector<1x8x8xf32>
      %cst_71 = arith.constant dense<0.000000e+00> : vector<1x8xf32>
      %90 = vector.multi_reduction <add>, %89, %cst_71 [2] : vector<1x8x8xf32> to vector<1x8xf32>
      %91 = vector.shape_cast %90 : vector<1x8xf32> to vector<1x8x1xf32>
      %92 = arith.truncf %89 : vector<1x8x8xf32> to vector<1x8x8xbf16>
      %93 = tpu.reciprocal %91 {approx = true} : vector<1x8x1xf32> -> vector<1x8x1xf32>
      %cst_72 = arith.constant dense<0.000000e+00> : vector<1x8x32xf32>
      %94 = tpu.matmul %92, %81, %cst_72 {dimension_numbers = #tpu.dot_dimension_numbers<[2], [1], [1], [2], [0, 0, 0, 1, 1, 2], [0], [0]>} : vector<1x8x8xbf16>, vector<1x8x32xbf16>, vector<1x8x32xf32> -> vector<1x8x32xf32>
      %95 = vector.broadcast %93 : vector<1x8x1xf32> to vector<1x8x32xf32>
      %96 = arith.mulf %94, %95 : vector<1x8x32xf32>
      %97 = arith.truncf %96 : vector<1x8x32xf32> to vector<1x8x32xbf16>
      %cst_73 = arith.constant dense<0.000000e+00> : vector<1x8x32xf32>
      %98 = tpu.matmul %97, %4, %cst_73 {dimension_numbers = #tpu.dot_dimension_numbers<[2], [0], [0, 1], [1], [0, 0, 0, 1, 1, 1], [], []>} : vector<1x8x32xbf16>, vector<32x32xbf16>, vector<1x8x32xf32> -> vector<1x8x32xf32>
      %99 = vector.shape_cast %11 : vector<1x32xf32> to vector<1x1x32xf32>
      %100 = vector.broadcast %99 : vector<1x1x32xf32> to vector<1x8x32xf32>
      %101 = arith.addf %98, %100 : vector<1x8x32xf32>
      %102 = arith.truncf %101 : vector<1x8x32xf32> to vector<1x8x32xbf16>
      %cst_74 = arith.constant dense<0.000000e+00> : vector<1x8x32xf32>
      %103 = tpu.matmul %102, %5, %cst_74 {dimension_numbers = #tpu.dot_dimension_numbers<[2], [0], [0, 1], [1], [0, 0, 0, 1, 1, 1], [], []>} : vector<1x8x32xbf16>, vector<32x32xbf16>, vector<1x8x32xf32> -> vector<1x8x32xf32>
      %104 = vector.shape_cast %12 : vector<1x32xf32> to vector<1x1x32xf32>
      %105 = vector.broadcast %104 : vector<1x1x32xf32> to vector<1x8x32xf32>
      %106 = arith.addf %103, %105 : vector<1x8x32xf32>
      %107 = arith.addf %101, %106 : vector<1x8x32xf32>
      %cst_75 = arith.constant dense<0.000000e+00> : vector<1x8xf32>
      %108 = vector.multi_reduction <add>, %107, %cst_75 [2] : vector<1x8x32xf32> to vector<1x8xf32>
      %109 = vector.shape_cast %108 : vector<1x8xf32> to vector<1x8x1xf32>
      %cst_76 = arith.constant 3.200000e+01 : f32
      %110 = vector.broadcast %cst_76 : f32 to vector<1x8x1xf32>
      %111 = arith.divf %109, %110 : vector<1x8x1xf32>
      %112 = vector.broadcast %111 : vector<1x8x1xf32> to vector<1x8x32xf32>
      %113 = arith.subf %107, %112 : vector<1x8x32xf32>
      %114 = arith.mulf %113, %113 : vector<1x8x32xf32>
      %cst_77 = arith.constant dense<0.000000e+00> : vector<1x8xf32>
      %115 = vector.multi_reduction <add>, %114, %cst_77 [2] : vector<1x8x32xf32> to vector<1x8xf32>
      %116 = vector.shape_cast %115 : vector<1x8xf32> to vector<1x8x1xf32>
      %cst_78 = arith.constant 3.200000e+01 : f32
      %117 = vector.broadcast %cst_78 : f32 to vector<1x8x1xf32>
      %118 = arith.divf %116, %117 : vector<1x8x1xf32>
      %119 = vector.broadcast %111 : vector<1x8x1xf32> to vector<1x8x32xf32>
      %120 = arith.subf %107, %119 : vector<1x8x32xf32>
      %cst_79 = arith.constant 9.99999974E-6 : f32
      %121 = vector.broadcast %cst_79 : f32 to vector<1x8x1xf32>
      %122 = arith.addf %118, %121 : vector<1x8x1xf32>
      %123 = math.rsqrt %122 : vector<1x8x1xf32>
      %124 = vector.broadcast %123 : vector<1x8x1xf32> to vector<1x8x32xf32>
      %125 = arith.mulf %120, %124 : vector<1x8x32xf32>
      %126 = vector.shape_cast %17 : vector<1x32xf32> to vector<1x1x32xf32>
      %127 = vector.broadcast %126 : vector<1x1x32xf32> to vector<1x8x32xf32>
      %128 = arith.mulf %125, %127 : vector<1x8x32xf32>
      %129 = vector.shape_cast %18 : vector<1x32xf32> to vector<1x1x32xf32>
      %130 = vector.broadcast %129 : vector<1x1x32xf32> to vector<1x8x32xf32>
      %131 = arith.addf %128, %130 : vector<1x8x32xf32>
      %132 = arith.truncf %131 : vector<1x8x32xf32> to vector<1x8x32xbf16>
      %cst_80 = arith.constant dense<0.000000e+00> : vector<1x8x64xf32>
      %133 = tpu.matmul %132, %6, %cst_80 {dimension_numbers = #tpu.dot_dimension_numbers<[2], [0], [0, 1], [1], [0, 0, 0, 1, 1, 1], [], []>} : vector<1x8x32xbf16>, vector<32x64xbf16>, vector<1x8x64xf32> -> vector<1x8x64xf32>
      %134 = vector.shape_cast %13 : vector<1x64xf32> to vector<1x1x64xf32>
      %135 = vector.broadcast %134 : vector<1x1x64xf32> to vector<1x8x64xf32>
      %136 = arith.addf %133, %135 : vector<1x8x64xf32>
      %cst_81 = arith.constant 0.000000e+00 : f32
      %137 = vector.broadcast %cst_81 : f32 to vector<1x8x64xf32>
      %138 = arith.maximumf %136, %137 : vector<1x8x64xf32>
      %139 = arith.truncf %138 : vector<1x8x64xf32> to vector<1x8x64xbf16>
      %cst_82 = arith.constant dense<0.000000e+00> : vector<1x8x32xf32>
      %140 = tpu.matmul %139, %7, %cst_82 {dimension_numbers = #tpu.dot_dimension_numbers<[2], [0], [0, 1], [1], [0, 0, 0, 1, 1, 1], [], []>} : vector<1x8x64xbf16>, vector<64x32xbf16>, vector<1x8x32xf32> -> vector<1x8x32xf32>
      %141 = vector.shape_cast %14 : vector<1x32xf32> to vector<1x1x32xf32>
      %142 = vector.broadcast %141 : vector<1x1x32xf32> to vector<1x8x32xf32>
      %143 = arith.addf %140, %142 : vector<1x8x32xf32>
      %144 = arith.addf %131, %143 : vector<1x8x32xf32>
      %cst_83 = arith.constant dense<0.000000e+00> : vector<1x8xf32>
      %145 = vector.multi_reduction <add>, %144, %cst_83 [2] : vector<1x8x32xf32> to vector<1x8xf32>
      %146 = vector.shape_cast %145 : vector<1x8xf32> to vector<1x8x1xf32>
      %cst_84 = arith.constant 3.200000e+01 : f32
      %147 = vector.broadcast %cst_84 : f32 to vector<1x8x1xf32>
      %148 = arith.divf %146, %147 : vector<1x8x1xf32>
      %149 = vector.broadcast %148 : vector<1x8x1xf32> to vector<1x8x32xf32>
      %150 = arith.subf %144, %149 : vector<1x8x32xf32>
      %151 = arith.mulf %150, %150 : vector<1x8x32xf32>
      %cst_85 = arith.constant dense<0.000000e+00> : vector<1x8xf32>
      %152 = vector.multi_reduction <add>, %151, %cst_85 [2] : vector<1x8x32xf32> to vector<1x8xf32>
      %153 = vector.shape_cast %152 : vector<1x8xf32> to vector<1x8x1xf32>
      %cst_86 = arith.constant 3.200000e+01 : f32
      %154 = vector.broadcast %cst_86 : f32 to vector<1x8x1xf32>
      %155 = arith.divf %153, %154 : vector<1x8x1xf32>
      %156 = vector.broadcast %148 : vector<1x8x1xf32> to vector<1x8x32xf32>
      %157 = arith.subf %144, %156 : vector<1x8x32xf32>
      %cst_87 = arith.constant 9.99999974E-6 : f32
      %158 = vector.broadcast %cst_87 : f32 to vector<1x8x1xf32>
      %159 = arith.addf %155, %158 : vector<1x8x1xf32>
      %160 = math.rsqrt %159 : vector<1x8x1xf32>
      %161 = vector.broadcast %160 : vector<1x8x1xf32> to vector<1x8x32xf32>
      %162 = arith.mulf %157, %161 : vector<1x8x32xf32>
      %163 = vector.shape_cast %19 : vector<1x32xf32> to vector<1x1x32xf32>
      %164 = vector.broadcast %163 : vector<1x1x32xf32> to vector<1x8x32xf32>
      %165 = arith.mulf %162, %164 : vector<1x8x32xf32>
      %166 = vector.shape_cast %20 : vector<1x32xf32> to vector<1x1x32xf32>
      %167 = vector.broadcast %166 : vector<1x1x32xf32> to vector<1x8x32xf32>
      %168 = arith.addf %165, %167 : vector<1x8x32xf32>
      scf.yield %168 : vector<1x8x32xf32>
    }
    %c0_62 = arith.constant 0 : index
    %c0_63 = arith.constant 0 : index
    %c0_64 = arith.constant 0 : index
    %61 = vector.load %arg28[%c0_62, %c0_63, %c0_64] : memref<1x8x32xf32, #tpu.memory_space<vmem>>, vector<1x8x32xf32>
    tpu.vector_store %arg28[%c0_62, %c0_63, %c0_64], %60 {strides = array<i32>} : memref<1x8x32xf32, #tpu.memory_space<vmem>>, vector<1x8x32xf32>,
    return
  }
  func.func @transform_0(%arg0: i32) -> (i32, i32, i32) {
    %c0_i32 = arith.constant 0 : i32
    %c0_i32_0 = arith.constant 0 : i32
    %c0_i32_1 = arith.constant 0 : i32
    return %arg0, %c0_i32, %c0_i32_0 : i32, i32, i32
  }
  func.func @transform_1(%arg0: i32) -> (i32, i32) {
    %c0_i32 = arith.constant 0 : i32
    %c0_i32_0 = arith.constant 0 : i32
    %c0_i32_1 = arith.constant 0 : i32
    return %c0_i32, %c0_i32_0 : i32, i32
  }
  func.func @transform_2(%arg0: i32) -> (i32, i32, i32) {
    %c0_i32 = arith.constant 0 : i32
    %c0_i32_0 = arith.constant 0 : i32
    %c0_i32_1 = arith.constant 0 : i32
    return %arg0, %c0_i32, %c0_i32_0 : i32, i32, i32
  }
  func.func @transform_3(%arg0: i32) -> (i32, i32) {
    %c0_i32 = arith.constant 0 : i32
    %c0_i32_0 = arith.constant 0 : i32
    %c0_i32_1 = arith.constant 0 : i32
    return %c0_i32, %c0_i32_0 : i32, i32
  }
  func.func @transform_4(%arg0: i32) -> (i32, i32, i32) {
    %c0_i32 = arith.constant 0 : i32
    %c0_i32_0 = arith.constant 0 : i32
    %c0_i32_1 = arith.constant 0 : i32
    return %arg0, %c0_i32, %c0_i32_0 : i32, i32, i32
  }
  func.func @transform_5(%arg0: i32) -> (i32, i32) {
    %c0_i32 = arith.constant 0 : i32
    %c0_i32_0 = arith.constant 0 : i32
    %c0_i32_1 = arith.constant 0 : i32
    return %c0_i32, %c0_i32_0 : i32, i32
  }
  func.func @transform_6(%arg0: i32) -> (i32, i32) {
    %c0_i32 = arith.constant 0 : i32
    %c0_i32_0 = arith.constant 0 : i32
    %c0_i32_1 = arith.constant 0 : i32
    return %c0_i32, %c0_i32_0 : i32, i32
  }
  func.func @transform_7(%arg0: i32) -> (i32, i32) {
    %c0_i32 = arith.constant 0 : i32
    %c0_i32_0 = arith.constant 0 : i32
    %c0_i32_1 = arith.constant 0 : i32
    return %c0_i32, %c0_i32_0 : i32, i32
  }
  func.func @transform_8(%arg0: i32) -> (i32, i32) {
    %c0_i32 = arith.constant 0 : i32
    %c0_i32_0 = arith.constant 0 : i32
    %c0_i32_1 = arith.constant 0 : i32
    return %c0_i32, %c0_i32_0 : i32, i32
  }
  func.func @transform_9(%arg0: i32) -> (i32, i32) {
    %c0_i32 = arith.constant 0 : i32
    %c0_i32_0 = arith.constant 0 : i32
    %c0_i32_1 = arith.constant 0 : i32
    return %c0_i32, %c0_i32_0 : i32, i32
  }
  func.func @transform_10(%arg0: i32) -> (i32, i32) {
    %c0_i32 = arith.constant 0 : i32
    %c0_i32_0 = arith.constant 0 : i32
    %c0_i32_1 = arith.constant 0 : i32
    return %c0_i32, %c0_i32_0 : i32, i32
  }
  func.func @transform_11(%arg0: i32) -> (i32, i32) {
    %c0_i32 = arith.constant 0 : i32
    %c0_i32_0 = arith.constant 0 : i32
    %c0_i32_1 = arith.constant 0 : i32
    return %c0_i32, %c0_i32_0 : i32, i32
  }
  func.func @transform_12(%arg0: i32) -> (i32, i32) {
    %c0_i32 = arith.constant 0 : i32
    %c0_i32_0 = arith.constant 0 : i32
    %c0_i32_1 = arith.constant 0 : i32
    return %c0_i32, %c0_i32_0 : i32, i32
  }
  func.func @transform_13(%arg0: i32) -> (i32, i32) {
    %c0_i32 = arith.constant 0 : i32
    %c0_i32_0 = arith.constant 0 : i32
    %c0_i32_1 = arith.constant 0 : i32
    return %c0_i32, %c0_i32_0 : i32, i32
  }
  func.func @transform_14(%arg0: i32) -> (i32, i32) {
    %c0_i32 = arith.constant 0 : i32
    %c0_i32_0 = arith.constant 0 : i32
    %c0_i32_1 = arith.constant 0 : i32
    return %c0_i32, %c0_i32_0 : i32, i32
  }
  func.func @transform_15(%arg0: i32) -> (i32, i32) {
    %c0_i32 = arith.constant 0 : i32
    %c0_i32_0 = arith.constant 0 : i32
    %c0_i32_1 = arith.constant 0 : i32
    return %c0_i32, %c0_i32_0 : i32, i32
  }
  func.func @transform_16(%arg0: i32) -> (i32, i32) {
    %c0_i32 = arith.constant 0 : i32
    %c0_i32_0 = arith.constant 0 : i32
    %c0_i32_1 = arith.constant 0 : i32
    return %c0_i32, %c0_i32_0 : i32, i32
  }
  func.func @transform_17(%arg0: i32) -> (i32, i32) {
    %c0_i32 = arith.constant 0 : i32
    %c0_i32_0 = arith.constant 0 : i32
    %c0_i32_1 = arith.constant 0 : i32
    return %c0_i32, %c0_i32_0 : i32, i32
  }
  func.func @transform_18(%arg0: i32) -> (i32, i32) {
    %c0_i32 = arith.constant 0 : i32
    %c0_i32_0 = arith.constant 0 : i32
    %c0_i32_1 = arith.constant 0 : i32
    return %c0_i32, %c0_i32_0 : i32, i32
  }
  func.func @transform_19(%arg0: i32) -> (i32, i32) {
    %c0_i32 = arith.constant 0 : i32
    %c0_i32_0 = arith.constant 0 : i32
    %c0_i32_1 = arith.constant 0 : i32
    return %c0_i32, %c0_i32_0 : i32, i32
  }
  func.func @transform_20(%arg0: i32) -> (i32, i32) {
    %c0_i32 = arith.constant 0 : i32
    %c0_i32_0 = arith.constant 0 : i32
    %c0_i32_1 = arith.constant 0 : i32
    return %c0_i32, %c0_i32_0 : i32, i32
  }
  func.func @transform_21(%arg0: i32) -> (i32, i32) {
    %c0_i32 = arith.constant 0 : i32
    %c0_i32_0 = arith.constant 0 : i32
    %c0_i32_1 = arith.constant 0 : i32
    return %c0_i32, %c0_i32_0 : i32, i32
  }
  func.func @transform_22(%arg0: i32) -> (i32, i32) {
    %c0_i32 = arith.constant 0 : i32
    %c0_i32_0 = arith.constant 0 : i32
    %c0_i32_1 = arith.constant 0 : i32
    return %c0_i32, %c0_i32_0 : i32, i32
  }
  func.func @transform_23(%arg0: i32) -> (i32, i32) {
    %c0_i32 = arith.constant 0 : i32
    %c0_i32_0 = arith.constant 0 : i32
    %c0_i32_1 = arith.constant 0 : i32
    return %c0_i32, %c0_i32_0 : i32, i32
  }
  func.func @transform_24(%arg0: i32) -> (i32, i32) {
    %c0_i32 = arith.constant 0 : i32
    %c0_i32_0 = arith.constant 0 : i32
    %c0_i32_1 = arith.constant 0 : i32
    return %c0_i32, %c0_i32_0 : i32, i32
  }
  func.func @transform_25(%arg0: i32) -> (i32, i32) {
    %c0_i32 = arith.constant 0 : i32
    %c0_i32_0 = arith.constant 0 : i32
    %c0_i32_1 = arith.constant 0 : i32
    return %c0_i32, %c0_i32_0 : i32, i32
  }
  func.func @transform_26(%arg0: i32) -> (i32, i32) {
    %c0_i32 = arith.constant 0 : i32
    %c0_i32_0 = arith.constant 0 : i32
    %c0_i32_1 = arith.constant 0 : i32
    return %c0_i32, %c0_i32_0 : i32, i32
  }
  func.func @transform_27(%arg0: i32) -> (i32, i32, i32) {
    %c0_i32 = arith.constant 0 : i32
    %c0_i32_0 = arith.constant 0 : i32
    %c0_i32_1 = arith.constant 0 : i32
    return %arg0, %c0_i32, %c0_i32_0 : i32, i32, i32
  }
}

</mosaic_0001>

<llo_original>
// kernel: tpu_custom_call.1
$region0: #{tpu_custom_call.1}
  #allocation0 [shape = 'u32[]', space=smem, size = 0x4, offset = 0x4, fixed_abs, tag = 'smem constant byte address 0x4 - core index']
  #allocation1 [shape = 'u32[144,128]{1,0:T(1,128)}', space=vmem, size = 0x12000, scoped, tag = 'internal scratch']
  %s0 = inlined_call_operand.hbm [shape: bf16[2,8,16], index: 0, kind: input, shape index: {}]
  %s1 = inlined_call_operand.hbm [shape: f32[8,32], index: 1, kind: input, shape index: {}]
  %s2 = inlined_call_operand.vmem [shape: bf16[2,8,2], index: 2, kind: input, shape index: {}]
  %s3 = inlined_call_operand.hbm [shape: bf16[2,32], index: 3, kind: input, shape index: {}]
  %s4 = inlined_call_operand.hbm [shape: f32[2,1,8], index: 4, kind: input, shape index: {}]
  %s5 = inlined_call_operand.hbm [shape: bf16[16,32], index: 5, kind: input, shape index: {}]
  %s6 = inlined_call_operand.hbm [shape: f32[1,32], index: 6, kind: input, shape index: {}]
  %s7 = inlined_call_operand.hbm [shape: f32[1,32], index: 7, kind: input, shape index: {}]
  %s8 = inlined_call_operand.hbm [shape: f32[1,32], index: 8, kind: input, shape index: {}]
  %s9 = inlined_call_operand.vmem [shape: bf16[32,32], index: 9, kind: input, shape index: {}]
  %s10 = inlined_call_operand.hbm [shape: f32[1,32], index: 10, kind: input, shape index: {}]
  %s11 = inlined_call_operand.vmem [shape: bf16[32,32], index: 11, kind: input, shape index: {}]
  %s12 = inlined_call_operand.hbm [shape: f32[1,32], index: 12, kind: input, shape index: {}]
  %s13 = inlined_call_operand.vmem [shape: bf16[32,32], index: 13, kind: input, shape index: {}]
  %s14 = inlined_call_operand.hbm [shape: f32[1,32], index: 14, kind: input, shape index: {}]
  %s15 = inlined_call_operand.vmem [shape: bf16[32,32], index: 15, kind: input, shape index: {}]
  %s16 = inlined_call_operand.hbm [shape: f32[1,32], index: 16, kind: input, shape index: {}]
  %s17 = inlined_call_operand.vmem [shape: bf16[32,32], index: 17, kind: input, shape index: {}]
  %s18 = inlined_call_operand.hbm [shape: f32[1,32], index: 18, kind: input, shape index: {}]
  %s19 = inlined_call_operand.hbm [shape: f32[1,32], index: 19, kind: input, shape index: {}]
  %s20 = inlined_call_operand.hbm [shape: f32[1,32], index: 20, kind: input, shape index: {}]
  %s21 = inlined_call_operand.vmem [shape: bf16[32,64], index: 21, kind: input, shape index: {}]
  %s22 = inlined_call_operand.vmem [shape: f32[1,64], index: 22, kind: input, shape index: {}]
  %s23 = inlined_call_operand.vmem [shape: bf16[64,32], index: 23, kind: input, shape index: {}]
  %s24 = inlined_call_operand.vmem [shape: f32[1,32], index: 24, kind: input, shape index: {}]
  %s25 = inlined_call_operand.vmem [shape: f32[1,32], index: 25, kind: input, shape index: {}]
  %s26 = inlined_call_operand.vmem [shape: f32[1,32], index: 26, kind: input, shape index: {}]
  %s27 = inlined_call_operand.hbm [shape: f32[2,8,32], index: 27, kind: output, shape index: {}]
  %s28 = sld [smem:[#allocation0]]
  $region208: #{tpu_custom_call.1} parent=0
    _
  %s30 = ssub.s32 1, %s28
  %s31 = scalar_select 0, %s30, %s28
  $region1: #{tpu_custom_call.1} parent=0
    #allocation2 [shape = 'u8[4096]{0}', space=vmem, size = 0x1000, scoped, tag = 'input window, operand 0']
    #allocation3 [shape = 's32[2]{0}', space=sflag, size = 0x8, scoped, tag = 'scoped memory for tpu_custom_call.1']
    #allocation4 [shape = 's32[2]{0}', space=sflag, size = 0x8, scoped, tag = 'scoped memory for tpu_custom_call.1']
    #allocation5 [shape = 'u8[4096]{0}', space=vmem, size = 0x1000, scoped, tag = 'input window, operand 1, single buffered']
    #allocation6 [shape = 's32[1]{0}', space=sflag, size = 0x4, scoped, tag = 'scoped memory for tpu_custom_call.1']
    #allocation7 [shape = 'u8[512]{0}', space=vmem, size = 0x400, scoped, tag = 'input window, operand 3, single buffered']
    #allocation8 [shape = 'u8[1024]{0}', space=vmem, size = 0x400, scoped, tag = 'input window, operand 4']
    #allocation9 [shape = 's32[2]{0}', space=sflag, size = 0x8, scoped, tag = 'scoped memory for tpu_custom_call.1']
    #allocation10 [shape = 'u8[4096]{0}', space=vmem, size = 0x1000, scoped, tag = 'input window, operand 5, single buffered']
    #allocation11 [shape = 'u8[512]{0}', space=vmem, size = 0x400, scoped, tag = 'input window, operand 6, single buffered']
    #allocation12 [shape = 's32[1]{0}', space=sflag, size = 0x4, scoped, tag = 'scoped memory for tpu_custom_call.1']
    #allocation13 [shape = 'u8[512]{0}', space=vmem, size = 0x400, scoped, tag = 'input window, operand 7, single buffered']
    #allocation14 [shape = 'u8[512]{0}', space=vmem, size = 0x400, scoped, tag = 'input window, operand 8, single buffered']
    #allocation15 [shape = 's32[1]{0}', space=sflag, size = 0x4, scoped, tag = 'scoped memory for tpu_custom_call.1']
    #allocation16 [shape = 'u8[512]{0}', space=vmem, size = 0x400, scoped, tag = 'input window, operand 10, single buffered']
    #allocation17 [shape = 'u8[512]{0}', space=vmem, size = 0x400, scoped, tag = 'input window, operand 12, single buffered']
    #allocation18 [shape = 's32[1]{0}', space=sflag, size = 0x4, scoped, tag = 'scoped memory for tpu_custom_call.1']
    #allocation19 [shape = 'u8[512]{0}', space=vmem, size = 0x400, scoped, tag = 'input window, operand 14, single buffered']
    #allocation20 [shape = 'u8[512]{0}', space=vmem, size = 0x400, scoped, tag = 'input window, operand 16, single buffered']
    #allocation21 [shape = 's32[1]{0}', space=sflag, size = 0x4, scoped, tag = 'scoped memory for tpu_custom_call.1']
    #allocation22 [shape = 'u8[512]{0}', space=vmem, size = 0x400, scoped, tag = 'input window, operand 18, single buffered']
    #allocation23 [shape = 'u8[512]{0}', space=vmem, size = 0x400, scoped, tag = 'input window, operand 19, single buffered']
    #allocation24 [shape = 's32[1]{0}', space=sflag, size = 0x4, scoped, tag = 'scoped memory for tpu_custom_call.1']
    #allocation25 [shape = 'u8[512]{0}', space=vmem, size = 0x400, scoped, tag = 'input window, operand 20, single buffered']
    #allocation26 [shape = 'u8[8192]{0}', space=vmem, size = 0x2000, scoped, tag = 'output window, operand 0']
    %32 = vsyncpa [#allocation3], 0
    %s33 = scalar_lea.sflag [#allocation3], 1
    %34 = vsyncpa %s33, 0
    %35 = vsyncpa [#allocation6], 0
    %36 = vsyncpa [#allocation9], 0
    %s37 = scalar_lea.sflag [#allocation9], 1
    %38 = vsyncpa %s37, 0
    %39 = vsyncpa [#allocation12], 0
    %40 = vsyncpa [#allocation15], 0
    %41 = vsyncpa [#allocation18], 0
    %42 = vsyncpa [#allocation21], 0
    %43 = vsyncpa [#allocation24], 0
    %44 = vsyncpa [#allocation4], 0
    %s45 = scalar_lea.sflag [#allocation4], 1
    %46 = vsyncpa %s45, 0
    loop: start=0, step=1, limit=4
    $region2: #{tpu_custom_call.1} parent=1 // loop_pre_header
      _
    $region3: #{tpu_custom_call.1} parent=1 // loop_header
      %s48 = sphi 0, %s52
      %p49 = scmp.ge.s32.totalorder %s48, 4
      %s58 = sphi 0, %s60
      %s61 = sphi 0, %s58
      %s62 = sphi 0, %s61
      %s78 = sphi 0, %s62
      %s82 = sphi 0, %s82
      %s84 = sphi 0, %s82
      %s85 = sphi 0, %s84
      %s99 = sphi 0, %s85
      %s105 = sphi 0, %s107
      %s108 = sphi 0, %s105
      %s109 = sphi 0, %s108
      %s125 = sphi 0, %s109
      %s129 = sphi 0, %s129
      %s131 = sphi 0, %s129
      %s132 = sphi 0, %s131
      %s146 = sphi 0, %s132
      %s152 = sphi 0, %s154
      %s155 = sphi 0, %s152
      %s156 = sphi 0, %s155
      %s172 = sphi 0, %s156
      %s176 = sphi 0, %s176
      %s178 = sphi 0, %s176
      %s179 = sphi 0, %s178
      %s193 = sphi 0, %s179
      %s197 = sphi 0, %s197
      %s199 = sphi 0, %s197
      %s200 = sphi 0, %s199
      %s214 = sphi 0, %s200
      %s218 = sphi 0, %s218
      %s220 = sphi 0, %s218
      %s221 = sphi 0, %s220
      %s235 = sphi 0, %s221
      %s239 = sphi 0, %s239
      %s241 = sphi 0, %s239
      %s242 = sphi 0, %s241
      %s256 = sphi 0, %s242
      %s260 = sphi 0, %s260
      %s262 = sphi 0, %s260
      %s263 = sphi 0, %s262
      %s277 = sphi 0, %s263
      %s281 = sphi 0, %s281
      %s283 = sphi 0, %s281
      %s284 = sphi 0, %s283
      %s298 = sphi 0, %s284
      %s302 = sphi 0, %s302
      %s304 = sphi 0, %s302
      %s305 = sphi 0, %s304
      %s319 = sphi 0, %s305
      %s323 = sphi 0, %s323
      %s325 = sphi 0, %s323
      %s326 = sphi 0, %s325
      %s340 = sphi 0, %s326
      %s344 = sphi 0, %s344
      %s346 = sphi 0, %s344
      %s347 = sphi 0, %s346
      %s361 = sphi 0, %s347
      %s365 = sphi 0, %s365
      %s367 = sphi 0, %s365
      %s368 = sphi 0, %s367
      %s382 = sphi 0, %s368
      %s386 = sphi 0, %s386
      %s388 = sphi 0, %s386
      %s389 = sphi 0, %s388
      %s403 = sphi 0, %s389
      %s407 = sphi 0, %s407
      %s409 = sphi 0, %s407
      %s410 = sphi 0, %s409
      %s424 = sphi 0, %s410
      %s428 = sphi 0, %s428
      %s430 = sphi 0, %s428
      %s431 = sphi 0, %s430
      %s445 = sphi 0, %s431
      %s449 = sphi 0, %s449
      %s451 = sphi 0, %s449
      %s452 = sphi 0, %s451
      %s466 = sphi 0, %s452
      %s470 = sphi 0, %s470
      %s472 = sphi 0, %s470
      %s473 = sphi 0, %s472
      %s487 = sphi 0, %s473
      %s491 = sphi 0, %s491
      %s493 = sphi 0, %s491
      %s494 = sphi 0, %s493
      %s508 = sphi 0, %s494
      %s512 = sphi 0, %s512
      %s514 = sphi 0, %s512
      %s515 = sphi 0, %s514
      %s529 = sphi 0, %s515
      %s533 = sphi 0, %s533
      %s535 = sphi 0, %s533
      %s536 = sphi 0, %s535
      %s550 = sphi 0, %s536
      %s554 = sphi 0, %s554
      %s556 = sphi 0, %s554
      %s557 = sphi 0, %s556
      %s571 = sphi 0, %s557
      %s575 = sphi 0, %s575
      %s577 = sphi 0, %s575
      %s578 = sphi 0, %s577
      %s592 = sphi 0, %s578
      %s596 = sphi 0, %s596
      %s598 = sphi 0, %s596
      %s599 = sphi 0, %s598
      %s613 = sphi 0, %s599
      %s617 = sphi 0, %s617
      %s619 = sphi 0, %s617
      %s620 = sphi 0, %s619
      %s634 = sphi 0, %s620
      %s640 = sphi 0, %s642
      %s643 = sphi 0, %s640
      %s644 = sphi 0, %s643
      %s660 = sphi 0, %s644
    $region4: #{tpu_custom_call.1} parent=1 // loop_header_branch
      %51 = sbr.rel (%p49) target = $region8
    $region5: #{tpu_custom_call.1} parent=1 // loop_body
      %s53 = ssub.s32 %s48, 1
      %s54 = ssub.s32 %s48, 2
      %s55 = sadd.s32 %s48, 1
      %s56 = ssub.s32 %s48, %s55
      %p57 = scmp.eq.s32.totalorder %s56, 0
      %s59 = sadd.s32 %s58, 1
      %s60 = scalar_select %p57, %s58, %s59
      %p63 = pneg %p57
      %p64 = scmp.eq.s32.totalorder %s48, 1
      %p65 = por %p63, %p64
      %p66 = scmp.ne.s32.totalorder %s58, %s61
      %p67 = scmp.eq.s32.totalorder %s48, 0
      %p68 = por %p66, %p67
      %p69 = scmp.ne.s32.totalorder %s58, %s61
      %p70 = scmp.eq.s32.totalorder %s53, 1
      %p71 = por %p69, %p70
      %p72 = scmp.ne.s32.totalorder %s61, %s62
      %p73 = scmp.eq.s32.totalorder %s53, 0
      %p74 = por %p72, %p73
      %p75 = scmp.ne.s32.totalorder %s61, %s62
      %p76 = scmp.eq.s32.totalorder %s54, 1
      %p77 = por %p75, %p76
      %p79 = scmp.ne.s32.totalorder %s62, %s78
      %p80 = scmp.eq.s32.totalorder %s54, 0
      %p81 = por %p79, %p80
      %s83 = sadd.s32 %s82, 1
      %p86 = scmp.eq.s32.totalorder %s48, 1
      %p87 = scmp.ne.s32.totalorder %s82, %s84
      %p88 = scmp.eq.s32.totalorder %s48, 0
      %p89 = por %p87, %p88
      %p90 = scmp.ne.s32.totalorder %s82, %s84
      %p91 = scmp.eq.s32.totalorder %s53, 1
      %p92 = por %p90, %p91
      %p93 = scmp.ne.s32.totalorder %s84, %s85
      %p94 = scmp.eq.s32.totalorder %s53, 0
      %p95 = por %p93, %p94
      %p96 = scmp.ne.s32.totalorder %s84, %s85
      %p97 = scmp.eq.s32.totalorder %s54, 1
      %p98 = por %p96, %p97
      %p100 = scmp.ne.s32.totalorder %s85, %s99
      %p101 = scmp.eq.s32.totalorder %s54, 0
      %p102 = por %p100, %p101
      %s103 = ssub.s32 %s48, %s55
      %p104 = scmp.eq.s32.totalorder %s103, 0
      %s106 = sadd.s32 %s105, 1
      %s107 = scalar_select %p104, %s105, %s106
      %p110 = pneg %p104
      %p111 = scmp.eq.s32.totalorder %s48, 1
      %p112 = por %p110, %p111
      %p113 = scmp.ne.s32.totalorder %s105, %s108
      %p114 = scmp.eq.s32.totalorder %s48, 0
      %p115 = por %p113, %p114
      %p116 = scmp.ne.s32.totalorder %s105, %s108
      %p117 = scmp.eq.s32.totalorder %s53, 1
      %p118 = por %p116, %p117
      %p119 = scmp.ne.s32.totalorder %s108, %s109
      %p120 = scmp.eq.s32.totalorder %s53, 0
      %p121 = por %p119, %p120
      %p122 = scmp.ne.s32.totalorder %s108, %s109
      %p123 = scmp.eq.s32.totalorder %s54, 1
      %p124 = por %p122, %p123
      %p126 = scmp.ne.s32.totalorder %s109, %s125
      %p127 = scmp.eq.s32.totalorder %s54, 0
      %p128 = por %p126, %p127
      %s130 = sadd.s32 %s129, 1
      %p133 = scmp.eq.s32.totalorder %s48, 1
      %p134 = scmp.ne.s32.totalorder %s129, %s131
      %p135 = scmp.eq.s32.totalorder %s48, 0
      %p136 = por %p134, %p135
      %p137 = scmp.ne.s32.totalorder %s129, %s131
      %p138 = scmp.eq.s32.totalorder %s53, 1
      %p139 = por %p137, %p138
      %p140 = scmp.ne.s32.totalorder %s131, %s132
      %p141 = scmp.eq.s32.totalorder %s53, 0
      %p142 = por %p140, %p141
      %p143 = scmp.ne.s32.totalorder %s131, %s132
      %p144 = scmp.eq.s32.totalorder %s54, 1
      %p145 = por %p143, %p144
      %p147 = scmp.ne.s32.totalorder %s132, %s146
      %p148 = scmp.eq.s32.totalorder %s54, 0
      %p149 = por %p147, %p148
      %s150 = ssub.s32 %s48, %s55
      %p151 = scmp.eq.s32.totalorder %s150, 0
      %s153 = sadd.s32 %s152, 1
      %s154 = scalar_select %p151, %s152, %s153
      %p157 = pneg %p151
      %p158 = scmp.eq.s32.totalorder %s48, 1
      %p159 = por %p157, %p158
      %p160 = scmp.ne.s32.totalorder %s152, %s155
      %p161 = scmp.eq.s32.totalorder %s48, 0
      %p162 = por %p160, %p161
      %p163 = scmp.ne.s32.totalorder %s152, %s155
      %p164 = scmp.eq.s32.totalorder %s53, 1
      %p165 = por %p163, %p164
      %p166 = scmp.ne.s32.totalorder %s155, %s156
      %p167 = scmp.eq.s32.totalorder %s53, 0
      %p168 = por %p166, %p167
      %p169 = scmp.ne.s32.totalorder %s155, %s156
      %p170 = scmp.eq.s32.totalorder %s54, 1
      %p171 = por %p169, %p170
      %p173 = scmp.ne.s32.totalorder %s156, %s172
      %p174 = scmp.eq.s32.totalorder %s54, 0
      %p175 = por %p173, %p174
      %s177 = sadd.s32 %s176, 1
      %p180 = scmp.eq.s32.totalorder %s48, 1
      %p181 = scmp.ne.s32.totalorder %s176, %s178
      %p182 = scmp.eq.s32.totalorder %s48, 0
      %p183 = por %p181, %p182
      %p184 = scmp.ne.s32.totalorder %s176, %s178
      %p185 = scmp.eq.s32.totalorder %s53, 1
      %p186 = por %p184, %p185
      %p187 = scmp.ne.s32.totalorder %s178, %s179
      %p188 = scmp.eq.s32.totalorder %s53, 0
      %p189 = por %p187, %p188
      %p190 = scmp.ne.s32.totalorder %s178, %s179
      %p191 = scmp.eq.s32.totalorder %s54, 1
      %p192 = por %p190, %p191
      %p194 = scmp.ne.s32.totalorder %s179, %s193
      %p195 = scmp.eq.s32.totalorder %s54, 0
      %p196 = por %p194, %p195
      %s198 = sadd.s32 %s197, 1
      %p201 = scmp.eq.s32.totalorder %s48, 1
      %p202 = scmp.ne.s32.totalorder %s197, %s199
      %p203 = scmp.eq.s32.totalorder %s48, 0
      %p204 = por %p202, %p203
      %p205 = scmp.ne.s32.totalorder %s197, %s199
      %p206 = scmp.eq.s32.totalorder %s53, 1
      %p207 = por %p205, %p206
      %p208 = scmp.ne.s32.totalorder %s199, %s200
      %p209 = scmp.eq.s32.totalorder %s53, 0
      %p210 = por %p208, %p209
      %p211 = scmp.ne.s32.totalorder %s199, %s200
      %p212 = scmp.eq.s32.totalorder %s54, 1
      %p213 = por %p211, %p212
      %p215 = scmp.ne.s32.totalorder %s200, %s214
      %p216 = scmp.eq.s32.totalorder %s54, 0
      %p217 = por %p215, %p216
      %s219 = sadd.s32 %s218, 1
      %p222 = scmp.eq.s32.totalorder %s48, 1
      %p223 = scmp.ne.s32.totalorder %s218, %s220
      %p224 = scmp.eq.s32.totalorder %s48, 0
      %p225 = por %p223, %p224
      %p226 = scmp.ne.s32.totalorder %s218, %s220
      %p227 = scmp.eq.s32.totalorder %s53, 1
      %p228 = por %p226, %p227
      %p229 = scmp.ne.s32.totalorder %s220, %s221
      %p230 = scmp.eq.s32.totalorder %s53, 0
      %p231 = por %p229, %p230
      %p232 = scmp.ne.s32.totalorder %s220, %s221
      %p233 = scmp.eq.s32.totalorder %s54, 1
      %p234 = por %p232, %p233
      %p236 = scmp.ne.s32.totalorder %s221, %s235
      %p237 = scmp.eq.s32.totalorder %s54, 0
      %p238 = por %p236, %p237
      %s240 = sadd.s32 %s239, 1
      %p243 = scmp.eq.s32.totalorder %s48, 1
      %p244 = scmp.ne.s32.totalorder %s239, %s241
      %p245 = scmp.eq.s32.totalorder %s48, 0
      %p246 = por %p244, %p245
      %p247 = scmp.ne.s32.totalorder %s239, %s241
      %p248 = scmp.eq.s32.totalorder %s53, 1
      %p249 = por %p247, %p248
      %p250 = scmp.ne.s32.totalorder %s241, %s242
      %p251 = scmp.eq.s32.totalorder %s53, 0
      %p252 = por %p250, %p251
      %p253 = scmp.ne.s32.totalorder %s241, %s242
      %p254 = scmp.eq.s32.totalorder %s54, 1
      %p255 = por %p253, %p254
      %p257 = scmp.ne.s32.totalorder %s242, %s256
      %p258 = scmp.eq.s32.totalorder %s54, 0
      %p259 = por %p257, %p258
      %s261 = sadd.s32 %s260, 1
      %p264 = scmp.eq.s32.totalorder %s48, 1
      %p265 = scmp.ne.s32.totalorder %s260, %s262
      %p266 = scmp.eq.s32.totalorder %s48, 0
      %p267 = por %p265, %p266
      %p268 = scmp.ne.s32.totalorder %s260, %s262
      %p269 = scmp.eq.s32.totalorder %s53, 1
      %p270 = por %p268, %p269
      %p271 = scmp.ne.s32.totalorder %s262, %s263
      %p272 = scmp.eq.s32.totalorder %s53, 0
      %p273 = por %p271, %p272
      %p274 = scmp.ne.s32.totalorder %s262, %s263
      %p275 = scmp.eq.s32.totalorder %s54, 1
      %p276 = por %p274, %p275
      %p278 = scmp.ne.s32.totalorder %s263, %s277
      %p279 = scmp.eq.s32.totalorder %s54, 0
      %p280 = por %p278, %p279
      %s282 = sadd.s32 %s281, 1
      %p285 = scmp.eq.s32.totalorder %s48, 1
      %p286 = scmp.ne.s32.totalorder %s281, %s283
      %p287 = scmp.eq.s32.totalorder %s48, 0
      %p288 = por %p286, %p287
      %p289 = scmp.ne.s32.totalorder %s281, %s283
      %p290 = scmp.eq.s32.totalorder %s53, 1
      %p291 = por %p289, %p290
      %p292 = scmp.ne.s32.totalorder %s283, %s284
      %p293 = scmp.eq.s32.totalorder %s53, 0
      %p294 = por %p292, %p293
      %p295 = scmp.ne.s32.totalorder %s283, %s284
      %p296 = scmp.eq.s32.totalorder %s54, 1
      %p297 = por %p295, %p296
      %p299 = scmp.ne.s32.totalorder %s284, %s298
      %p300 = scmp.eq.s32.totalorder %s54, 0
      %p301 = por %p299, %p300
      %s303 = sadd.s32 %s302, 1
      %p306 = scmp.eq.s32.totalorder %s48, 1
      %p307 = scmp.ne.s32.totalorder %s302, %s304
      %p308 = scmp.eq.s32.totalorder %s48, 0
      %p309 = por %p307, %p308
      %p310 = scmp.ne.s32.totalorder %s302, %s304
      %p311 = scmp.eq.s32.totalorder %s53, 1
      %p312 = por %p310, %p311
      %p313 = scmp.ne.s32.totalorder %s304, %s305
      %p314 = scmp.eq.s32.totalorder %s53, 0
      %p315 = por %p313, %p314
      %p316 = scmp.ne.s32.totalorder %s304, %s305
      %p317 = scmp.eq.s32.totalorder %s54, 1
      %p318 = por %p316, %p317
      %p320 = scmp.ne.s32.totalorder %s305, %s319
      %p321 = scmp.eq.s32.totalorder %s54, 0
      %p322 = por %p320, %p321
      %s324 = sadd.s32 %s323, 1
      %p327 = scmp.eq.s32.totalorder %s48, 1
      %p328 = scmp.ne.s32.totalorder %s323, %s325
      %p329 = scmp.eq.s32.totalorder %s48, 0
      %p330 = por %p328, %p329
      %p331 = scmp.ne.s32.totalorder %s323, %s325
      %p332 = scmp.eq.s32.totalorder %s53, 1
      %p333 = por %p331, %p332
      %p334 = scmp.ne.s32.totalorder %s325, %s326
      %p335 = scmp.eq.s32.totalorder %s53, 0
      %p336 = por %p334, %p335
      %p337 = scmp.ne.s32.totalorder %s325, %s326
      %p338 = scmp.eq.s32.totalorder %s54, 1
      %p339 = por %p337, %p338
      %p341 = scmp.ne.s32.totalorder %s326, %s340
      %p342 = scmp.eq.s32.totalorder %s54, 0
      %p343 = por %p341, %p342
      %s345 = sadd.s32 %s344, 1
      %p348 = scmp.eq.s32.totalorder %s48, 1
      %p349 = scmp.ne.s32.totalorder %s344, %s346
      %p350 = scmp.eq.s32.totalorder %s48, 0
      %p351 = por %p349, %p350
      %p352 = scmp.ne.s32.totalorder %s344, %s346
      %p353 = scmp.eq.s32.totalorder %s53, 1
      %p354 = por %p352, %p353
      %p355 = scmp.ne.s32.totalorder %s346, %s347
      %p356 = scmp.eq.s32.totalorder %s53, 0
      %p357 = por %p355, %p356
      %p358 = scmp.ne.s32.totalorder %s346, %s347
      %p359 = scmp.eq.s32.totalorder %s54, 1
      %p360 = por %p358, %p359
      %p362 = scmp.ne.s32.totalorder %s347, %s361
      %p363 = scmp.eq.s32.totalorder %s54, 0
      %p364 = por %p362, %p363
      %s366 = sadd.s32 %s365, 1
      %p369 = scmp.eq.s32.totalorder %s48, 1
      %p370 = scmp.ne.s32.totalorder %s365, %s367
      %p371 = scmp.eq.s32.totalorder %s48, 0
      %p372 = por %p370, %p371
      %p373 = scmp.ne.s32.totalorder %s365, %s367
      %p374 = scmp.eq.s32.totalorder %s53, 1
      %p375 = por %p373, %p374
      %p376 = scmp.ne.s32.totalorder %s367, %s368
      %p377 = scmp.eq.s32.totalorder %s53, 0
      %p378 = por %p376, %p377
      %p379 = scmp.ne.s32.totalorder %s367, %s368
      %p380 = scmp.eq.s32.totalorder %s54, 1
      %p381 = por %p379, %p380
      %p383 = scmp.ne.s32.totalorder %s368, %s382
      %p384 = scmp.eq.s32.totalorder %s54, 0
      %p385 = por %p383, %p384
      %s387 = sadd.s32 %s386, 1
      %p390 = scmp.eq.s32.totalorder %s48, 1
      %p391 = scmp.ne.s32.totalorder %s386, %s388
      %p392 = scmp.eq.s32.totalorder %s48, 0
      %p393 = por %p391, %p392
      %p394 = scmp.ne.s32.totalorder %s386, %s388
      %p395 = scmp.eq.s32.totalorder %s53, 1
      %p396 = por %p394, %p395
      %p397 = scmp.ne.s32.totalorder %s388, %s389
      %p398 = scmp.eq.s32.totalorder %s53, 0
      %p399 = por %p397, %p398
      %p400 = scmp.ne.s32.totalorder %s388, %s389
      %p401 = scmp.eq.s32.totalorder %s54, 1
      %p402 = por %p400, %p401
      %p404 = scmp.ne.s32.totalorder %s389, %s403
      %p405 = scmp.eq.s32.totalorder %s54, 0
      %p406 = por %p404, %p405
      %s408 = sadd.s32 %s407, 1
      %p411 = scmp.eq.s32.totalorder %s48, 1
      %p412 = scmp.ne.s32.totalorder %s407, %s409
      %p413 = scmp.eq.s32.totalorder %s48, 0
      %p414 = por %p412, %p413
      %p415 = scmp.ne.s32.totalorder %s407, %s409
      %p416 = scmp.eq.s32.totalorder %s53, 1
      %p417 = por %p415, %p416
      %p418 = scmp.ne.s32.totalorder %s409, %s410
      %p419 = scmp.eq.s32.totalorder %s53, 0
      %p420 = por %p418, %p419
      %p421 = scmp.ne.s32.totalorder %s409, %s410
      %p422 = scmp.eq.s32.totalorder %s54, 1
      %p423 = por %p421, %p422
      %p425 = scmp.ne.s32.totalorder %s410, %s424
      %p426 = scmp.eq.s32.totalorder %s54, 0
      %p427 = por %p425, %p426
      %s429 = sadd.s32 %s428, 1
      %p432 = scmp.eq.s32.totalorder %s48, 1
      %p433 = scmp.ne.s32.totalorder %s428, %s430
      %p434 = scmp.eq.s32.totalorder %s48, 0
      %p435 = por %p433, %p434
      %p436 = scmp.ne.s32.totalorder %s428, %s430
      %p437 = scmp.eq.s32.totalorder %s53, 1
      %p438 = por %p436, %p437
      %p439 = scmp.ne.s32.totalorder %s430, %s431
      %p440 = scmp.eq.s32.totalorder %s53, 0
      %p441 = por %p439, %p440
      %p442 = scmp.ne.s32.totalorder %s430, %s431
      %p443 = scmp.eq.s32.totalorder %s54, 1
      %p444 = por %p442, %p443
      %p446 = scmp.ne.s32.totalorder %s431, %s445
      %p447 = scmp.eq.s32.totalorder %s54, 0
      %p448 = por %p446, %p447
      %s450 = sadd.s32 %s449, 1
      %p453 = scmp.eq.s32.totalorder %s48, 1
      %p454 = scmp.ne.s32.totalorder %s449, %s451
      %p455 = scmp.eq.s32.totalorder %s48, 0
      %p456 = por %p454, %p455
      %p457 = scmp.ne.s32.totalorder %s449, %s451
      %p458 = scmp.eq.s32.totalorder %s53, 1
      %p459 = por %p457, %p458
      %p460 = scmp.ne.s32.totalorder %s451, %s452
      %p461 = scmp.eq.s32.totalorder %s53, 0
      %p462 = por %p460, %p461
      %p463 = scmp.ne.s32.totalorder %s451, %s452
      %p464 = scmp.eq.s32.totalorder %s54, 1
      %p465 = por %p463, %p464
      %p467 = scmp.ne.s32.totalorder %s452, %s466
      %p468 = scmp.eq.s32.totalorder %s54, 0
      %p469 = por %p467, %p468
      %s471 = sadd.s32 %s470, 1
      %p474 = scmp.eq.s32.totalorder %s48, 1
      %p475 = scmp.ne.s32.totalorder %s470, %s472
      %p476 = scmp.eq.s32.totalorder %s48, 0
      %p477 = por %p475, %p476
      %p478 = scmp.ne.s32.totalorder %s470, %s472
      %p479 = scmp.eq.s32.totalorder %s53, 1
      %p480 = por %p478, %p479
      %p481 = scmp.ne.s32.totalorder %s472, %s473
      %p482 = scmp.eq.s32.totalorder %s53, 0
      %p483 = por %p481, %p482
      %p484 = scmp.ne.s32.totalorder %s472, %s473
      %p485 = scmp.eq.s32.totalorder %s54, 1
      %p486 = por %p484, %p485
      %p488 = scmp.ne.s32.totalorder %s473, %s487
      %p489 = scmp.eq.s32.totalorder %s54, 0
      %p490 = por %p488, %p489
      %s492 = sadd.s32 %s491, 1
      %p495 = scmp.eq.s32.totalorder %s48, 1
      %p496 = scmp.ne.s32.totalorder %s491, %s493
      %p497 = scmp.eq.s32.totalorder %s48, 0
      %p498 = por %p496, %p497
      %p499 = scmp.ne.s32.totalorder %s491, %s493
      %p500 = scmp.eq.s32.totalorder %s53, 1
      %p501 = por %p499, %p500
      %p502 = scmp.ne.s32.totalorder %s493, %s494
      %p503 = scmp.eq.s32.totalorder %s53, 0
      %p504 = por %p502, %p503
      %p505 = scmp.ne.s32.totalorder %s493, %s494
      %p506 = scmp.eq.s32.totalorder %s54, 1
      %p507 = por %p505, %p506
      %p509 = scmp.ne.s32.totalorder %s494, %s508
      %p510 = scmp.eq.s32.totalorder %s54, 0
      %p511 = por %p509, %p510
      %s513 = sadd.s32 %s512, 1
      %p516 = scmp.eq.s32.totalorder %s48, 1
      %p517 = scmp.ne.s32.totalorder %s512, %s514
      %p518 = scmp.eq.s32.totalorder %s48, 0
      %p519 = por %p517, %p518
      %p520 = scmp.ne.s32.totalorder %s512, %s514
      %p521 = scmp.eq.s32.totalorder %s53, 1
      %p522 = por %p520, %p521
      %p523 = scmp.ne.s32.totalorder %s514, %s515
      %p524 = scmp.eq.s32.totalorder %s53, 0
      %p525 = por %p523, %p524
      %p526 = scmp.ne.s32.totalorder %s514, %s515
      %p527 = scmp.eq.s32.totalorder %s54, 1
      %p528 = por %p526, %p527
      %p530 = scmp.ne.s32.totalorder %s515, %s529
      %p531 = scmp.eq.s32.totalorder %s54, 0
      %p532 = por %p530, %p531
      %s534 = sadd.s32 %s533, 1
      %p537 = scmp.eq.s32.totalorder %s48, 1
      %p538 = scmp.ne.s32.totalorder %s533, %s535
      %p539 = scmp.eq.s32.totalorder %s48, 0
      %p540 = por %p538, %p539
      %p541 = scmp.ne.s32.totalorder %s533, %s535
      %p542 = scmp.eq.s32.totalorder %s53, 1
      %p543 = por %p541, %p542
      %p544 = scmp.ne.s32.totalorder %s535, %s536
      %p545 = scmp.eq.s32.totalorder %s53, 0
      %p546 = por %p544, %p545
      %p547 = scmp.ne.s32.totalorder %s535, %s536
      %p548 = scmp.eq.s32.totalorder %s54, 1
      %p549 = por %p547, %p548
      %p551 = scmp.ne.s32.totalorder %s536, %s550
      %p552 = scmp.eq.s32.totalorder %s54, 0
      %p553 = por %p551, %p552
      %s555 = sadd.s32 %s554, 1
      %p558 = scmp.eq.s32.totalorder %s48, 1
      %p559 = scmp.ne.s32.totalorder %s554, %s556
      %p560 = scmp.eq.s32.totalorder %s48, 0
      %p561 = por %p559, %p560
      %p562 = scmp.ne.s32.totalorder %s554, %s556
      %p563 = scmp.eq.s32.totalorder %s53, 1
      %p564 = por %p562, %p563
      %p565 = scmp.ne.s32.totalorder %s556, %s557
      %p566 = scmp.eq.s32.totalorder %s53, 0
      %p567 = por %p565, %p566
      %p568 = scmp.ne.s32.totalorder %s556, %s557
      %p569 = scmp.eq.s32.totalorder %s54, 1
      %p570 = por %p568, %p569
      %p572 = scmp.ne.s32.totalorder %s557, %s571
      %p573 = scmp.eq.s32.totalorder %s54, 0
      %p574 = por %p572, %p573
      %s576 = sadd.s32 %s575, 1
      %p579 = scmp.eq.s32.totalorder %s48, 1
      %p580 = scmp.ne.s32.totalorder %s575, %s577
      %p581 = scmp.eq.s32.totalorder %s48, 0
      %p582 = por %p580, %p581
      %p583 = scmp.ne.s32.totalorder %s575, %s577
      %p584 = scmp.eq.s32.totalorder %s53, 1
      %p585 = por %p583, %p584
      %p586 = scmp.ne.s32.totalorder %s577, %s578
      %p587 = scmp.eq.s32.totalorder %s53, 0
      %p588 = por %p586, %p587
      %p589 = scmp.ne.s32.totalorder %s577, %s578
      %p590 = scmp.eq.s32.totalorder %s54, 1
      %p591 = por %p589, %p590
      %p593 = scmp.ne.s32.totalorder %s578, %s592
      %p594 = scmp.eq.s32.totalorder %s54, 0
      %p595 = por %p593, %p594
      %s597 = sadd.s32 %s596, 1
      %p600 = scmp.eq.s32.totalorder %s48, 1
      %p601 = scmp.ne.s32.totalorder %s596, %s598
      %p602 = scmp.eq.s32.totalorder %s48, 0
      %p603 = por %p601, %p602
      %p604 = scmp.ne.s32.totalorder %s596, %s598
      %p605 = scmp.eq.s32.totalorder %s53, 1
      %p606 = por %p604, %p605
      %p607 = scmp.ne.s32.totalorder %s598, %s599
      %p608 = scmp.eq.s32.totalorder %s53, 0
      %p609 = por %p607, %p608
      %p610 = scmp.ne.s32.totalorder %s598, %s599
      %p611 = scmp.eq.s32.totalorder %s54, 1
      %p612 = por %p610, %p611
      %p614 = scmp.ne.s32.totalorder %s599, %s613
      %p615 = scmp.eq.s32.totalorder %s54, 0
      %p616 = por %p614, %p615
      %s618 = sadd.s32 %s617, 1
      %p621 = scmp.eq.s32.totalorder %s48, 1
      %p622 = scmp.ne.s32.totalorder %s617, %s619
      %p623 = scmp.eq.s32.totalorder %s48, 0
      %p624 = por %p622, %p623
      %p625 = scmp.ne.s32.totalorder %s617, %s619
      %p626 = scmp.eq.s32.totalorder %s53, 1
      %p627 = por %p625, %p626
      %p628 = scmp.ne.s32.totalorder %s619, %s620
      %p629 = scmp.eq.s32.totalorder %s53, 0
      %p630 = por %p628, %p629
      %p631 = scmp.ne.s32.totalorder %s619, %s620
      %p632 = scmp.eq.s32.totalorder %s54, 1
      %p633 = por %p631, %p632
      %p635 = scmp.ne.s32.totalorder %s620, %s634
      %p636 = scmp.eq.s32.totalorder %s54, 0
      %p637 = por %p635, %p636
      %s638 = ssub.s32 %s48, %s55
      %p639 = scmp.eq.s32.totalorder %s638, 0
      %s641 = sadd.s32 %s640, 1
      %s642 = scalar_select %p639, %s640, %s641
      %p645 = pneg %p639
      %p646 = scmp.eq.s32.totalorder %s48, 1
      %p647 = por %p645, %p646
      %p648 = scmp.ne.s32.totalorder %s640, %s643
      %p649 = scmp.eq.s32.totalorder %s48, 0
      %p650 = por %p648, %p649
      %p651 = scmp.ne.s32.totalorder %s640, %s643
      %p652 = scmp.eq.s32.totalorder %s53, 1
      %p653 = por %p651, %p652
      %p654 = scmp.ne.s32.totalorder %s643, %s644
      %p655 = scmp.eq.s32.totalorder %s53, 0
      %p656 = por %p654, %p655
      %p657 = scmp.ne.s32.totalorder %s643, %s644
      %p658 = scmp.eq.s32.totalorder %s54, 1
      %p659 = por %p657, %p658
      %p661 = scmp.ne.s32.totalorder %s644, %s660
      %p662 = scmp.eq.s32.totalorder %s54, 0
      %p663 = por %p661, %p662
      %p664 = scmp.le.s32.totalorder 1, %s48
      %p665 = scmp.lt.s32.totalorder %s48, 3
      %p666 = pnand %p664, %p665
      %p667 = pneg %p666
      // Predicated region
      $region9: #{tpu_custom_call.1} parent=5 // pred_check
        _
      $region10: #{tpu_custom_call.1} parent=5 // pred_check_branch
        %669 = sbr.rel (%p666) target = $region12
      $region11: #{tpu_custom_call.1} parent=5 // pred_region
        %s670 = ssub.s32 %s48, 1
        // Predicated region
        $region13: #{tpu_custom_call.1} parent=11 // pred_check
          %p671 = pneg %p95
        $region14: #{tpu_custom_call.1} parent=11 // pred_check_branch
          %673 = sbr.rel (%p671) target = $region16
        $region15: #{tpu_custom_call.1} parent=11 // pred_region
          %s675 = ssub.s32 128, 128
          %676 = vsyncadd [#allocation6], %s675
          %s678 = sshll.u32 [#allocation5], 4
          %s679 = int_to_ptr.vmem [resolvable:$true] %s678
          %681 = dma.hbm_to_vmem [thread:$0]  %s1, 128, %s679, [#allocation6]
        $region16: #{tpu_custom_call.1} parent=11 // pred_fallthru
          _
        // Predicated region
        $region17: #{tpu_custom_call.1} parent=11 // pred_check
          %p682 = pneg %p142
        $region18: #{tpu_custom_call.1} parent=11 // pred_check_branch
          %684 = sbr.rel (%p682) target = $region20
        $region19: #{tpu_custom_call.1} parent=11 // pred_region
          %s686 = ssub.s32 16, 16
          %687 = vsyncadd [#allocation6], %s686
          %s689 = sshll.u32 [#allocation7], 4
          %s690 = int_to_ptr.vmem [resolvable:$true] %s689
          %692 = dma.hbm_to_vmem [thread:$0]  %s3, 16, %s690, [#allocation6]
        $region20: #{tpu_custom_call.1} parent=11 // pred_fallthru
          _
        // Predicated region
        $region21: #{tpu_custom_call.1} parent=11 // pred_check
          %p693 = pneg %p189
        $region22: #{tpu_custom_call.1} parent=11 // pred_check_branch
          %695 = sbr.rel (%p693) target = $region24
        $region23: #{tpu_custom_call.1} parent=11 // pred_region
          %s697 = ssub.s32 128, 128
          %698 = vsyncadd [#allocation9], %s697
          %s699 = sshll.u32 [#allocation10], 4
          %s700 = int_to_ptr.vmem [resolvable:$true] %s699
          %705 = dma.hbm_to_vmem [thread:$0]  %s5, 128, %s700, [#allocation9], 64, 64, 4
        $region24: #{tpu_custom_call.1} parent=11 // pred_fallthru
          _
        // Predicated region
        $region25: #{tpu_custom_call.1} parent=11 // pred_check
          %p706 = pneg %p210
        $region26: #{tpu_custom_call.1} parent=11 // pred_check_branch
          %708 = sbr.rel (%p706) target = $region28
        $region27: #{tpu_custom_call.1} parent=11 // pred_region
          %s710 = ssub.s32 16, 16
          %711 = vsyncadd [#allocation12], %s710
          %s713 = sshll.u32 [#allocation11], 4
          %s714 = int_to_ptr.vmem [resolvable:$true] %s713
          %716 = dma.hbm_to_vmem [thread:$0]  %s6, 16, %s714, [#allocation12]
        $region28: #{tpu_custom_call.1} parent=11 // pred_fallthru
          _
        // Predicated region
        $region29: #{tpu_custom_call.1} parent=11 // pred_check
          %p717 = pneg %p231
        $region30: #{tpu_custom_call.1} parent=11 // pred_check_branch
          %719 = sbr.rel (%p717) target = $region32
        $region31: #{tpu_custom_call.1} parent=11 // pred_region
          %s721 = ssub.s32 16, 16
          %722 = vsyncadd [#allocation12], %s721
          %s724 = sshll.u32 [#allocation13], 4
          %s725 = int_to_ptr.vmem [resolvable:$true] %s724
          %727 = dma.hbm_to_vmem [thread:$0]  %s7, 16, %s725, [#allocation12]
        $region32: #{tpu_custom_call.1} parent=11 // pred_fallthru
          _
        // Predicated region
        $region33: #{tpu_custom_call.1} parent=11 // pred_check
          %p728 = pneg %p252
        $region34: #{tpu_custom_call.1} parent=11 // pred_check_branch
          %730 = sbr.rel (%p728) target = $region36
        $region35: #{tpu_custom_call.1} parent=11 // pred_region
          %s732 = ssub.s32 16, 16
          %733 = vsyncadd [#allocation15], %s732
          %s735 = sshll.u32 [#allocation14], 4
          %s736 = int_to_ptr.vmem [resolvable:$true] %s735
          %738 = dma.hbm_to_vmem [thread:$0]  %s8, 16, %s736, [#allocation15]
        $region36: #{tpu_custom_call.1} parent=11 // pred_fallthru
          _
        // Predicated region
        $region37: #{tpu_custom_call.1} parent=11 // pred_check
          %p739 = pneg %p273
        $region38: #{tpu_custom_call.1} parent=11 // pred_check_branch
          %741 = sbr.rel (%p739) target = $region40
        $region39: #{tpu_custom_call.1} parent=11 // pred_region
          _
        $region40: #{tpu_custom_call.1} parent=11 // pred_fallthru
          _
        // Predicated region
        $region41: #{tpu_custom_call.1} parent=11 // pred_check
          %p742 = pneg %p294
        $region42: #{tpu_custom_call.1} parent=11 // pred_check_branch
          %744 = sbr.rel (%p742) target = $region44
        $region43: #{tpu_custom_call.1} parent=11 // pred_region
          %s746 = ssub.s32 16, 16
          %747 = vsyncadd [#allocation15], %s746
          %s749 = sshll.u32 [#allocation16], 4
          %s750 = int_to_ptr.vmem [resolvable:$true] %s749
          %752 = dma.hbm_to_vmem [thread:$0]  %s10, 16, %s750, [#allocation15]
        $region44: #{tpu_custom_call.1} parent=11 // pred_fallthru
          _
        // Predicated region
        $region45: #{tpu_custom_call.1} parent=11 // pred_check
          %p753 = pneg %p315
        $region46: #{tpu_custom_call.1} parent=11 // pred_check_branch
          %755 = sbr.rel (%p753) target = $region48
        $region47: #{tpu_custom_call.1} parent=11 // pred_region
          _
        $region48: #{tpu_custom_call.1} parent=11 // pred_fallthru
          _
        // Predicated region
        $region49: #{tpu_custom_call.1} parent=11 // pred_check
          %p756 = pneg %p336
        $region50: #{tpu_custom_call.1} parent=11 // pred_check_branch
          %758 = sbr.rel (%p756) target = $region52
        $region51: #{tpu_custom_call.1} parent=11 // pred_region
          %s760 = ssub.s32 16, 16
          %761 = vsyncadd [#allocation18], %s760
          %s763 = sshll.u32 [#allocation17], 4
          %s764 = int_to_ptr.vmem [resolvable:$true] %s763
          %766 = dma.hbm_to_vmem [thread:$0]  %s12, 16, %s764, [#allocation18]
        $region52: #{tpu_custom_call.1} parent=11 // pred_fallthru
          _
        // Predicated region
        $region53: #{tpu_custom_call.1} parent=11 // pred_check
          %p767 = pneg %p357
        $region54: #{tpu_custom_call.1} parent=11 // pred_check_branch
          %769 = sbr.rel (%p767) target = $region56
        $region55: #{tpu_custom_call.1} parent=11 // pred_region
          _
        $region56: #{tpu_custom_call.1} parent=11 // pred_fallthru
          _
        // Predicated region
        $region57: #{tpu_custom_call.1} parent=11 // pred_check
          %p770 = pneg %p378
        $region58: #{tpu_custom_call.1} parent=11 // pred_check_branch
          %772 = sbr.rel (%p770) target = $region60
        $region59: #{tpu_custom_call.1} parent=11 // pred_region
          %s774 = ssub.s32 16, 16
          %775 = vsyncadd [#allocation18], %s774
          %s777 = sshll.u32 [#allocation19], 4
          %s778 = int_to_ptr.vmem [resolvable:$true] %s777
          %780 = dma.hbm_to_vmem [thread:$0]  %s14, 16, %s778, [#allocation18]
        $region60: #{tpu_custom_call.1} parent=11 // pred_fallthru
          _
        // Predicated region
        $region61: #{tpu_custom_call.1} parent=11 // pred_check
          %p781 = pneg %p399
        $region62: #{tpu_custom_call.1} parent=11 // pred_check_branch
          %783 = sbr.rel (%p781) target = $region64
        $region63: #{tpu_custom_call.1} parent=11 // pred_region
          _
        $region64: #{tpu_custom_call.1} parent=11 // pred_fallthru
          _
        // Predicated region
        $region65: #{tpu_custom_call.1} parent=11 // pred_check
          %p784 = pneg %p420
        $region66: #{tpu_custom_call.1} parent=11 // pred_check_branch
          %786 = sbr.rel (%p784) target = $region68
        $region67: #{tpu_custom_call.1} parent=11 // pred_region
          %s788 = ssub.s32 16, 16
          %789 = vsyncadd [#allocation21], %s788
          %s791 = sshll.u32 [#allocation20], 4
          %s792 = int_to_ptr.vmem [resolvable:$true] %s791
          %794 = dma.hbm_to_vmem [thread:$0]  %s16, 16, %s792, [#allocation21]
        $region68: #{tpu_custom_call.1} parent=11 // pred_fallthru
          _
        // Predicated region
        $region69: #{tpu_custom_call.1} parent=11 // pred_check
          %p795 = pneg %p441
        $region70: #{tpu_custom_call.1} parent=11 // pred_check_branch
          %797 = sbr.rel (%p795) target = $region72
        $region71: #{tpu_custom_call.1} parent=11 // pred_region
          _
        $region72: #{tpu_custom_call.1} parent=11 // pred_fallthru
          _
        // Predicated region
        $region73: #{tpu_custom_call.1} parent=11 // pred_check
          %p798 = pneg %p462
        $region74: #{tpu_custom_call.1} parent=11 // pred_check_branch
          %800 = sbr.rel (%p798) target = $region76
        $region75: #{tpu_custom_call.1} parent=11 // pred_region
          %s802 = ssub.s32 16, 16
          %803 = vsyncadd [#allocation21], %s802
          %s805 = sshll.u32 [#allocation22], 4
          %s806 = int_to_ptr.vmem [resolvable:$true] %s805
          %808 = dma.hbm_to_vmem [thread:$0]  %s18, 16, %s806, [#allocation21]
        $region76: #{tpu_custom_call.1} parent=11 // pred_fallthru
          _
        // Predicated region
        $region77: #{tpu_custom_call.1} parent=11 // pred_check
          %p809 = pneg %p483
        $region78: #{tpu_custom_call.1} parent=11 // pred_check_branch
          %811 = sbr.rel (%p809) target = $region80
        $region79: #{tpu_custom_call.1} parent=11 // pred_region
          %s813 = ssub.s32 16, 16
          %814 = vsyncadd [#allocation24], %s813
          %s816 = sshll.u32 [#allocation23], 4
          %s817 = int_to_ptr.vmem [resolvable:$true] %s816
          %819 = dma.hbm_to_vmem [thread:$0]  %s19, 16, %s817, [#allocation24]
        $region80: #{tpu_custom_call.1} parent=11 // pred_fallthru
          _
        // Predicated region
        $region81: #{tpu_custom_call.1} parent=11 // pred_check
          %p820 = pneg %p504
        $region82: #{tpu_custom_call.1} parent=11 // pred_check_branch
          %822 = sbr.rel (%p820) target = $region84
        $region83: #{tpu_custom_call.1} parent=11 // pred_region
          %s824 = ssub.s32 16, 16
          %825 = vsyncadd [#allocation24], %s824
          %s827 = sshll.u32 [#allocation25], 4
          %s828 = int_to_ptr.vmem [resolvable:$true] %s827
          %830 = dma.hbm_to_vmem [thread:$0]  %s20, 16, %s828, [#allocation24]
        $region84: #{tpu_custom_call.1} parent=11 // pred_fallthru
          _
        // Predicated region
        $region85: #{tpu_custom_call.1} parent=11 // pred_check
          %p831 = pneg %p525
        $region86: #{tpu_custom_call.1} parent=11 // pred_check_branch
          %833 = sbr.rel (%p831) target = $region88
        $region87: #{tpu_custom_call.1} parent=11 // pred_region
          _
        $region88: #{tpu_custom_call.1} parent=11 // pred_fallthru
          _
        // Predicated region
        $region89: #{tpu_custom_call.1} parent=11 // pred_check
          %p834 = pneg %p546
        $region90: #{tpu_custom_call.1} parent=11 // pred_check_branch
          %836 = sbr.rel (%p834) target = $region92
        $region91: #{tpu_custom_call.1} parent=11 // pred_region
          _
        $region92: #{tpu_custom_call.1} parent=11 // pred_fallthru
          _
        // Predicated region
        $region93: #{tpu_custom_call.1} parent=11 // pred_check
          %p837 = pneg %p567
        $region94: #{tpu_custom_call.1} parent=11 // pred_check_branch
          %839 = sbr.rel (%p837) target = $region96
        $region95: #{tpu_custom_call.1} parent=11 // pred_region
          _
        $region96: #{tpu_custom_call.1} parent=11 // pred_fallthru
          _
        // Predicated region
        $region97: #{tpu_custom_call.1} parent=11 // pred_check
          %p840 = pneg %p588
        $region98: #{tpu_custom_call.1} parent=11 // pred_check_branch
          %842 = sbr.rel (%p840) target = $region100
        $region99: #{tpu_custom_call.1} parent=11 // pred_region
          _
        $region100: #{tpu_custom_call.1} parent=11 // pred_fallthru
          _
        // Predicated region
        $region101: #{tpu_custom_call.1} parent=11 // pred_check
          %p843 = pneg %p609
        $region102: #{tpu_custom_call.1} parent=11 // pred_check_branch
          %845 = sbr.rel (%p843) target = $region104
        $region103: #{tpu_custom_call.1} parent=11 // pred_region
          _
        $region104: #{tpu_custom_call.1} parent=11 // pred_fallthru
          _
        // Predicated region
        $region105: #{tpu_custom_call.1} parent=11 // pred_check
          %p846 = pneg %p630
        $region106: #{tpu_custom_call.1} parent=11 // pred_check_branch
          %848 = sbr.rel (%p846) target = $region108
        $region107: #{tpu_custom_call.1} parent=11 // pred_region
          _
        $region108: #{tpu_custom_call.1} parent=11 // pred_fallthru
          _
      $region12: #{tpu_custom_call.1} parent=5 // pred_fallthru
        _
      %p849 = scmp.lt.s32.totalorder %s48, 2
      // Predicated region
      $region109: #{tpu_custom_call.1} parent=5 // pred_check
        %p850 = pneg %p849
      $region110: #{tpu_custom_call.1} parent=5 // pred_check_branch
        %852 = sbr.rel (%p850) target = $region112
      $region111: #{tpu_custom_call.1} parent=5 // pred_region
        // Predicated region
        $region113: #{tpu_custom_call.1} parent=111 // pred_check
          %p853 = pneg %p68
        $region114: #{tpu_custom_call.1} parent=111 // pred_check_branch
          %855 = sbr.rel (%p853) target = $region116
        $region115: #{tpu_custom_call.1} parent=111 // pred_region
          %s856 = sand.u32 %s58, 1
          %s857 = scalar_lea.sflag [#allocation3], %s856
          %s858 = sand.u32 %s58, 1
          %s859 = smul.addr %s858, 4
          %s860 = scalar_lea.vmem [#allocation2], %s859
          %s862 = ssub.s32 64, 64
          %863 = vsyncadd %s857, %s862
          %s864 = smul.addr %s48, 64
          %s865 = scalar_lea.hbm %s0, %s864
          %s867 = sshll.u32 %s860, 4
          %s868 = int_to_ptr.vmem [resolvable:$true] %s867
          %870 = dma.hbm_to_vmem [thread:$0]  %s865, 64, %s868, %s857
        $region116: #{tpu_custom_call.1} parent=111 // pred_fallthru
          _
        // Predicated region
        $region117: #{tpu_custom_call.1} parent=111 // pred_check
          %p871 = pneg %p115
        $region118: #{tpu_custom_call.1} parent=111 // pred_check_branch
          %873 = sbr.rel (%p871) target = $region120
        $region119: #{tpu_custom_call.1} parent=111 // pred_region
          %p874 = scmp.lt.s32.totalorder %s48, 1
          %s875 = scalar_select %p874, %s48, 1
          %s876 = smul.addr %s875, 4
          %s877 = scalar_lea.vmem %s2, %s876
        $region120: #{tpu_custom_call.1} parent=111 // pred_fallthru
          _
        // Predicated region
        $region121: #{tpu_custom_call.1} parent=111 // pred_check
          %p878 = pneg %p162
        $region122: #{tpu_custom_call.1} parent=111 // pred_check_branch
          %880 = sbr.rel (%p878) target = $region124
        $region123: #{tpu_custom_call.1} parent=111 // pred_region
          %s881 = sand.u32 %s48, 1
          %s882 = scalar_lea.sflag [#allocation9], %s881
          %s883 = sand.u32 %s152, 1
          %s884 = scalar_lea.vmem [#allocation8], %s883
          %s886 = ssub.s32 16, 16
          %887 = vsyncadd %s882, %s886
          %s888 = smul.addr %s48, 16
          %s889 = scalar_lea.hbm %s4, %s888
          %s891 = sshll.u32 %s884, 4
          %s892 = int_to_ptr.vmem [resolvable:$true] %s891
          %894 = dma.hbm_to_vmem [thread:$0]  %s889, 16, %s892, %s882
        $region124: #{tpu_custom_call.1} parent=111 // pred_fallthru
          _
      $region112: #{tpu_custom_call.1} parent=5 // pred_fallthru
        _
      %p895 = scmp.le.s32.totalorder 1, %s48
      %p896 = scmp.lt.s32.totalorder %s48, 3
      %p897 = pnand %p895, %p896
      %p898 = pneg %p897
      // Predicated region
      $region125: #{tpu_custom_call.1} parent=5 // pred_check
        _
      $region126: #{tpu_custom_call.1} parent=5 // pred_check_branch
        %900 = sbr.rel (%p897) target = $region128
      $region127: #{tpu_custom_call.1} parent=5 // pred_region
        %s901 = ssub.s32 %s48, 1
        %s902 = sand.u32 %s61, 1
        %s903 = scalar_lea.sflag [#allocation3], %s902
        %s904 = sand.u32 %s61, 1
        %s905 = smul.addr %s904, 4
        %s906 = scalar_lea.vmem [#allocation2], %s905
        // Predicated region
        $region129: #{tpu_custom_call.1} parent=127 // pred_check
          %p907 = pneg %p74
        $region130: #{tpu_custom_call.1} parent=127 // pred_check_branch
          %909 = sbr.rel (%p907) target = $region132
        $region131: #{tpu_custom_call.1} parent=127 // pred_region
          %910 = dma.done %s903, 64
        $region132: #{tpu_custom_call.1} parent=127 // pred_fallthru
          _
        // Predicated region
        $region133: #{tpu_custom_call.1} parent=127 // pred_check
          %p911 = pneg %p95
        $region134: #{tpu_custom_call.1} parent=127 // pred_check_branch
          %913 = sbr.rel (%p911) target = $region136
        $region135: #{tpu_custom_call.1} parent=127 // pred_region
          %914 = dma.done [#allocation6], 128
        $region136: #{tpu_custom_call.1} parent=127 // pred_fallthru
          _
        // Predicated region
        $region137: #{tpu_custom_call.1} parent=127 // pred_check
          %p915 = pneg %p142
        $region138: #{tpu_custom_call.1} parent=127 // pred_check_branch
          %917 = sbr.rel (%p915) target = $region140
        $region139: #{tpu_custom_call.1} parent=127 // pred_region
          %918 = dma.done [#allocation6], 16
        $region140: #{tpu_custom_call.1} parent=127 // pred_fallthru
          _
        %s919 = sand.u32 %s53, 1
        %s920 = scalar_lea.sflag [#allocation9], %s919
        %s921 = sand.u32 %s155, 1
        %s922 = scalar_lea.vmem [#allocation8], %s921
        // Predicated region
        $region141: #{tpu_custom_call.1} parent=127 // pred_check
          %p923 = pneg %p168
        $region142: #{tpu_custom_call.1} parent=127 // pred_check_branch
          %925 = sbr.rel (%p923) target = $region144
        $region143: #{tpu_custom_call.1} parent=127 // pred_region
          %926 = dma.done %s920, 16
        $region144: #{tpu_custom_call.1} parent=127 // pred_fallthru
          _
        // Predicated region
        $region145: #{tpu_custom_call.1} parent=127 // pred_check
          %p927 = pneg %p189
        $region146: #{tpu_custom_call.1} parent=127 // pred_check_branch
          %929 = sbr.rel (%p927) target = $region148
        $region147: #{tpu_custom_call.1} parent=127 // pred_region
          %930 = dma.done [#allocation9], 128
        $region148: #{tpu_custom_call.1} parent=127 // pred_fallthru
          _
        // Predicated region
        $region149: #{tpu_custom_call.1} parent=127 // pred_check
          %p931 = pneg %p210
        $region150: #{tpu_custom_call.1} parent=127 // pred_check_branch
          %933 = sbr.rel (%p931) target = $region152
        $region151: #{tpu_custom_call.1} parent=127 // pred_region
          %934 = dma.done [#allocation12], 16
        $region152: #{tpu_custom_call.1} parent=127 // pred_fallthru
          _
        // Predicated region
        $region153: #{tpu_custom_call.1} parent=127 // pred_check
          %p935 = pneg %p231
        $region154: #{tpu_custom_call.1} parent=127 // pred_check_branch
          %937 = sbr.rel (%p935) target = $region156
        $region155: #{tpu_custom_call.1} parent=127 // pred_region
          %938 = dma.done [#allocation12], 16
        $region156: #{tpu_custom_call.1} parent=127 // pred_fallthru
          _
        // Predicated region
        $region157: #{tpu_custom_call.1} parent=127 // pred_check
          %p939 = pneg %p252
        $region158: #{tpu_custom_call.1} parent=127 // pred_check_branch
          %941 = sbr.rel (%p939) target = $region160
        $region159: #{tpu_custom_call.1} parent=127 // pred_region
          %942 = dma.done [#allocation15], 16
        $region160: #{tpu_custom_call.1} parent=127 // pred_fallthru
          _
        // Predicated region
        $region161: #{tpu_custom_call.1} parent=127 // pred_check
          %p943 = pneg %p294
        $region162: #{tpu_custom_call.1} parent=127 // pred_check_branch
          %945 = sbr.rel (%p943) target = $region164
        $region163: #{tpu_custom_call.1} parent=127 // pred_region
          %946 = dma.done [#allocation15], 16
        $region164: #{tpu_custom_call.1} parent=127 // pred_fallthru
          _
        // Predicated region
        $region165: #{tpu_custom_call.1} parent=127 // pred_check
          %p947 = pneg %p336
        $region166: #{tpu_custom_call.1} parent=127 // pred_check_branch
          %949 = sbr.rel (%p947) target = $region168
        $region167: #{tpu_custom_call.1} parent=127 // pred_region
          %950 = dma.done [#allocation18], 16
        $region168: #{tpu_custom_call.1} parent=127 // pred_fallthru
          _
        // Predicated region
        $region169: #{tpu_custom_call.1} parent=127 // pred_check
          %p951 = pneg %p378
        $region170: #{tpu_custom_call.1} parent=127 // pred_check_branch
          %953 = sbr.rel (%p951) target = $region172
        $region171: #{tpu_custom_call.1} parent=127 // pred_region
          %954 = dma.done [#allocation18], 16
        $region172: #{tpu_custom_call.1} parent=127 // pred_fallthru
          _
        // Predicated region
        $region173: #{tpu_custom_call.1} parent=127 // pred_check
          %p955 = pneg %p420
        $region174: #{tpu_custom_call.1} parent=127 // pred_check_branch
          %957 = sbr.rel (%p955) target = $region176
        $region175: #{tpu_custom_call.1} parent=127 // pred_region
          %958 = dma.done [#allocation21], 16
        $region176: #{tpu_custom_call.1} parent=127 // pred_fallthru
          _
        // Predicated region
        $region177: #{tpu_custom_call.1} parent=127 // pred_check
          %p959 = pneg %p462
        $region178: #{tpu_custom_call.1} parent=127 // pred_check_branch
          %961 = sbr.rel (%p959) target = $region180
        $region179: #{tpu_custom_call.1} parent=127 // pred_region
          %962 = dma.done [#allocation21], 16
        $region180: #{tpu_custom_call.1} parent=127 // pred_fallthru
          _
        // Predicated region
        $region181: #{tpu_custom_call.1} parent=127 // pred_check
          %p963 = pneg %p483
        $region182: #{tpu_custom_call.1} parent=127 // pred_check_branch
          %965 = sbr.rel (%p963) target = $region184
        $region183: #{tpu_custom_call.1} parent=127 // pred_region
          %966 = dma.done [#allocation24], 16
        $region184: #{tpu_custom_call.1} parent=127 // pred_fallthru
          _
        // Predicated region
        $region185: #{tpu_custom_call.1} parent=127 // pred_check
          %p967 = pneg %p504
        $region186: #{tpu_custom_call.1} parent=127 // pred_check_branch
          %969 = sbr.rel (%p967) target = $region188
        $region187: #{tpu_custom_call.1} parent=127 // pred_region
          %970 = dma.done [#allocation24], 16
        $region188: #{tpu_custom_call.1} parent=127 // pred_fallthru
          _
        %s971 = sand.u32 %s61, 1
        %s972 = scalar_lea.sflag [#allocation3], %s971
        %s973 = sand.u32 %s61, 1
        %s974 = smul.addr %s973, 4
        %s975 = scalar_lea.vmem [#allocation2], %s974
        %p976 = pneg %p74
        %p977 = pneg %p71
        %p978 = pneg %p95
        %p979 = pneg %p92
        %p980 = scmp.lt.s32.totalorder %s53, 1
        %s981 = scalar_select %p980, %s53, 1
        %s982 = smul.addr %s981, 4
        %s983 = scalar_lea.vmem %s2, %s982
        %p984 = pneg %p121
        %p985 = pneg %p118
        %p986 = pneg %p142
        %p987 = pneg %p139
        %s988 = sand.u32 %s53, 1
        %s989 = scalar_lea.sflag [#allocation9], %s988
        %s990 = sand.u32 %s155, 1
        %s991 = scalar_lea.vmem [#allocation8], %s990
        %p992 = pneg %p168
        %p993 = pneg %p165
        %p994 = pneg %p189
        %p995 = pneg %p186
        %p996 = pneg %p210
        %p997 = pneg %p207
        %p998 = pneg %p231
        %p999 = pneg %p228
        %p1000 = pneg %p252
        %p1001 = pneg %p249
        %p1002 = pneg %p273
        %p1003 = pneg %p270
        %p1004 = pneg %p294
        %p1005 = pneg %p291
        %p1006 = pneg %p315
        %p1007 = pneg %p312
        %p1008 = pneg %p336
        %p1009 = pneg %p333
        %p1010 = pneg %p357
        %p1011 = pneg %p354
        %p1012 = pneg %p378
        %p1013 = pneg %p375
        %p1014 = pneg %p399
        %p1015 = pneg %p396
        %p1016 = pneg %p420
        %p1017 = pneg %p417
        %p1018 = pneg %p441
        %p1019 = pneg %p438
        %p1020 = pneg %p462
        %p1021 = pneg %p459
        %p1022 = pneg %p483
        %p1023 = pneg %p480
        %p1024 = pneg %p504
        %p1025 = pneg %p501
        %p1026 = pneg %p525
        %p1027 = pneg %p522
        %p1028 = pneg %p546
        %p1029 = pneg %p543
        %p1030 = pneg %p567
        %p1031 = pneg %p564
        %p1032 = pneg %p588
        %p1033 = pneg %p585
        %p1034 = pneg %p609
        %p1035 = pneg %p606
        %p1036 = pneg %p630
        %p1037 = pneg %p627
        %p1038 = pneg %p656
        %p1039 = pneg %p653
        %s1040 = sand.u32 %s643, 1
        %s1041 = scalar_lea.sflag [#allocation4], %s1040
        %s1042 = sand.u32 %s643, 1
        %s1043 = smul.addr %s1042, 8
        %s1044 = scalar_lea.vmem [#allocation26], %s1043
        %p1045 = scmp.lt.s32.totalorder %s53, 1
        %s1046 = scalar_select %p1045, %s53, 1
        %s1047 = smul.addr %s1046, 4
        %s1048 = scalar_lea.vmem %s2, %s1047
        %v1050 = vld [vmem:[#allocation10] sm:$0xf]
        %v1051 = vld [vmem:[#allocation10 + $0x4] sm:$0xf]
        %v1052 = vld [vmem:[%s9] sm:$0xf]
        %v1053 = vld [vmem:[%s9 + $0x4] sm:$0xf]
        %v1054 = vld [vmem:[%s9 + $0x8] sm:$0xf]
        %v1055 = vld [vmem:[%s9 + $0xc] sm:$0xf]
        %v1056 = vld [vmem:[%s11] sm:$0xf]
        %v1057 = vld [vmem:[%s11 + $0x4] sm:$0xf]
        %v1058 = vld [vmem:[%s11 + $0x8] sm:$0xf]
        %v1059 = vld [vmem:[%s11 + $0xc] sm:$0xf]
        %v1060 = vld [vmem:[%s13] sm:$0xf]
        %v1061 = vld [vmem:[%s13 + $0x4] sm:$0xf]
        %v1062 = vld [vmem:[%s13 + $0x8] sm:$0xf]
        %v1063 = vld [vmem:[%s13 + $0xc] sm:$0xf]
        %v1064 = vld [vmem:[%s15] sm:$0xf]
        %v1065 = vld [vmem:[%s15 + $0x4] sm:$0xf]
        %v1066 = vld [vmem:[%s15 + $0x8] sm:$0xf]
        %v1067 = vld [vmem:[%s15 + $0xc] sm:$0xf]
        %v1068 = vld [vmem:[%s17] sm:$0xf]
        %v1069 = vld [vmem:[%s17 + $0x4] sm:$0xf]
        %v1070 = vld [vmem:[%s17 + $0x8] sm:$0xf]
        %v1071 = vld [vmem:[%s17 + $0xc] sm:$0xf]
        %v1072 = vld [vmem:[%s21] sm:$0xf]
        %v1073 = vld [vmem:[%s21 + $0x4] sm:$0xf]
        %v1074 = vld [vmem:[%s21 + $0x8] sm:$0xf]
        %v1075 = vld [vmem:[%s21 + $0xc] sm:$0xf]
        %v1076 = vld [vmem:[%s23] sm:$0xf]
        %v1077 = vld [vmem:[%s23 + $0x4] sm:$0xf]
        %v1078 = vld [vmem:[%s23 + $0x8] sm:$0xf]
        %v1079 = vld [vmem:[%s23 + $0xc] sm:$0xf]
        %v1080 = vld [vmem:[%s23 + $0x10] sm:$0xf]
        %v1081 = vld [vmem:[%s23 + $0x14] sm:$0xf]
        %v1082 = vld [vmem:[%s23 + $0x18] sm:$0xf]
        %v1083 = vld [vmem:[%s23 + $0x1c] sm:$0xf]
        %v1084 = vld [vmem:[#allocation16] sm:$0x1]
        %v1085 = vld [vmem:[#allocation17] sm:$0x1]
        %v1086 = vld [vmem:[#allocation19] sm:$0x1]
        %v1087 = vld [vmem:[#allocation20] sm:$0x1]
        %v1088 = vld [vmem:[#allocation22] sm:$0x1]
        %v1089 = vld [vmem:[%s22] sm:$0x1]
        %v1090 = vld [vmem:[%s24] sm:$0x1]
        %v1091 = vld [vmem:[#allocation13] sm:$0x1]
        %v1092 = vld [vmem:[#allocation14] sm:$0x1]
        %v1093 = vld [vmem:[#allocation23] sm:$0x1]
        %v1094 = vld [vmem:[#allocation25] sm:$0x1]
        %v1095 = vld [vmem:[%s25] sm:$0x1]
        %v1096 = vld [vmem:[%s26] sm:$0x1]
        %v1097 = vld [vmem:[%s906] sm:$0xf]
        %v1098 = vld [vmem:[#allocation11] sm:$0x1]
        %v1100 = vlaneseq
        %v1101 = vshrl.u32 %v1100, 7
        %v1102 = vsub.s32 0, %v1101
        %v1103 = vrot.slane %v1098, %v1102
        %v1107 = vunpack.c.l.b16 %v1050
        %v1108 = vunpack.c.l.b16 %v1051
        %v1109 = vpack.c.b16 %v1108, %v1107
        %vm1111 = vcmask 130048
        %v1113 = vsel %vm1111, %v1097, 0
        %1115 = vmatprep.subr.bf16.mxu0 0
        %1116 = vmatpush1.bf16.msra.mxu0 0
        %1117 = vmatprep.subr.bf16.mxu0 0
        %1118 = vmatpush1.bf16.msra.mxu0 0
        %1119 = vmatprep.subr.bf16.mxu0 0
        %1120 = vmatpush1.bf16.msra.mxu0 0
        %1121 = vmatprep.subr.bf16.mxu0 0
        %1122 = vmatpush1.bf16.msra.mxu0 0
        %1123 = vmatprep.subr.bf16.mxu0 0
        %1124 = vmatpush1.bf16.msra.mxu0 0
        %1125 = vmatprep.subr.bf16.mxu0 0
        %1126 = vmatpush1.bf16.msra.mxu0 0
        %1127 = vmatprep.subr.bf16.mxu0 0
        %1128 = vmatpush1.bf16.msra.mxu0 0
        %1129 = vmatprep.subr.bf16.mxu0 0
        %1130 = vmatpush1.bf16.msra.mxu0 %v1109
        %1131 = vmatprep.subr.bf16.mxu0 0
        %1132 = vmatpush2.bf16.msra.mxu0 0
        %1133 = vmatprep.subr.bf16.mxu0 0
        %1134 = vmatpush2.bf16.msra.mxu0 0
        %1135 = vmatprep.subr.bf16.mxu0 0
        %1136 = vmatpush2.bf16.msra.mxu0 0
        %1137 = vmatprep.subr.bf16.mxu0 0
        %1138 = vmatpush2.bf16.msra.mxu0 0
        %1139 = vmatprep.subr.bf16.mxu0 0
        %1140 = vmatpush2.bf16.msra.mxu0 0
        %1141 = vmatprep.subr.bf16.mxu0 0
        %1142 = vmatpush2.bf16.msra.mxu0 0
        %1143 = vmatprep.subr.bf16.mxu0 0
        %1144 = vmatpush2.bf16.msra.mxu0 0
        %1145 = vmatprep.subr.bf16.mxu0 0
        %1146 = vmatpush2.bf16.msra.mxu0 0
        %1147 = vmatprep.mubr.bf16.mxu0 0
        %1148 = vmatmul.mubr.bf16.gmra.mxu0 %v1113
        %v1149 = vpop.f32.mrf.mxu0
        %v1150 = vadd.f32 %v1103, %v1149
        %v1151 = vpop.f32.mrf.mxu0
        %v1152 = vpop.f32.mrf.mxu0
        %v1153 = vpop.f32.mrf.mxu0
        %1154 = vdwg.mxu0
        %v1155 = vld [vmem:[%s1048] sm:$0xf]
        %v1156 = vld [vmem:[#allocation7] sm:$0x1]
        %vm1157 = vcmask 15360
        %v1159 = vsel %vm1157, %v1155, 0
        %vm1161 = vcmask 1040384
        %v1163 = vsel %vm1161, %v1156, 0
        %1165 = vmatprep.subr.bf16.mxu0 0
        %1166 = vmatpush1.bf16.msra.mxu0 0
        %1167 = vmatprep.subr.bf16.mxu0 0
        %1168 = vmatpush1.bf16.msra.mxu0 0
        %1169 = vmatprep.subr.bf16.mxu0 0
        %1170 = vmatpush1.bf16.msra.mxu0 0
        %1171 = vmatprep.subr.bf16.mxu0 0
        %1172 = vmatpush1.bf16.msra.mxu0 0
        %1173 = vmatprep.subr.bf16.mxu0 0
        %1174 = vmatpush1.bf16.msra.mxu0 0
        %1175 = vmatprep.subr.bf16.mxu0 0
        %1176 = vmatpush1.bf16.msra.mxu0 0
        %1177 = vmatprep.subr.bf16.mxu0 0
        %1178 = vmatpush1.bf16.msra.mxu0 0
        %1179 = vmatprep.subr.bf16.mxu0 0
        %1180 = vmatpush1.bf16.msra.mxu0 %v1163
        %1181 = vmatprep.subr.bf16.mxu0 0
        %1182 = vmatpush2.bf16.msra.mxu0 0
        %1183 = vmatprep.subr.bf16.mxu0 0
        %1184 = vmatpush2.bf16.msra.mxu0 0
        %1185 = vmatprep.subr.bf16.mxu0 0
        %1186 = vmatpush2.bf16.msra.mxu0 0
        %1187 = vmatprep.subr.bf16.mxu0 0
        %1188 = vmatpush2.bf16.msra.mxu0 0
        %1189 = vmatprep.subr.bf16.mxu0 0
        %1190 = vmatpush2.bf16.msra.mxu0 0
        %1191 = vmatprep.subr.bf16.mxu0 0
        %1192 = vmatpush2.bf16.msra.mxu0 0
        %1193 = vmatprep.subr.bf16.mxu0 0
        %1194 = vmatpush2.bf16.msra.mxu0 0
        %1195 = vmatprep.subr.bf16.mxu0 0
        %1196 = vmatpush2.bf16.msra.mxu0 0
        %1197 = vmatprep.mubr.bf16.mxu0 0
        %1198 = vmatmul.mubr.bf16.gmra.mxu0 %v1159
        %v1199 = vpop.f32.mrf.mxu0
        %v1200 = vadd.f32 0.0, %v1199
        %v1201 = vpop.f32.mrf.mxu0
        %v1202 = vpop.f32.mrf.mxu0
        %v1203 = vpop.f32.mrf.mxu0
        %1204 = vdwg.mxu0
        %v1205 = vld [vmem:[#allocation5] sm:$0xff]
        %v1206 = vadd.f32 %v1150, %v1205
        %v1207 = vadd.f32 %v1206, %v1200
        %vm1208 = vcmask 261120
        %v1209 = vsel %vm1208, %v1207, 0.0
        %1210 = vadd.xlane.f32.xlu0 %v1209
        %v1211 = vpop.xlane.xlu0 %1210
        %v1212 = vrcp.pop 32.0
        %v1213 = vmul.f32 %v1211, %v1212
        %v1214 = vsub.f32 %v1207, %v1213
        %v1215 = vmul.f32 %v1214, %v1214
        %v1216 = vsel %vm1208, %v1215, 0.0
        %1217 = vadd.xlane.f32.xlu0 %v1216
        %v1218 = vpop.xlane.xlu0 %1217
        %v1219 = vmul.f32 %v1218, %v1212
        %v1220 = vadd.f32 %v1219, 1e-05
        %v1221 = vrsqrt.pop %v1220
        %v1222 = vmul.f32 %v1214, %v1221
        %v1224 = vlaneseq
        %v1225 = vshrl.u32 %v1224, 7
        %v1226 = vsub.s32 0, %v1225
        %v1227 = vrot.slane %v1091, %v1226
        %v1229 = vmul.f32 %v1222, %v1227
        %v1231 = vlaneseq
        %v1232 = vshrl.u32 %v1231, 7
        %v1233 = vsub.s32 0, %v1232
        %v1234 = vrot.slane %v1092, %v1233
        %v1236 = vadd.f32 %v1229, %v1234
        %v1237 = vld [vmem:[%s922] sm:$0x1]
        loop: start=0, step=1, limit=2
        $region189: #{tpu_custom_call.1} parent=127 // loop_pre_header
          _
        $region190: #{tpu_custom_call.1} parent=127 // loop_header
          %s1239 = sphi 0, %s1243
          %p1240 = scmp.ge.s32.totalorder %s1239, 2
          %v1244 = vphi %v1236, %v1856
        $region191: #{tpu_custom_call.1} parent=127 // loop_header_branch
          %1242 = sbr.rel (%p1240) target = $region195
        $region192: #{tpu_custom_call.1} parent=127 // loop_body
          %v1245 = vpack.c.bf16 %v1244, %v1244
          %v1247 = vlaneseq
          %v1248 = vshrl.u32 %v1247, 7
          %v1249 = vsub.s32 0, %v1248
          %v1250 = vrot.slane %v1084, %v1249
          %v1256 = vunpack.c.l.b16 %v1052
          %v1257 = vunpack.c.l.b16 %v1053
          %v1258 = vunpack.c.l.b16 %v1054
          %v1259 = vunpack.c.l.b16 %v1055
          %v1260 = vpack.c.b16 %v1257, %v1256
          %v1261 = vpack.c.b16 %v1259, %v1258
          %v1265 = vsel %vm1208, %v1245, 0
          %1267 = vmatprep.subr.bf16.mxu0 0
          %1268 = vmatpush1.bf16.msra.mxu0 0
          %1269 = vmatprep.subr.bf16.mxu0 0
          %1270 = vmatpush1.bf16.msra.mxu0 0
          %1271 = vmatprep.subr.bf16.mxu0 0
          %1272 = vmatpush1.bf16.msra.mxu0 0
          %1273 = vmatprep.subr.bf16.mxu0 0
          %1274 = vmatpush1.bf16.msra.mxu0 0
          %1275 = vmatprep.subr.bf16.mxu0 0
          %1276 = vmatpush1.bf16.msra.mxu0 0
          %1277 = vmatprep.subr.bf16.mxu0 0
          %1278 = vmatpush1.bf16.msra.mxu0 0
          %1279 = vmatprep.subr.bf16.mxu0 0
          %1280 = vmatpush1.bf16.msra.mxu0 %v1261
          %1281 = vmatprep.subr.bf16.mxu0 0
          %1282 = vmatpush1.bf16.msra.mxu0 %v1260
          %1283 = vmatprep.subr.bf16.mxu0 0
          %1284 = vmatpush2.bf16.msra.mxu0 0
          %1285 = vmatprep.subr.bf16.mxu0 0
          %1286 = vmatpush2.bf16.msra.mxu0 0
          %1287 = vmatprep.subr.bf16.mxu0 0
          %1288 = vmatpush2.bf16.msra.mxu0 0
          %1289 = vmatprep.subr.bf16.mxu0 0
          %1290 = vmatpush2.bf16.msra.mxu0 0
          %1291 = vmatprep.subr.bf16.mxu0 0
          %1292 = vmatpush2.bf16.msra.mxu0 0
          %1293 = vmatprep.subr.bf16.mxu0 0
          %1294 = vmatpush2.bf16.msra.mxu0 0
          %1295 = vmatprep.subr.bf16.mxu0 0
          %1296 = vmatpush2.bf16.msra.mxu0 0
          %1297 = vmatprep.subr.bf16.mxu0 0
          %1298 = vmatpush2.bf16.msra.mxu0 0
          %1299 = vmatprep.mubr.bf16.mxu0 0
          %1300 = vmatmul.mubr.bf16.gmra.mxu0 %v1265
          %v1301 = vpop.f32.mrf.mxu0
          %v1302 = vadd.f32 %v1250, %v1301
          %v1303 = vpop.f32.mrf.mxu0
          %v1304 = vpop.f32.mrf.mxu0
          %v1305 = vpop.f32.mrf.mxu0
          %1306 = vdwg.mxu0
          %v1307 = vmul.f32 %v1302, 0.17677669
          %v1308 = vpack.c.bf16 %v1307, %v1307
          %v1310 = vlaneseq
          %v1311 = vshrl.u32 %v1310, 7
          %v1312 = vsub.s32 0, %v1311
          %v1313 = vrot.slane %v1085, %v1312
          %v1319 = vunpack.c.l.b16 %v1056
          %v1320 = vunpack.c.l.b16 %v1057
          %v1321 = vunpack.c.l.b16 %v1058
          %v1322 = vunpack.c.l.b16 %v1059
          %v1323 = vpack.c.b16 %v1320, %v1319
          %v1324 = vpack.c.b16 %v1322, %v1321
          %1327 = vmatprep.subr.bf16.mxu0 0
          %1328 = vmatpush1.bf16.msra.mxu0 0
          %1329 = vmatprep.subr.bf16.mxu0 0
          %1330 = vmatpush1.bf16.msra.mxu0 0
          %1331 = vmatprep.subr.bf16.mxu0 0
          %1332 = vmatpush1.bf16.msra.mxu0 0
          %1333 = vmatprep.subr.bf16.mxu0 0
          %1334 = vmatpush1.bf16.msra.mxu0 0
          %1335 = vmatprep.subr.bf16.mxu0 0
          %1336 = vmatpush1.bf16.msra.mxu0 0
          %1337 = vmatprep.subr.bf16.mxu0 0
          %1338 = vmatpush1.bf16.msra.mxu0 0
          %1339 = vmatprep.subr.bf16.mxu0 0
          %1340 = vmatpush1.bf16.msra.mxu0 %v1324
          %1341 = vmatprep.subr.bf16.mxu0 0
          %1342 = vmatpush1.bf16.msra.mxu0 %v1323
          %1343 = vmatprep.subr.bf16.mxu0 0
          %1344 = vmatpush2.bf16.msra.mxu0 0
          %1345 = vmatprep.subr.bf16.mxu0 0
          %1346 = vmatpush2.bf16.msra.mxu0 0
          %1347 = vmatprep.subr.bf16.mxu0 0
          %1348 = vmatpush2.bf16.msra.mxu0 0
          %1349 = vmatprep.subr.bf16.mxu0 0
          %1350 = vmatpush2.bf16.msra.mxu0 0
          %1351 = vmatprep.subr.bf16.mxu0 0
          %1352 = vmatpush2.bf16.msra.mxu0 0
          %1353 = vmatprep.subr.bf16.mxu0 0
          %1354 = vmatpush2.bf16.msra.mxu0 0
          %1355 = vmatprep.subr.bf16.mxu0 0
          %1356 = vmatpush2.bf16.msra.mxu0 0
          %1357 = vmatprep.subr.bf16.mxu0 0
          %1358 = vmatpush2.bf16.msra.mxu0 0
          %1359 = vmatprep.mubr.bf16.mxu0 0
          %1360 = vmatmul.mubr.bf16.gmra.mxu0 %v1265
          %v1361 = vpop.f32.mrf.mxu0
          %v1362 = vadd.f32 %v1313, %v1361
          %v1363 = vpop.f32.mrf.mxu0
          %v1364 = vpop.f32.mrf.mxu0
          %v1365 = vpop.f32.mrf.mxu0
          %1366 = vdwg.mxu0
          %v1367 = vpack.c.bf16 %v1362, %v1362
          %v1369 = vlaneseq
          %v1370 = vshrl.u32 %v1369, 7
          %v1371 = vsub.s32 0, %v1370
          %v1372 = vrot.slane %v1086, %v1371
          %v1378 = vunpack.c.l.b16 %v1060
          %v1379 = vunpack.c.l.b16 %v1061
          %v1380 = vunpack.c.l.b16 %v1062
          %v1381 = vunpack.c.l.b16 %v1063
          %v1382 = vpack.c.b16 %v1379, %v1378
          %v1383 = vpack.c.b16 %v1381, %v1380
          %1386 = vmatprep.subr.bf16.mxu0 0
          %1387 = vmatpush1.bf16.msra.mxu0 0
          %1388 = vmatprep.subr.bf16.mxu0 0
          %1389 = vmatpush1.bf16.msra.mxu0 0
          %1390 = vmatprep.subr.bf16.mxu0 0
          %1391 = vmatpush1.bf16.msra.mxu0 0
          %1392 = vmatprep.subr.bf16.mxu0 0
          %1393 = vmatpush1.bf16.msra.mxu0 0
          %1394 = vmatprep.subr.bf16.mxu0 0
          %1395 = vmatpush1.bf16.msra.mxu0 0
          %1396 = vmatprep.subr.bf16.mxu0 0
          %1397 = vmatpush1.bf16.msra.mxu0 0
          %1398 = vmatprep.subr.bf16.mxu0 0
          %1399 = vmatpush1.bf16.msra.mxu0 %v1383
          %1400 = vmatprep.subr.bf16.mxu0 0
          %1401 = vmatpush1.bf16.msra.mxu0 %v1382
          %1402 = vmatprep.subr.bf16.mxu0 0
          %1403 = vmatpush2.bf16.msra.mxu0 0
          %1404 = vmatprep.subr.bf16.mxu0 0
          %1405 = vmatpush2.bf16.msra.mxu0 0
          %1406 = vmatprep.subr.bf16.mxu0 0
          %1407 = vmatpush2.bf16.msra.mxu0 0
          %1408 = vmatprep.subr.bf16.mxu0 0
          %1409 = vmatpush2.bf16.msra.mxu0 0
          %1410 = vmatprep.subr.bf16.mxu0 0
          %1411 = vmatpush2.bf16.msra.mxu0 0
          %1412 = vmatprep.subr.bf16.mxu0 0
          %1413 = vmatpush2.bf16.msra.mxu0 0
          %1414 = vmatprep.subr.bf16.mxu0 0
          %1415 = vmatpush2.bf16.msra.mxu0 0
          %1416 = vmatprep.subr.bf16.mxu0 0
          %1417 = vmatpush2.bf16.msra.mxu0 0
          %1418 = vmatprep.mubr.bf16.mxu0 0
          %1419 = vmatmul.mubr.bf16.gmra.mxu0 %v1265
          %v1420 = vpop.f32.mrf.mxu0
          %v1421 = vadd.f32 %v1372, %v1420
          %v1422 = vpop.f32.mrf.mxu0
          %v1423 = vpop.f32.mrf.mxu0
          %v1424 = vpop.f32.mrf.mxu0
          %1425 = vdwg.mxu0
          %v1426 = vpack.c.bf16 %v1421, %v1421
          %v1428 = vlaneseq
          %v1429 = vshrl.u32 %v1428, 7
          %v1430 = vsub.s32 0, %v1429
          %v1431 = vrot.slane %v1237, %v1430
          %v1434 = vsel %vm1208, %v1308, 0
          %v1437 = vsel %vm1208, %v1367, 0
          %1439 = vmatprep.subr.bf16.mxu0 0
          %1440 = vmatpush1.bf16.xpose.msra.mxu0 0
          %1441 = vmatprep.subr.bf16.mxu0 0
          %1442 = vmatpush1.bf16.xpose.msra.mxu0 0
          %1443 = vmatprep.subr.bf16.mxu0 0
          %1444 = vmatpush1.bf16.xpose.msra.mxu0 0
          %1445 = vmatprep.subr.bf16.mxu0 0
          %1446 = vmatpush1.bf16.xpose.msra.mxu0 0
          %1447 = vmatprep.subr.bf16.mxu0 0
          %1448 = vmatpush1.bf16.xpose.msra.mxu0 0
          %1449 = vmatprep.subr.bf16.mxu0 0
          %1450 = vmatpush1.bf16.xpose.msra.mxu0 0
          %1451 = vmatprep.subr.bf16.mxu0 0
          %1452 = vmatpush1.bf16.xpose.msra.mxu0 0
          %1453 = vmatprep.subr.bf16.mxu0 0
          %1454 = vmatpush1.bf16.xpose.msra.mxu0 %v1437
          %1455 = vmatprep.subr.bf16.mxu0 0
          %1456 = vmatpush2.bf16.xpose.msra.mxu0 0
          %1457 = vmatprep.subr.bf16.mxu0 0
          %1458 = vmatpush2.bf16.xpose.msra.mxu0 0
          %1459 = vmatprep.subr.bf16.mxu0 0
          %1460 = vmatpush2.bf16.xpose.msra.mxu0 0
          %1461 = vmatprep.subr.bf16.mxu0 0
          %1462 = vmatpush2.bf16.xpose.msra.mxu0 0
          %1463 = vmatprep.subr.bf16.mxu0 0
          %1464 = vmatpush2.bf16.xpose.msra.mxu0 0
          %1465 = vmatprep.subr.bf16.mxu0 0
          %1466 = vmatpush2.bf16.xpose.msra.mxu0 0
          %1467 = vmatprep.subr.bf16.mxu0 0
          %1468 = vmatpush2.bf16.xpose.msra.mxu0 0
          %1469 = vmatprep.subr.bf16.mxu0 0
          %1470 = vmatpush2.bf16.xpose.msra.mxu0 0
          %1471 = vmatprep.mubr.bf16.mxu0 0
          %1472 = vmatmul.mubr.bf16.gmra.mxu0 %v1434
          %v1473 = vpop.f32.mrf.mxu0
          %v1474 = vadd.f32 %v1431, %v1473
          %v1475 = vpop.f32.mrf.mxu0
          %v1476 = vpop.f32.mrf.mxu0
          %v1477 = vpop.f32.mrf.mxu0
          %1478 = vdwg.mxu0
          %vm1479 = vcmask 64512
          %v1480 = vsel %vm1479, %v1474, -inf
          %1481 = vmax.xlane.f32.xlu0 %v1480
          %v1482 = vpop.xlane.xlu0 %1481
          %v1483 = vsub.f32 %v1474, %v1482
          %v1484 = vmul.f32 %v1483, 1.442695
          %v1485 = vpow.pop %v1484
          %v1486 = vsel %vm1479, %v1485, 0.0
          %1487 = vadd.xlane.f32.xlu0 %v1486
          %v1488 = vpop.xlane.xlu0 %1487
          %v1489 = vpack.c.bf16 %v1485, %v1485
          %v1490 = vrcp.pop %v1488
          %v1492 = vsel %vm1479, %v1489, 0
          %vm1494 = vcmask 1043456
          %v1496 = vsel %vm1494, %v1426, 0
          %1498 = vmatprep.subr.bf16.mxu0 0
          %1499 = vmatpush1.bf16.msra.mxu0 0
          %1500 = vmatprep.subr.bf16.mxu0 0
          %1501 = vmatpush1.bf16.msra.mxu0 0
          %1502 = vmatprep.subr.bf16.mxu0 0
          %1503 = vmatpush1.bf16.msra.mxu0 0
          %1504 = vmatprep.subr.bf16.mxu0 0
          %1505 = vmatpush1.bf16.msra.mxu0 0
          %1506 = vmatprep.subr.bf16.mxu0 0
          %1507 = vmatpush1.bf16.msra.mxu0 0
          %1508 = vmatprep.subr.bf16.mxu0 0
          %1509 = vmatpush1.bf16.msra.mxu0 0
          %1510 = vmatprep.subr.bf16.mxu0 0
          %1511 = vmatpush1.bf16.msra.mxu0 0
          %1512 = vmatprep.subr.bf16.mxu0 0
          %1513 = vmatpush1.bf16.msra.mxu0 %v1496
          %1514 = vmatprep.subr.bf16.mxu0 0
          %1515 = vmatpush2.bf16.msra.mxu0 0
          %1516 = vmatprep.subr.bf16.mxu0 0
          %1517 = vmatpush2.bf16.msra.mxu0 0
          %1518 = vmatprep.subr.bf16.mxu0 0
          %1519 = vmatpush2.bf16.msra.mxu0 0
          %1520 = vmatprep.subr.bf16.mxu0 0
          %1521 = vmatpush2.bf16.msra.mxu0 0
          %1522 = vmatprep.subr.bf16.mxu0 0
          %1523 = vmatpush2.bf16.msra.mxu0 0
          %1524 = vmatprep.subr.bf16.mxu0 0
          %1525 = vmatpush2.bf16.msra.mxu0 0
          %1526 = vmatprep.subr.bf16.mxu0 0
          %1527 = vmatpush2.bf16.msra.mxu0 0
          %1528 = vmatprep.subr.bf16.mxu0 0
          %1529 = vmatpush2.bf16.msra.mxu0 0
          %1530 = vmatprep.mubr.bf16.mxu0 0
          %1531 = vmatmul.mubr.bf16.gmra.mxu0 %v1492
          %v1532 = vpop.f32.mrf.mxu0
          %v1533 = vadd.f32 0.0, %v1532
          %v1534 = vpop.f32.mrf.mxu0
          %v1535 = vpop.f32.mrf.mxu0
          %v1536 = vpop.f32.mrf.mxu0
          %1537 = vdwg.mxu0
          %v1538 = vmul.f32 %v1533, %v1490
          %v1539 = vpack.c.bf16 %v1538, %v1538
          %v1541 = vlaneseq
          %v1542 = vshrl.u32 %v1541, 7
          %v1543 = vsub.s32 0, %v1542
          %v1544 = vrot.slane %v1087, %v1543
          %v1550 = vunpack.c.l.b16 %v1064
          %v1551 = vunpack.c.l.b16 %v1065
          %v1552 = vunpack.c.l.b16 %v1066
          %v1553 = vunpack.c.l.b16 %v1067
          %v1554 = vpack.c.b16 %v1551, %v1550
          %v1555 = vpack.c.b16 %v1553, %v1552
          %v1559 = vsel %vm1208, %v1539, 0
          %1561 = vmatprep.subr.bf16.mxu0 0
          %1562 = vmatpush1.bf16.msra.mxu0 0
          %1563 = vmatprep.subr.bf16.mxu0 0
          %1564 = vmatpush1.bf16.msra.mxu0 0
          %1565 = vmatprep.subr.bf16.mxu0 0
          %1566 = vmatpush1.bf16.msra.mxu0 0
          %1567 = vmatprep.subr.bf16.mxu0 0
          %1568 = vmatpush1.bf16.msra.mxu0 0
          %1569 = vmatprep.subr.bf16.mxu0 0
          %1570 = vmatpush1.bf16.msra.mxu0 0
          %1571 = vmatprep.subr.bf16.mxu0 0
          %1572 = vmatpush1.bf16.msra.mxu0 0
          %1573 = vmatprep.subr.bf16.mxu0 0
          %1574 = vmatpush1.bf16.msra.mxu0 %v1555
          %1575 = vmatprep.subr.bf16.mxu0 0
          %1576 = vmatpush1.bf16.msra.mxu0 %v1554
          %1577 = vmatprep.subr.bf16.mxu0 0
          %1578 = vmatpush2.bf16.msra.mxu0 0
          %1579 = vmatprep.subr.bf16.mxu0 0
          %1580 = vmatpush2.bf16.msra.mxu0 0
          %1581 = vmatprep.subr.bf16.mxu0 0
          %1582 = vmatpush2.bf16.msra.mxu0 0
          %1583 = vmatprep.subr.bf16.mxu0 0
          %1584 = vmatpush2.bf16.msra.mxu0 0
          %1585 = vmatprep.subr.bf16.mxu0 0
          %1586 = vmatpush2.bf16.msra.mxu0 0
          %1587 = vmatprep.subr.bf16.mxu0 0
          %1588 = vmatpush2.bf16.msra.mxu0 0
          %1589 = vmatprep.subr.bf16.mxu0 0
          %1590 = vmatpush2.bf16.msra.mxu0 0
          %1591 = vmatprep.subr.bf16.mxu0 0
          %1592 = vmatpush2.bf16.msra.mxu0 0
          %1593 = vmatprep.mubr.bf16.mxu0 0
          %1594 = vmatmul.mubr.bf16.gmra.mxu0 %v1559
          %v1595 = vpop.f32.mrf.mxu0
          %v1596 = vadd.f32 %v1544, %v1595
          %v1597 = vpop.f32.mrf.mxu0
          %v1598 = vpop.f32.mrf.mxu0
          %v1599 = vpop.f32.mrf.mxu0
          %1600 = vdwg.mxu0
          %v1601 = vpack.c.bf16 %v1596, %v1596
          %v1603 = vlaneseq
          %v1604 = vshrl.u32 %v1603, 7
          %v1605 = vsub.s32 0, %v1604
          %v1606 = vrot.slane %v1088, %v1605
          %v1612 = vunpack.c.l.b16 %v1068
          %v1613 = vunpack.c.l.b16 %v1069
          %v1614 = vunpack.c.l.b16 %v1070
          %v1615 = vunpack.c.l.b16 %v1071
          %v1616 = vpack.c.b16 %v1613, %v1612
          %v1617 = vpack.c.b16 %v1615, %v1614
          %v1621 = vsel %vm1208, %v1601, 0
          %1623 = vmatprep.subr.bf16.mxu0 0
          %1624 = vmatpush1.bf16.msra.mxu0 0
          %1625 = vmatprep.subr.bf16.mxu0 0
          %1626 = vmatpush1.bf16.msra.mxu0 0
          %1627 = vmatprep.subr.bf16.mxu0 0
          %1628 = vmatpush1.bf16.msra.mxu0 0
          %1629 = vmatprep.subr.bf16.mxu0 0
          %1630 = vmatpush1.bf16.msra.mxu0 0
          %1631 = vmatprep.subr.bf16.mxu0 0
          %1632 = vmatpush1.bf16.msra.mxu0 0
          %1633 = vmatprep.subr.bf16.mxu0 0
          %1634 = vmatpush1.bf16.msra.mxu0 0
          %1635 = vmatprep.subr.bf16.mxu0 0
          %1636 = vmatpush1.bf16.msra.mxu0 %v1617
          %1637 = vmatprep.subr.bf16.mxu0 0
          %1638 = vmatpush1.bf16.msra.mxu0 %v1616
          %1639 = vmatprep.subr.bf16.mxu0 0
          %1640 = vmatpush2.bf16.msra.mxu0 0
          %1641 = vmatprep.subr.bf16.mxu0 0
          %1642 = vmatpush2.bf16.msra.mxu0 0
          %1643 = vmatprep.subr.bf16.mxu0 0
          %1644 = vmatpush2.bf16.msra.mxu0 0
          %1645 = vmatprep.subr.bf16.mxu0 0
          %1646 = vmatpush2.bf16.msra.mxu0 0
          %1647 = vmatprep.subr.bf16.mxu0 0
          %1648 = vmatpush2.bf16.msra.mxu0 0
          %1649 = vmatprep.subr.bf16.mxu0 0
          %1650 = vmatpush2.bf16.msra.mxu0 0
          %1651 = vmatprep.subr.bf16.mxu0 0
          %1652 = vmatpush2.bf16.msra.mxu0 0
          %1653 = vmatprep.subr.bf16.mxu0 0
          %1654 = vmatpush2.bf16.msra.mxu0 0
          %1655 = vmatprep.mubr.bf16.mxu0 0
          %1656 = vmatmul.mubr.bf16.gmra.mxu0 %v1621
          %v1657 = vpop.f32.mrf.mxu0
          %v1658 = vadd.f32 %v1606, %v1657
          %v1659 = vpop.f32.mrf.mxu0
          %v1660 = vpop.f32.mrf.mxu0
          %v1661 = vpop.f32.mrf.mxu0
          %1662 = vdwg.mxu0
          %v1663 = vadd.f32 %v1596, %v1658
          %v1664 = vsel %vm1208, %v1663, 0.0
          %1665 = vadd.xlane.f32.xlu0 %v1664
          %v1666 = vpop.xlane.xlu0 %1665
          %v1667 = vmul.f32 %v1666, %v1212
          %v1668 = vsub.f32 %v1663, %v1667
          %v1669 = vmul.f32 %v1668, %v1668
          %v1670 = vsel %vm1208, %v1669, 0.0
          %1671 = vadd.xlane.f32.xlu0 %v1670
          %v1672 = vpop.xlane.xlu0 %1671
          %v1673 = vmul.f32 %v1672, %v1212
          %v1674 = vadd.f32 %v1673, 1e-05
          %v1675 = vrsqrt.pop %v1674
          %v1676 = vmul.f32 %v1668, %v1675
          %v1678 = vlaneseq
          %v1679 = vshrl.u32 %v1678, 7
          %v1680 = vsub.s32 0, %v1679
          %v1681 = vrot.slane %v1093, %v1680
          %v1683 = vmul.f32 %v1676, %v1681
          %v1685 = vlaneseq
          %v1686 = vshrl.u32 %v1685, 7
          %v1687 = vsub.s32 0, %v1686
          %v1688 = vrot.slane %v1094, %v1687
          %v1690 = vadd.f32 %v1683, %v1688
          %v1691 = vpack.c.bf16 %v1690, %v1690
          %v1693 = vlaneseq
          %v1694 = vshrl.u32 %v1693, 7
          %v1695 = vsub.s32 0, %v1694
          %v1696 = vrot.slane %v1089, %v1695
          %v1702 = vunpack.c.l.b16 %v1072
          %v1703 = vunpack.c.l.b16 %v1073
          %v1704 = vunpack.c.l.b16 %v1074
          %v1705 = vunpack.c.l.b16 %v1075
          %v1706 = vpack.c.b16 %v1703, %v1702
          %v1707 = vpack.c.b16 %v1705, %v1704
          %v1711 = vsel %vm1208, %v1691, 0
          %1713 = vmatprep.subr.bf16.mxu0 0
          %1714 = vmatpush1.bf16.msra.mxu0 0
          %1715 = vmatprep.subr.bf16.mxu0 0
          %1716 = vmatpush1.bf16.msra.mxu0 0
          %1717 = vmatprep.subr.bf16.mxu0 0
          %1718 = vmatpush1.bf16.msra.mxu0 0
          %1719 = vmatprep.subr.bf16.mxu0 0
          %1720 = vmatpush1.bf16.msra.mxu0 0
          %1721 = vmatprep.subr.bf16.mxu0 0
          %1722 = vmatpush1.bf16.msra.mxu0 0
          %1723 = vmatprep.subr.bf16.mxu0 0
          %1724 = vmatpush1.bf16.msra.mxu0 0
          %1725 = vmatprep.subr.bf16.mxu0 0
          %1726 = vmatpush1.bf16.msra.mxu0 %v1707
          %1727 = vmatprep.subr.bf16.mxu0 0
          %1728 = vmatpush1.bf16.msra.mxu0 %v1706
          %1729 = vmatprep.subr.bf16.mxu0 0
          %1730 = vmatpush2.bf16.msra.mxu0 0
          %1731 = vmatprep.subr.bf16.mxu0 0
          %1732 = vmatpush2.bf16.msra.mxu0 0
          %1733 = vmatprep.subr.bf16.mxu0 0
          %1734 = vmatpush2.bf16.msra.mxu0 0
          %1735 = vmatprep.subr.bf16.mxu0 0
          %1736 = vmatpush2.bf16.msra.mxu0 0
          %1737 = vmatprep.subr.bf16.mxu0 0
          %1738 = vmatpush2.bf16.msra.mxu0 0
          %1739 = vmatprep.subr.bf16.mxu0 0
          %1740 = vmatpush2.bf16.msra.mxu0 0
          %1741 = vmatprep.subr.bf16.mxu0 0
          %1742 = vmatpush2.bf16.msra.mxu0 0
          %1743 = vmatprep.subr.bf16.mxu0 0
          %1744 = vmatpush2.bf16.msra.mxu0 0
          %1745 = vmatprep.mubr.bf16.mxu0 0
          %1746 = vmatmul.mubr.bf16.gmra.mxu0 %v1711
          %v1747 = vpop.f32.mrf.mxu0
          %v1748 = vadd.f32 %v1696, %v1747
          %v1749 = vpop.f32.mrf.mxu0
          %v1750 = vpop.f32.mrf.mxu0
          %v1751 = vpop.f32.mrf.mxu0
          %1752 = vdwg.mxu0
          %v1753 = vmax.f32 %v1748, 0.0
          %v1754 = vpack.c.bf16 %v1753, %v1753
          %v1756 = vlaneseq
          %v1757 = vshrl.u32 %v1756, 7
          %v1758 = vsub.s32 0, %v1757
          %v1759 = vrot.slane %v1090, %v1758
          %v1769 = vunpack.c.l.b16 %v1076
          %v1770 = vunpack.c.l.b16 %v1077
          %v1771 = vunpack.c.l.b16 %v1078
          %v1772 = vunpack.c.l.b16 %v1079
          %v1773 = vunpack.c.l.b16 %v1080
          %v1774 = vunpack.c.l.b16 %v1081
          %v1775 = vunpack.c.l.b16 %v1082
          %v1776 = vunpack.c.l.b16 %v1083
          %v1777 = vpack.c.b16 %v1770, %v1769
          %v1778 = vpack.c.b16 %v1772, %v1771
          %v1779 = vpack.c.b16 %v1774, %v1773
          %v1780 = vpack.c.b16 %v1776, %v1775
          %vm1785 = vcmask 523264
          %v1787 = vsel %vm1785, %v1754, 0
          %1789 = vmatprep.subr.bf16.mxu0 0
          %1790 = vmatpush1.bf16.msra.mxu0 0
          %1791 = vmatprep.subr.bf16.mxu0 0
          %1792 = vmatpush1.bf16.msra.mxu0 0
          %1793 = vmatprep.subr.bf16.mxu0 0
          %1794 = vmatpush1.bf16.msra.mxu0 0
          %1795 = vmatprep.subr.bf16.mxu0 0
          %1796 = vmatpush1.bf16.msra.mxu0 0
          %1797 = vmatprep.subr.bf16.mxu0 0
          %1798 = vmatpush1.bf16.msra.mxu0 %v1780
          %1799 = vmatprep.subr.bf16.mxu0 0
          %1800 = vmatpush1.bf16.msra.mxu0 %v1779
          %1801 = vmatprep.subr.bf16.mxu0 0
          %1802 = vmatpush1.bf16.msra.mxu0 %v1778
          %1803 = vmatprep.subr.bf16.mxu0 0
          %1804 = vmatpush1.bf16.msra.mxu0 %v1777
          %1805 = vmatprep.subr.bf16.mxu0 0
          %1806 = vmatpush2.bf16.msra.mxu0 0
          %1807 = vmatprep.subr.bf16.mxu0 0
          %1808 = vmatpush2.bf16.msra.mxu0 0
          %1809 = vmatprep.subr.bf16.mxu0 0
          %1810 = vmatpush2.bf16.msra.mxu0 0
          %1811 = vmatprep.subr.bf16.mxu0 0
          %1812 = vmatpush2.bf16.msra.mxu0 0
          %1813 = vmatprep.subr.bf16.mxu0 0
          %1814 = vmatpush2.bf16.msra.mxu0 0
          %1815 = vmatprep.subr.bf16.mxu0 0
          %1816 = vmatpush2.bf16.msra.mxu0 0
          %1817 = vmatprep.subr.bf16.mxu0 0
          %1818 = vmatpush2.bf16.msra.mxu0 0
          %1819 = vmatprep.subr.bf16.mxu0 0
          %1820 = vmatpush2.bf16.msra.mxu0 0
          %1821 = vmatprep.mubr.bf16.mxu0 0
          %1822 = vmatmul.mubr.bf16.gmra.mxu0 %v1787
          %v1823 = vpop.f32.mrf.mxu0
          %v1824 = vadd.f32 %v1759, %v1823
          %v1825 = vpop.f32.mrf.mxu0
          %v1826 = vpop.f32.mrf.mxu0
          %v1827 = vpop.f32.mrf.mxu0
          %1828 = vdwg.mxu0
          %v1829 = vadd.f32 %v1690, %v1824
          %v1830 = vsel %vm1208, %v1829, 0.0
          %1831 = vadd.xlane.f32.xlu0 %v1830
          %v1832 = vpop.xlane.xlu0 %1831
          %v1833 = vmul.f32 %v1832, %v1212
          %v1834 = vsub.f32 %v1829, %v1833
          %v1835 = vmul.f32 %v1834, %v1834
          %v1836 = vsel %vm1208, %v1835, 0.0
          %1837 = vadd.xlane.f32.xlu0 %v1836
          %v1838 = vpop.xlane.xlu0 %1837
          %v1839 = vmul.f32 %v1838, %v1212
          %v1840 = vadd.f32 %v1839, 1e-05
          %v1841 = vrsqrt.pop %v1840
          %v1842 = vmul.f32 %v1834, %v1841
          %v1844 = vlaneseq
          %v1845 = vshrl.u32 %v1844, 7
          %v1846 = vsub.s32 0, %v1845
          %v1847 = vrot.slane %v1095, %v1846
          %v1849 = vmul.f32 %v1842, %v1847
          %v1851 = vlaneseq
          %v1852 = vshrl.u32 %v1851, 7
          %v1853 = vsub.s32 0, %v1852
          %v1854 = vrot.slane %v1096, %v1853
          %v1856 = vadd.f32 %v1849, %v1854
        $region193: #{tpu_custom_call.1} parent=127 // loop_footer
          %s1243 = sadd.s32 1, %s1239
        $region194: #{tpu_custom_call.1} parent=127 // loop_footer_branch
          %1238 = sbr.rel target = $region190
        $region195: #{tpu_custom_call.1} parent=127 // loop_exit
          _
        %1857 = vst.msk [vmem:[%s1044] sm:$0xff] %vm1208, %v1244
        %s1858 = sand.u32 %s643, 1
        %s1859 = scalar_lea.sflag [#allocation4], %s1858
        %s1860 = sand.u32 %s643, 1
        %s1861 = smul.addr %s1860, 8
        %s1862 = scalar_lea.vmem [#allocation26], %s1861
        // Predicated region
        $region196: #{tpu_custom_call.1} parent=127 // pred_check
          %p1863 = pneg %p653
        $region197: #{tpu_custom_call.1} parent=127 // pred_check_branch
          %1865 = sbr.rel (%p1863) target = $region199
        $region198: #{tpu_custom_call.1} parent=127 // pred_region
          %s1867 = ssub.s32 128, 128
          %1868 = vsyncadd %s1859, %s1867
          %s1869 = smul.addr %s53, 128
          %s1870 = scalar_lea.hbm %s27, %s1869
          %s1872 = sshll.u32 %s1862, 4
          %s1873 = int_to_ptr.vmem [resolvable:$true] %s1872
          %1875 = dma.vmem_to_hbm [thread:$0]  %s1873, 128, %s1870, %s1859
        $region199: #{tpu_custom_call.1} parent=127 // pred_fallthru
          _
      $region128: #{tpu_custom_call.1} parent=5 // pred_fallthru
        _
      %p1876 = scmp.le.s32.totalorder 2, %s48
      // Predicated region
      $region200: #{tpu_custom_call.1} parent=5 // pred_check
        %p1877 = pneg %p1876
      $region201: #{tpu_custom_call.1} parent=5 // pred_check_branch
        %1879 = sbr.rel (%p1877) target = $region203
      $region202: #{tpu_custom_call.1} parent=5 // pred_region
        %s1880 = ssub.s32 %s48, 2
        // Predicated region
        $region204: #{tpu_custom_call.1} parent=202 // pred_check
          %p1881 = pneg %p659
        $region205: #{tpu_custom_call.1} parent=202 // pred_check_branch
          %1883 = sbr.rel (%p1881) target = $region207
        $region206: #{tpu_custom_call.1} parent=202 // pred_region
          %s1884 = sand.u32 %s644, 1
          %s1885 = scalar_lea.sflag [#allocation4], %s1884
          %s1886 = sand.u32 %s644, 1
          %s1887 = smul.addr %s1886, 8
          %s1888 = scalar_lea.vmem [#allocation26], %s1887
          %1889 = dma.done %s1885, 128
        $region207: #{tpu_custom_call.1} parent=202 // pred_fallthru
          _
      $region203: #{tpu_custom_call.1} parent=5 // pred_fallthru
        _
    $region6: #{tpu_custom_call.1} parent=1 // loop_footer
      %s52 = sadd.s32 1, %s48
    $region7: #{tpu_custom_call.1} parent=1 // loop_footer_branch
      %47 = sbr.rel target = $region3
    $region8: #{tpu_custom_call.1} parent=1 // loop_exit
      _
    %1890 = vsyncpa [#allocation3], 1
    %s1891 = scalar_lea.sflag [#allocation3], 1
    %1892 = vsyncpa %s1891, 1
    %1893 = vsyncpa [#allocation6], 1
    %1894 = vsyncpa [#allocation9], 1
    %s1895 = scalar_lea.sflag [#allocation9], 1
    %1896 = vsyncpa %s1895, 1
    %1897 = vsyncpa [#allocation12], 1
    %1898 = vsyncpa [#allocation15], 1
    %1899 = vsyncpa [#allocation18], 1
    %1900 = vsyncpa [#allocation21], 1
    %1901 = vsyncpa [#allocation24], 1
    %1902 = vsyncpa [#allocation4], 1
    %s1903 = scalar_lea.sflag [#allocation4], 1
    %1904 = vsyncpa %s1903, 1

// kernel: tpu_custom_call.1
$region0: #{tpu_custom_call.1}
  #allocation0 [shape = 'u32[]', space=smem, size = 0x4, offset = 0x4, fixed_abs, tag = 'smem constant byte address 0x4 - core index']
  #allocation1 [shape = 'u32[144,128]{1,0:T(1,128)}', space=vmem, size = 0x12000, scoped, tag = 'internal scratch']
  %s0 = inlined_call_operand.hbm [shape: bf16[2,8,16], index: 0, kind: input, shape index: {}]
  %s1 = inlined_call_operand.hbm [shape: f32[8,32], index: 1, kind: input, shape index: {}]
  %s2 = inlined_call_operand.vmem [shape: bf16[2,8,2], index: 2, kind: input, shape index: {}]
  %s3 = inlined_call_operand.hbm [shape: bf16[2,32], index: 3, kind: input, shape index: {}]
  %s4 = inlined_call_operand.hbm [shape: f32[2,1,8], index: 4, kind: input, shape index: {}]
  %s5 = inlined_call_operand.hbm [shape: bf16[16,32], index: 5, kind: input, shape index: {}]
  %s6 = inlined_call_operand.hbm [shape: f32[1,32], index: 6, kind: input, shape index: {}]
  %s7 = inlined_call_operand.hbm [shape: f32[1,32], index: 7, kind: input, shape index: {}]
  %s8 = inlined_call_operand.hbm [shape: f32[1,32], index: 8, kind: input, shape index: {}]
  %s9 = inlined_call_operand.vmem [shape: bf16[32,32], index: 9, kind: input, shape index: {}]
  %s10 = inlined_call_operand.hbm [shape: f32[1,32], index: 10, kind: input, shape index: {}]
  %s11 = inlined_call_operand.vmem [shape: bf16[32,32], index: 11, kind: input, shape index: {}]
  %s12 = inlined_call_operand.hbm [shape: f32[1,32], index: 12, kind: input, shape index: {}]
  %s13 = inlined_call_operand.vmem [shape: bf16[32,32], index: 13, kind: input, shape index: {}]
  %s14 = inlined_call_operand.hbm [shape: f32[1,32], index: 14, kind: input, shape index: {}]
  %s15 = inlined_call_operand.vmem [shape: bf16[32,32], index: 15, kind: input, shape index: {}]
  %s16 = inlined_call_operand.hbm [shape: f32[1,32], index: 16, kind: input, shape index: {}]
  %s17 = inlined_call_operand.vmem [shape: bf16[32,32], index: 17, kind: input, shape index: {}]
  %s18 = inlined_call_operand.hbm [shape: f32[1,32], index: 18, kind: input, shape index: {}]
  %s19 = inlined_call_operand.hbm [shape: f32[1,32], index: 19, kind: input, shape index: {}]
  %s20 = inlined_call_operand.hbm [shape: f32[1,32], index: 20, kind: input, shape index: {}]
  %s21 = inlined_call_operand.vmem [shape: bf16[32,64], index: 21, kind: input, shape index: {}]
  %s22 = inlined_call_operand.vmem [shape: f32[1,64], index: 22, kind: input, shape index: {}]
  %s23 = inlined_call_operand.vmem [shape: bf16[64,32], index: 23, kind: input, shape index: {}]
  %s24 = inlined_call_operand.vmem [shape: f32[1,32], index: 24, kind: input, shape index: {}]
  %s25 = inlined_call_operand.vmem [shape: f32[1,32], index: 25, kind: input, shape index: {}]
  %s26 = inlined_call_operand.vmem [shape: f32[1,32], index: 26, kind: input, shape index: {}]
  %s27 = inlined_call_operand.hbm [shape: f32[2,8,32], index: 27, kind: output, shape index: {}]
  %s28 = sld [smem:[#allocation0]]
  $region208: #{tpu_custom_call.1} parent=0
    _
  %s30 = ssub.s32 1, %s28
  %s31 = scalar_select 0, %s30, %s28
  $region1: #{tpu_custom_call.1} parent=0
    #allocation2 [shape = 'u8[4096]{0}', space=vmem, size = 0x1000, scoped, tag = 'input window, operand 0']
    #allocation3 [shape = 's32[2]{0}', space=sflag, size = 0x8, scoped, tag = 'scoped memory for tpu_custom_call.1']
    #allocation4 [shape = 's32[2]{0}', space=sflag, size = 0x8, scoped, tag = 'scoped memory for tpu_custom_call.1']
    #allocation5 [shape = 'u8[4096]{0}', space=vmem, size = 0x1000, scoped, tag = 'input window, operand 1, single buffered']
    #allocation6 [shape = 's32[1]{0}', space=sflag, size = 0x4, scoped, tag = 'scoped memory for tpu_custom_call.1']
    #allocation7 [shape = 'u8[512]{0}', space=vmem, size = 0x400, scoped, tag = 'input window, operand 3, single buffered']
    #allocation8 [shape = 'u8[1024]{0}', space=vmem, size = 0x400, scoped, tag = 'input window, operand 4']
    #allocation9 [shape = 's32[2]{0}', space=sflag, size = 0x8, scoped, tag = 'scoped memory for tpu_custom_call.1']
    #allocation10 [shape = 'u8[4096]{0}', space=vmem, size = 0x1000, scoped, tag = 'input window, operand 5, single buffered']
    #allocation11 [shape = 'u8[512]{0}', space=vmem, size = 0x400, scoped, tag = 'input window, operand 6, single buffered']
    #allocation12 [shape = 's32[1]{0}', space=sflag, size = 0x4, scoped, tag = 'scoped memory for tpu_custom_call.1']
    #allocation13 [shape = 'u8[512]{0}', space=vmem, size = 0x400, scoped, tag = 'input window, operand 7, single buffered']
    #allocation14 [shape = 'u8[512]{0}', space=vmem, size = 0x400, scoped, tag = 'input window, operand 8, single buffered']
    #allocation15 [shape = 's32[1]{0}', space=sflag, size = 0x4, scoped, tag = 'scoped memory for tpu_custom_call.1']
    #allocation16 [shape = 'u8[512]{0}', space=vmem, size = 0x400, scoped, tag = 'input window, operand 10, single buffered']
    #allocation17 [shape = 'u8[512]{0}', space=vmem, size = 0x400, scoped, tag = 'input window, operand 12, single buffered']
    #allocation18 [shape = 's32[1]{0}', space=sflag, size = 0x4, scoped, tag = 'scoped memory for tpu_custom_call.1']
    #allocation19 [shape = 'u8[512]{0}', space=vmem, size = 0x400, scoped, tag = 'input window, operand 14, single buffered']
    #allocation20 [shape = 'u8[512]{0}', space=vmem, size = 0x400, scoped, tag = 'input window, operand 16, single buffered']
    #allocation21 [shape = 's32[1]{0}', space=sflag, size = 0x4, scoped, tag = 'scoped memory for tpu_custom_call.1']
    #allocation22 [shape = 'u8[512]{0}', space=vmem, size = 0x400, scoped, tag = 'input window, operand 18, single buffered']
    #allocation23 [shape = 'u8[512]{0}', space=vmem, size = 0x400, scoped, tag = 'input window, operand 19, single buffered']
    #allocation24 [shape = 's32[1]{0}', space=sflag, size = 0x4, scoped, tag = 'scoped memory for tpu_custom_call.1']
    #allocation25 [shape = 'u8[512]{0}', space=vmem, size = 0x400, scoped, tag = 'input window, operand 20, single buffered']
    #allocation26 [shape = 'u8[8192]{0}', space=vmem, size = 0x2000, scoped, tag = 'output window, operand 0']
    %32 = vsyncpa [#allocation3], 0
    %s33 = scalar_lea.sflag [#allocation3], 1
    %34 = vsyncpa %s33, 0
    %35 = vsyncpa [#allocation6], 0
    %36 = vsyncpa [#allocation9], 0
    %s37 = scalar_lea.sflag [#allocation9], 1
    %38 = vsyncpa %s37, 0
    %39 = vsyncpa [#allocation12], 0
    %40 = vsyncpa [#allocation15], 0
    %41 = vsyncpa [#allocation18], 0
    %42 = vsyncpa [#allocation21], 0
    %43 = vsyncpa [#allocation24], 0
    %44 = vsyncpa [#allocation4], 0
    %s45 = scalar_lea.sflag [#allocation4], 1
    %46 = vsyncpa %s45, 0
    loop: start=0, step=1, limit=4
    $region2: #{tpu_custom_call.1} parent=1 // loop_pre_header
      _
    $region3: #{tpu_custom_call.1} parent=1 // loop_header
      %s48 = sphi 0, %s52
      %p49 = scmp.ge.s32.totalorder %s48, 4
      %s58 = sphi 0, %s60
      %s61 = sphi 0, %s58
      %s62 = sphi 0, %s61
      %s78 = sphi 0, %s62
      %s82 = sphi 0, %s82
      %s84 = sphi 0, %s82
      %s85 = sphi 0, %s84
      %s99 = sphi 0, %s85
      %s105 = sphi 0, %s107
      %s108 = sphi 0, %s105
      %s109 = sphi 0, %s108
      %s125 = sphi 0, %s109
      %s129 = sphi 0, %s129
      %s131 = sphi 0, %s129
      %s132 = sphi 0, %s131
      %s146 = sphi 0, %s132
      %s152 = sphi 0, %s154
      %s155 = sphi 0, %s152
      %s156 = sphi 0, %s155
      %s172 = sphi 0, %s156
      %s176 = sphi 0, %s176
      %s178 = sphi 0, %s176
      %s179 = sphi 0, %s178
      %s193 = sphi 0, %s179
      %s197 = sphi 0, %s197
      %s199 = sphi 0, %s197
      %s200 = sphi 0, %s199
      %s214 = sphi 0, %s200
      %s218 = sphi 0, %s218
      %s220 = sphi 0, %s218
      %s221 = sphi 0, %s220
      %s235 = sphi 0, %s221
      %s239 = sphi 0, %s239
      %s241 = sphi 0, %s239
      %s242 = sphi 0, %s241
      %s256 = sphi 0, %s242
      %s260 = sphi 0, %s260
      %s262 = sphi 0, %s260
      %s263 = sphi 0, %s262
      %s277 = sphi 0, %s263
      %s281 = sphi 0, %s281
      %s283 = sphi 0, %s281
      %s284 = sphi 0, %s283
      %s298 = sphi 0, %s284
      %s302 = sphi 0, %s302
      %s304 = sphi 0, %s302
      %s305 = sphi 0, %s304
      %s319 = sphi 0, %s305
      %s323 = sphi 0, %s323
      %s325 = sphi 0, %s323
      %s326 = sphi 0, %s325
      %s340 = sphi 0, %s326
      %s344 = sphi 0, %s344
      %s346 = sphi 0, %s344
      %s347 = sphi 0, %s346
      %s361 = sphi 0, %s347
      %s365 = sphi 0, %s365
      %s367 = sphi 0, %s365
      %s368 = sphi 0, %s367
      %s382 = sphi 0, %s368
      %s386 = sphi 0, %s386
      %s388 = sphi 0, %s386
      %s389 = sphi 0, %s388
      %s403 = sphi 0, %s389
      %s407 = sphi 0, %s407
      %s409 = sphi 0, %s407
      %s410 = sphi 0, %s409
      %s424 = sphi 0, %s410
      %s428 = sphi 0, %s428
      %s430 = sphi 0, %s428
      %s431 = sphi 0, %s430
      %s445 = sphi 0, %s431
      %s449 = sphi 0, %s449
      %s451 = sphi 0, %s449
      %s452 = sphi 0, %s451
      %s466 = sphi 0, %s452
      %s470 = sphi 0, %s470
      %s472 = sphi 0, %s470
      %s473 = sphi 0, %s472
      %s487 = sphi 0, %s473
      %s491 = sphi 0, %s491
      %s493 = sphi 0, %s491
      %s494 = sphi 0, %s493
      %s508 = sphi 0, %s494
      %s512 = sphi 0, %s512
      %s514 = sphi 0, %s512
      %s515 = sphi 0, %s514
      %s529 = sphi 0, %s515
      %s533 = sphi 0, %s533
      %s535 = sphi 0, %s533
      %s536 = sphi 0, %s535
      %s550 = sphi 0, %s536
      %s554 = sphi 0, %s554
      %s556 = sphi 0, %s554
      %s557 = sphi 0, %s556
      %s571 = sphi 0, %s557
      %s575 = sphi 0, %s575
      %s577 = sphi 0, %s575
      %s578 = sphi 0, %s577
      %s592 = sphi 0, %s578
      %s596 = sphi 0, %s596
      %s598 = sphi 0, %s596
      %s599 = sphi 0, %s598
      %s613 = sphi 0, %s599
      %s617 = sphi 0, %s617
      %s619 = sphi 0, %s617
      %s620 = sphi 0, %s619
      %s634 = sphi 0, %s620
      %s640 = sphi 0, %s642
      %s643 = sphi 0, %s640
      %s644 = sphi 0, %s643
      %s660 = sphi 0, %s644
    $region4: #{tpu_custom_call.1} parent=1 // loop_header_branch
      %51 = sbr.rel (%p49) target = $region8
    $region5: #{tpu_custom_call.1} parent=1 // loop_body
      %s53 = ssub.s32 %s48, 1
      %s54 = ssub.s32 %s48, 2
      %s55 = sadd.s32 %s48, 1
      %s56 = ssub.s32 %s48, %s55
      %p57 = scmp.eq.s32.totalorder %s56, 0
      %s59 = sadd.s32 %s58, 1
      %s60 = scalar_select %p57, %s58, %s59
      %p63 = pneg %p57
      %p64 = scmp.eq.s32.totalorder %s48, 1
      %p65 = por %p63, %p64
      %p66 = scmp.ne.s32.totalorder %s58, %s61
      %p67 = scmp.eq.s32.totalorder %s48, 0
      %p68 = por %p66, %p67
      %p69 = scmp.ne.s32.totalorder %s58, %s61
      %p70 = scmp.eq.s32.totalorder %s53, 1
      %p71 = por %p69, %p70
      %p72 = scmp.ne.s32.totalorder %s61, %s62
      %p73 = scmp.eq.s32.totalorder %s53, 0
      %p74 = por %p72, %p73
      %p75 = scmp.ne.s32.totalorder %s61, %s62
      %p76 = scmp.eq.s32.totalorder %s54, 1
      %p77 = por %p75, %p76
      %p79 = scmp.ne.s32.totalorder %s62, %s78
      %p80 = scmp.eq.s32.totalorder %s54, 0
      %p81 = por %p79, %p80
      %s83 = sadd.s32 %s82, 1
      %p86 = scmp.eq.s32.totalorder %s48, 1
      %p87 = scmp.ne.s32.totalorder %s82, %s84
      %p88 = scmp.eq.s32.totalorder %s48, 0
      %p89 = por %p87, %p88
      %p90 = scmp.ne.s32.totalorder %s82, %s84
      %p91 = scmp.eq.s32.totalorder %s53, 1
      %p92 = por %p90, %p91
      %p93 = scmp.ne.s32.totalorder %s84, %s85
      %p94 = scmp.eq.s32.totalorder %s53, 0
      %p95 = por %p93, %p94
      %p96 = scmp.ne.s32.totalorder %s84, %s85
      %p97 = scmp.eq.s32.totalorder %s54, 1
      %p98 = por %p96, %p97
      %p100 = scmp.ne.s32.totalorder %s85, %s99
      %p101 = scmp.eq.s32.totalorder %s54, 0
      %p102 = por %p100, %p101
      %s103 = ssub.s32 %s48, %s55
      %p104 = scmp.eq.s32.totalorder %s103, 0
      %s106 = sadd.s32 %s105, 1
      %s107 = scalar_select %p104, %s105, %s106
      %p110 = pneg %p104
      %p111 = scmp.eq.s32.totalorder %s48, 1
      %p112 = por %p110, %p111
      %p113 = scmp.ne.s32.totalorder %s105, %s108
      %p114 = scmp.eq.s32.totalorder %s48, 0
      %p115 = por %p113, %p114
      %p116 = scmp.ne.s32.totalorder %s105, %s108
      %p117 = scmp.eq.s32.totalorder %s53, 1
      %p118 = por %p116, %p117
      %p119 = scmp.ne.s32.totalorder %s108, %s109
      %p120 = scmp.eq.s32.totalorder %s53, 0
      %p121 = por %p119, %p120
      %p122 = scmp.ne.s32.totalorder %s108, %s109
      %p123 = scmp.eq.s32.totalorder %s54, 1
      %p124 = por %p122, %p123
      %p126 = scmp.ne.s32.totalorder %s109, %s125
      %p127 = scmp.eq.s32.totalorder %s54, 0
      %p128 = por %p126, %p127
      %s130 = sadd.s32 %s129, 1
      %p133 = scmp.eq.s32.totalorder %s48, 1
      %p134 = scmp.ne.s32.totalorder %s129, %s131
      %p135 = scmp.eq.s32.totalorder %s48, 0
      %p136 = por %p134, %p135
      %p137 = scmp.ne.s32.totalorder %s129, %s131
      %p138 = scmp.eq.s32.totalorder %s53, 1
      %p139 = por %p137, %p138
      %p140 = scmp.ne.s32.totalorder %s131, %s132
      %p141 = scmp.eq.s32.totalorder %s53, 0
      %p142 = por %p140, %p141
      %p143 = scmp.ne.s32.totalorder %s131, %s132
      %p144 = scmp.eq.s32.totalorder %s54, 1
      %p145 = por %p143, %p144
      %p147 = scmp.ne.s32.totalorder %s132, %s146
      %p148 = scmp.eq.s32.totalorder %s54, 0
      %p149 = por %p147, %p148
      %s150 = ssub.s32 %s48, %s55
      %p151 = scmp.eq.s32.totalorder %s150, 0
      %s153 = sadd.s32 %s152, 1
      %s154 = scalar_select %p151, %s152, %s153
      %p157 = pneg %p151
      %p158 = scmp.eq.s32.totalorder %s48, 1
      %p159 = por %p157, %p158
      %p160 = scmp.ne.s32.totalorder %s152, %s155
      %p161 = scmp.eq.s32.totalorder %s48, 0
      %p162 = por %p160, %p161
      %p163 = scmp.ne.s32.totalorder %s152, %s155
      %p164 = scmp.eq.s32.totalorder %s53, 1
      %p165 = por %p163, %p164
      %p166 = scmp.ne.s32.totalorder %s155, %s156
      %p167 = scmp.eq.s32.totalorder %s53, 0
      %p168 = por %p166, %p167
      %p169 = scmp.ne.s32.totalorder %s155, %s156
      %p170 = scmp.eq.s32.totalorder %s54, 1
      %p171 = por %p169, %p170
      %p173 = scmp.ne.s32.totalorder %s156, %s172
      %p174 = scmp.eq.s32.totalorder %s54, 0
      %p175 = por %p173, %p174
      %s177 = sadd.s32 %s176, 1
      %p180 = scmp.eq.s32.totalorder %s48, 1
      %p181 = scmp.ne.s32.totalorder %s176, %s178
      %p182 = scmp.eq.s32.totalorder %s48, 0
      %p183 = por %p181, %p182
      %p184 = scmp.ne.s32.totalorder %s176, %s178
      %p185 = scmp.eq.s32.totalorder %s53, 1
      %p186 = por %p184, %p185
      %p187 = scmp.ne.s32.totalorder %s178, %s179
      %p188 = scmp.eq.s32.totalorder %s53, 0
      %p189 = por %p187, %p188
      %p190 = scmp.ne.s32.totalorder %s178, %s179
      %p191 = scmp.eq.s32.totalorder %s54, 1
      %p192 = por %p190, %p191
      %p194 = scmp.ne.s32.totalorder %s179, %s193
      %p195 = scmp.eq.s32.totalorder %s54, 0
      %p196 = por %p194, %p195
      %s198 = sadd.s32 %s197, 1
      %p201 = scmp.eq.s32.totalorder %s48, 1
      %p202 = scmp.ne.s32.totalorder %s197, %s199
      %p203 = scmp.eq.s32.totalorder %s48, 0
      %p204 = por %p202, %p203
      %p205 = scmp.ne.s32.totalorder %s197, %s199
      %p206 = scmp.eq.s32.totalorder %s53, 1
      %p207 = por %p205, %p206
      %p208 = scmp.ne.s32.totalorder %s199, %s200
      %p209 = scmp.eq.s32.totalorder %s53, 0
      %p210 = por %p208, %p209
      %p211 = scmp.ne.s32.totalorder %s199, %s200
      %p212 = scmp.eq.s32.totalorder %s54, 1
      %p213 = por %p211, %p212
      %p215 = scmp.ne.s32.totalorder %s200, %s214
      %p216 = scmp.eq.s32.totalorder %s54, 0
      %p217 = por %p215, %p216
      %s219 = sadd.s32 %s218, 1
      %p222 = scmp.eq.s32.totalorder %s48, 1
      %p223 = scmp.ne.s32.totalorder %s218, %s220
      %p224 = scmp.eq.s32.totalorder %s48, 0
      %p225 = por %p223, %p224
      %p226 = scmp.ne.s32.totalorder %s218, %s220
      %p227 = scmp.eq.s32.totalorder %s53, 1
      %p228 = por %p226, %p227
      %p229 = scmp.ne.s32.totalorder %s220, %s221
      %p230 = scmp.eq.s32.totalorder %s53, 0
      %p231 = por %p229, %p230
      %p232 = scmp.ne.s32.totalorder %s220, %s221
      %p233 = scmp.eq.s32.totalorder %s54, 1
      %p234 = por %p232, %p233
      %p236 = scmp.ne.s32.totalorder %s221, %s235
      %p237 = scmp.eq.s32.totalorder %s54, 0
      %p238 = por %p236, %p237
      %s240 = sadd.s32 %s239, 1
      %p243 = scmp.eq.s32.totalorder %s48, 1
      %p244 = scmp.ne.s32.totalorder %s239, %s241
      %p245 = scmp.eq.s32.totalorder %s48, 0
      %p246 = por %p244, %p245
      %p247 = scmp.ne.s32.totalorder %s239, %s241
      %p248 = scmp.eq.s32.totalorder %s53, 1
      %p249 = por %p247, %p248
      %p250 = scmp.ne.s32.totalorder %s241, %s242
      %p251 = scmp.eq.s32.totalorder %s53, 0
      %p252 = por %p250, %p251
      %p253 = scmp.ne.s32.totalorder %s241, %s242
      %p254 = scmp.eq.s32.totalorder %s54, 1
      %p255 = por %p253, %p254
      %p257 = scmp.ne.s32.totalorder %s242, %s256
      %p258 = scmp.eq.s32.totalorder %s54, 0
      %p259 = por %p257, %p258
      %s261 = sadd.s32 %s260, 1
      %p264 = scmp.eq.s32.totalorder %s48, 1
      %p265 = scmp.ne.s32.totalorder %s260, %s262
      %p266 = scmp.eq.s32.totalorder %s48, 0
      %p267 = por %p265, %p266
      %p268 = scmp.ne.s32.totalorder %s260, %s262
      %p269 = scmp.eq.s32.totalorder %s53, 1
      %p270 = por %p268, %p269
      %p271 = scmp.ne.s32.totalorder %s262, %s263
      %p272 = scmp.eq.s32.totalorder %s53, 0
      %p273 = por %p271, %p272
      %p274 = scmp.ne.s32.totalorder %s262, %s263
      %p275 = scmp.eq.s32.totalorder %s54, 1
      %p276 = por %p274, %p275
      %p278 = scmp.ne.s32.totalorder %s263, %s277
      %p279 = scmp.eq.s32.totalorder %s54, 0
      %p280 = por %p278, %p279
      %s282 = sadd.s32 %s281, 1
      %p285 = scmp.eq.s32.totalorder %s48, 1
      %p286 = scmp.ne.s32.totalorder %s281, %s283
      %p287 = scmp.eq.s32.totalorder %s48, 0
      %p288 = por %p286, %p287
      %p289 = scmp.ne.s32.totalorder %s281, %s283
      %p290 = scmp.eq.s32.totalorder %s53, 1
      %p291 = por %p289, %p290
      %p292 = scmp.ne.s32.totalorder %s283, %s284
      %p293 = scmp.eq.s32.totalorder %s53, 0
      %p294 = por %p292, %p293
      %p295 = scmp.ne.s32.totalorder %s283, %s284
      %p296 = scmp.eq.s32.totalorder %s54, 1
      %p297 = por %p295, %p296
      %p299 = scmp.ne.s32.totalorder %s284, %s298
      %p300 = scmp.eq.s32.totalorder %s54, 0
      %p301 = por %p299, %p300
      %s303 = sadd.s32 %s302, 1
      %p306 = scmp.eq.s32.totalorder %s48, 1
      %p307 = scmp.ne.s32.totalorder %s302, %s304
      %p308 = scmp.eq.s32.totalorder %s48, 0
      %p309 = por %p307, %p308
      %p310 = scmp.ne.s32.totalorder %s302, %s304
      %p311 = scmp.eq.s32.totalorder %s53, 1
      %p312 = por %p310, %p311
      %p313 = scmp.ne.s32.totalorder %s304, %s305
      %p314 = scmp.eq.s32.totalorder %s53, 0
      %p315 = por %p313, %p314
      %p316 = scmp.ne.s32.totalorder %s304, %s305
      %p317 = scmp.eq.s32.totalorder %s54, 1
      %p318 = por %p316, %p317
      %p320 = scmp.ne.s32.totalorder %s305, %s319
      %p321 = scmp.eq.s32.totalorder %s54, 0
      %p322 = por %p320, %p321
      %s324 = sadd.s32 %s323, 1
      %p327 = scmp.eq.s32.totalorder %s48, 1
      %p328 = scmp.ne.s32.totalorder %s323, %s325
      %p329 = scmp.eq.s32.totalorder %s48, 0
      %p330 = por %p328, %p329
      %p331 = scmp.ne.s32.totalorder %s323, %s325
      %p332 = scmp.eq.s32.totalorder %s53, 1
      %p333 = por %p331, %p332
      %p334 = scmp.ne.s32.totalorder %s325, %s326
      %p335 = scmp.eq.s32.totalorder %s53, 0
      %p336 = por %p334, %p335
      %p337 = scmp.ne.s32.totalorder %s325, %s326
      %p338 = scmp.eq.s32.totalorder %s54, 1
      %p339 = por %p337, %p338
      %p341 = scmp.ne.s32.totalorder %s326, %s340
      %p342 = scmp.eq.s32.totalorder %s54, 0
      %p343 = por %p341, %p342
      %s345 = sadd.s32 %s344, 1
      %p348 = scmp.eq.s32.totalorder %s48, 1
      %p349 = scmp.ne.s32.totalorder %s344, %s346
      %p350 = scmp.eq.s32.totalorder %s48, 0
      %p351 = por %p349, %p350
      %p352 = scmp.ne.s32.totalorder %s344, %s346
      %p353 = scmp.eq.s32.totalorder %s53, 1
      %p354 = por %p352, %p353
      %p355 = scmp.ne.s32.totalorder %s346, %s347
      %p356 = scmp.eq.s32.totalorder %s53, 0
      %p357 = por %p355, %p356
      %p358 = scmp.ne.s32.totalorder %s346, %s347
      %p359 = scmp.eq.s32.totalorder %s54, 1
      %p360 = por %p358, %p359
      %p362 = scmp.ne.s32.totalorder %s347, %s361
      %p363 = scmp.eq.s32.totalorder %s54, 0
      %p364 = por %p362, %p363
      %s366 = sadd.s32 %s365, 1
      %p369 = scmp.eq.s32.totalorder %s48, 1
      %p370 = scmp.ne.s32.totalorder %s365, %s367
      %p371 = scmp.eq.s32.totalorder %s48, 0
      %p372 = por %p370, %p371
      %p373 = scmp.ne.s32.totalorder %s365, %s367
      %p374 = scmp.eq.s32.totalorder %s53, 1
      %p375 = por %p373, %p374
      %p376 = scmp.ne.s32.totalorder %s367, %s368
      %p377 = scmp.eq.s32.totalorder %s53, 0
      %p378 = por %p376, %p377
      %p379 = scmp.ne.s32.totalorder %s367, %s368
      %p380 = scmp.eq.s32.totalorder %s54, 1
      %p381 = por %p379, %p380
      %p383 = scmp.ne.s32.totalorder %s368, %s382
      %p384 = scmp.eq.s32.totalorder %s54, 0
      %p385 = por %p383, %p384
      %s387 = sadd.s32 %s386, 1
      %p390 = scmp.eq.s32.totalorder %s48, 1
      %p391 = scmp.ne.s32.totalorder %s386, %s388
      %p392 = scmp.eq.s32.totalorder %s48, 0
      %p393 = por %p391, %p392
      %p394 = scmp.ne.s32.totalorder %s386, %s388
      %p395 = scmp.eq.s32.totalorder %s53, 1
      %p396 = por %p394, %p395
      %p397 = scmp.ne.s32.totalorder %s388, %s389
      %p398 = scmp.eq.s32.totalorder %s53, 0
      %p399 = por %p397, %p398
      %p400 = scmp.ne.s32.totalorder %s388, %s389
      %p401 = scmp.eq.s32.totalorder %s54, 1
      %p402 = por %p400, %p401
      %p404 = scmp.ne.s32.totalorder %s389, %s403
      %p405 = scmp.eq.s32.totalorder %s54, 0
      %p406 = por %p404, %p405
      %s408 = sadd.s32 %s407, 1
      %p411 = scmp.eq.s32.totalorder %s48, 1
      %p412 = scmp.ne.s32.totalorder %s407, %s409
      %p413 = scmp.eq.s32.totalorder %s48, 0
      %p414 = por %p412, %p413
      %p415 = scmp.ne.s32.totalorder %s407, %s409
      %p416 = scmp.eq.s32.totalorder %s53, 1
      %p417 = por %p415, %p416
      %p418 = scmp.ne.s32.totalorder %s409, %s410
      %p419 = scmp.eq.s32.totalorder %s53, 0
      %p420 = por %p418, %p419
      %p421 = scmp.ne.s32.totalorder %s409, %s410
      %p422 = scmp.eq.s32.totalorder %s54, 1
      %p423 = por %p421, %p422
      %p425 = scmp.ne.s32.totalorder %s410, %s424
      %p426 = scmp.eq.s32.totalorder %s54, 0
      %p427 = por %p425, %p426
      %s429 = sadd.s32 %s428, 1
      %p432 = scmp.eq.s32.totalorder %s48, 1
      %p433 = scmp.ne.s32.totalorder %s428, %s430
      %p434 = scmp.eq.s32.totalorder %s48, 0
      %p435 = por %p433, %p434
      %p436 = scmp.ne.s32.totalorder %s428, %s430
      %p437 = scmp.eq.s32.totalorder %s53, 1
      %p438 = por %p436, %p437
      %p439 = scmp.ne.s32.totalorder %s430, %s431
      %p440 = scmp.eq.s32.totalorder %s53, 0
      %p441 = por %p439, %p440
      %p442 = scmp.ne.s32.totalorder %s430, %s431
      %p443 = scmp.eq.s32.totalorder %s54, 1
      %p444 = por %p442, %p443
      %p446 = scmp.ne.s32.totalorder %s431, %s445
      %p447 = scmp.eq.s32.totalorder %s54, 0
      %p448 = por %p446, %p447
      %s450 = sadd.s32 %s449, 1
      %p453 = scmp.eq.s32.totalorder %s48, 1
      %p454 = scmp.ne.s32.totalorder %s449, %s451
      %p455 = scmp.eq.s32.totalorder %s48, 0
      %p456 = por %p454, %p455
      %p457 = scmp.ne.s32.totalorder %s449, %s451
      %p458 = scmp.eq.s32.totalorder %s53, 1
      %p459 = por %p457, %p458
      %p460 = scmp.ne.s32.totalorder %s451, %s452
      %p461 = scmp.eq.s32.totalorder %s53, 0
      %p462 = por %p460, %p461
      %p463 = scmp.ne.s32.totalorder %s451, %s452
      %p464 = scmp.eq.s32.totalorder %s54, 1
      %p465 = por %p463, %p464
      %p467 = scmp.ne.s32.totalorder %s452, %s466
      %p468 = scmp.eq.s32.totalorder %s54, 0
      %p469 = por %p467, %p468
      %s471 = sadd.s32 %s470, 1
      %p474 = scmp.eq.s32.totalorder %s48, 1
      %p475 = scmp.ne.s32.totalorder %s470, %s472
      %p476 = scmp.eq.s32.totalorder %s48, 0
      %p477 = por %p475, %p476
      %p478 = scmp.ne.s32.totalorder %s470, %s472
      %p479 = scmp.eq.s32.totalorder %s53, 1
      %p480 = por %p478, %p479
      %p481 = scmp.ne.s32.totalorder %s472, %s473
      %p482 = scmp.eq.s32.totalorder %s53, 0
      %p483 = por %p481, %p482
      %p484 = scmp.ne.s32.totalorder %s472, %s473
      %p485 = scmp.eq.s32.totalorder %s54, 1
      %p486 = por %p484, %p485
      %p488 = scmp.ne.s32.totalorder %s473, %s487
      %p489 = scmp.eq.s32.totalorder %s54, 0
      %p490 = por %p488, %p489
      %s492 = sadd.s32 %s491, 1
      %p495 = scmp.eq.s32.totalorder %s48, 1
      %p496 = scmp.ne.s32.totalorder %s491, %s493
      %p497 = scmp.eq.s32.totalorder %s48, 0
      %p498 = por %p496, %p497
      %p499 = scmp.ne.s32.totalorder %s491, %s493
      %p500 = scmp.eq.s32.totalorder %s53, 1
      %p501 = por %p499, %p500
      %p502 = scmp.ne.s32.totalorder %s493, %s494
      %p503 = scmp.eq.s32.totalorder %s53, 0
      %p504 = por %p502, %p503
      %p505 = scmp.ne.s32.totalorder %s493, %s494
      %p506 = scmp.eq.s32.totalorder %s54, 1
      %p507 = por %p505, %p506
      %p509 = scmp.ne.s32.totalorder %s494, %s508
      %p510 = scmp.eq.s32.totalorder %s54, 0
      %p511 = por %p509, %p510
      %s513 = sadd.s32 %s512, 1
      %p516 = scmp.eq.s32.totalorder %s48, 1
      %p517 = scmp.ne.s32.totalorder %s512, %s514
      %p518 = scmp.eq.s32.totalorder %s48, 0
      %p519 = por %p517, %p518
      %p520 = scmp.ne.s32.totalorder %s512, %s514
      %p521 = scmp.eq.s32.totalorder %s53, 1
      %p522 = por %p520, %p521
      %p523 = scmp.ne.s32.totalorder %s514, %s515
      %p524 = scmp.eq.s32.totalorder %s53, 0
      %p525 = por %p523, %p524
      %p526 = scmp.ne.s32.totalorder %s514, %s515
      %p527 = scmp.eq.s32.totalorder %s54, 1
      %p528 = por %p526, %p527
      %p530 = scmp.ne.s32.totalorder %s515, %s529
      %p531 = scmp.eq.s32.totalorder %s54, 0
      %p532 = por %p530, %p531
      %s534 = sadd.s32 %s533, 1
      %p537 = scmp.eq.s32.totalorder %s48, 1
      %p538 = scmp.ne.s32.totalorder %s533, %s535
      %p539 = scmp.eq.s32.totalorder %s48, 0
      %p540 = por %p538, %p539
      %p541 = scmp.ne.s32.totalorder %s533, %s535
      %p542 = scmp.eq.s32.totalorder %s53, 1
      %p543 = por %p541, %p542
      %p544 = scmp.ne.s32.totalorder %s535, %s536
      %p545 = scmp.eq.s32.totalorder %s53, 0
      %p546 = por %p544, %p545
      %p547 = scmp.ne.s32.totalorder %s535, %s536
      %p548 = scmp.eq.s32.totalorder %s54, 1
      %p549 = por %p547, %p548
      %p551 = scmp.ne.s32.totalorder %s536, %s550
      %p552 = scmp.eq.s32.totalorder %s54, 0
      %p553 = por %p551, %p552
      %s555 = sadd.s32 %s554, 1
      %p558 = scmp.eq.s32.totalorder %s48, 1
      %p559 = scmp.ne.s32.totalorder %s554, %s556
      %p560 = scmp.eq.s32.totalorder %s48, 0
      %p561 = por %p559, %p560
      %p562 = scmp.ne.s32.totalorder %s554, %s556
      %p563 = scmp.eq.s32.totalorder %s53, 1
      %p564 = por %p562, %p563
      %p565 = scmp.ne.s32.totalorder %s556, %s557
      %p566 = scmp.eq.s32.totalorder %s53, 0
      %p567 = por %p565, %p566
      %p568 = scmp.ne.s32.totalorder %s556, %s557
      %p569 = scmp.eq.s32.totalorder %s54, 1
      %p570 = por %p568, %p569
      %p572 = scmp.ne.s32.totalorder %s557, %s571
      %p573 = scmp.eq.s32.totalorder %s54, 0
      %p574 = por %p572, %p573
      %s576 = sadd.s32 %s575, 1
      %p579 = scmp.eq.s32.totalorder %s48, 1
      %p580 = scmp.ne.s32.totalorder %s575, %s577
      %p581 = scmp.eq.s32.totalorder %s48, 0
      %p582 = por %p580, %p581
      %p583 = scmp.ne.s32.totalorder %s575, %s577
      %p584 = scmp.eq.s32.totalorder %s53, 1
      %p585 = por %p583, %p584
      %p586 = scmp.ne.s32.totalorder %s577, %s578
      %p587 = scmp.eq.s32.totalorder %s53, 0
      %p588 = por %p586, %p587
      %p589 = scmp.ne.s32.totalorder %s577, %s578
      %p590 = scmp.eq.s32.totalorder %s54, 1
      %p591 = por %p589, %p590
      %p593 = scmp.ne.s32.totalorder %s578, %s592
      %p594 = scmp.eq.s32.totalorder %s54, 0
      %p595 = por %p593, %p594
      %s597 = sadd.s32 %s596, 1
      %p600 = scmp.eq.s32.totalorder %s48, 1
      %p601 = scmp.ne.s32.totalorder %s596, %s598
      %p602 = scmp.eq.s32.totalorder %s48, 0
      %p603 = por %p601, %p602
      %p604 = scmp.ne.s32.totalorder %s596, %s598
      %p605 = scmp.eq.s32.totalorder %s53, 1
      %p606 = por %p604, %p605
      %p607 = scmp.ne.s32.totalorder %s598, %s599
      %p608 = scmp.eq.s32.totalorder %s53, 0
      %p609 = por %p607, %p608
      %p610 = scmp.ne.s32.totalorder %s598, %s599
      %p611 = scmp.eq.s32.totalorder %s54, 1
      %p612 = por %p610, %p611
      %p614 = scmp.ne.s32.totalorder %s599, %s613
      %p615 = scmp.eq.s32.totalorder %s54, 0
      %p616 = por %p614, %p615
      %s618 = sadd.s32 %s617, 1
      %p621 = scmp.eq.s32.totalorder %s48, 1
      %p622 = scmp.ne.s32.totalorder %s617, %s619
      %p623 = scmp.eq.s32.totalorder %s48, 0
      %p624 = por %p622, %p623
      %p625 = scmp.ne.s32.totalorder %s617, %s619
      %p626 = scmp.eq.s32.totalorder %s53, 1
      %p627 = por %p625, %p626
      %p628 = scmp.ne.s32.totalorder %s619, %s620
      %p629 = scmp.eq.s32.totalorder %s53, 0
      %p630 = por %p628, %p629
      %p631 = scmp.ne.s32.totalorder %s619, %s620
      %p632 = scmp.eq.s32.totalorder %s54, 1
      %p633 = por %p631, %p632
      %p635 = scmp.ne.s32.totalorder %s620, %s634
      %p636 = scmp.eq.s32.totalorder %s54, 0
      %p637 = por %p635, %p636
      %s638 = ssub.s32 %s48, %s55
      %p639 = scmp.eq.s32.totalorder %s638, 0
      %s641 = sadd.s32 %s640, 1
      %s642 = scalar_select %p639, %s640, %s641
      %p645 = pneg %p639
      %p646 = scmp.eq.s32.totalorder %s48, 1
      %p647 = por %p645, %p646
      %p648 = scmp.ne.s32.totalorder %s640, %s643
      %p649 = scmp.eq.s32.totalorder %s48, 0
      %p650 = por %p648, %p649
      %p651 = scmp.ne.s32.totalorder %s640, %s643
      %p652 = scmp.eq.s32.totalorder %s53, 1
      %p653 = por %p651, %p652
      %p654 = scmp.ne.s32.totalorder %s643, %s644
      %p655 = scmp.eq.s32.totalorder %s53, 0
      %p656 = por %p654, %p655
      %p657 = scmp.ne.s32.totalorder %s643, %s644
      %p658 = scmp.eq.s32.totalorder %s54, 1
      %p659 = por %p657, %p658
      %p661 = scmp.ne.s32.totalorder %s644, %s660
      %p662 = scmp.eq.s32.totalorder %s54, 0
      %p663 = por %p661, %p662
      %p664 = scmp.le.s32.totalorder 1, %s48
      %p665 = scmp.lt.s32.totalorder %s48, 3
      %p666 = pnand %p664, %p665
      %p667 = pneg %p666
      // Predicated region
      $region9: #{tpu_custom_call.1} parent=5 // pred_check
        _
      $region10: #{tpu_custom_call.1} parent=5 // pred_check_branch
        %669 = sbr.rel (%p666) target = $region12
      $region11: #{tpu_custom_call.1} parent=5 // pred_region
        %s670 = ssub.s32 %s48, 1
        // Predicated region
        $region13: #{tpu_custom_call.1} parent=11 // pred_check
          %p671 = pneg %p95
        $region14: #{tpu_custom_call.1} parent=11 // pred_check_branch
          %673 = sbr.rel (%p671) target = $region16
        $region15: #{tpu_custom_call.1} parent=11 // pred_region
          %s675 = ssub.s32 128, 128
          %676 = vsyncadd [#allocation6], %s675
          %s678 = sshll.u32 [#allocation5], 4
          %s679 = int_to_ptr.vmem [resolvable:$true] %s678
          %681 = dma.hbm_to_vmem [thread:$0]  %s1, 128, %s679, [#allocation6]
        $region16: #{tpu_custom_call.1} parent=11 // pred_fallthru
          _
        // Predicated region
        $region17: #{tpu_custom_call.1} parent=11 // pred_check
          %p682 = pneg %p142
        $region18: #{tpu_custom_call.1} parent=11 // pred_check_branch
          %684 = sbr.rel (%p682) target = $region20
        $region19: #{tpu_custom_call.1} parent=11 // pred_region
          %s686 = ssub.s32 16, 16
          %687 = vsyncadd [#allocation6], %s686
          %s689 = sshll.u32 [#allocation7], 4
          %s690 = int_to_ptr.vmem [resolvable:$true] %s689
          %692 = dma.hbm_to_vmem [thread:$0]  %s3, 16, %s690, [#allocation6]
        $region20: #{tpu_custom_call.1} parent=11 // pred_fallthru
          _
        // Predicated region
        $region21: #{tpu_custom_call.1} parent=11 // pred_check
          %p693 = pneg %p189
        $region22: #{tpu_custom_call.1} parent=11 // pred_check_branch
          %695 = sbr.rel (%p693) target = $region24
        $region23: #{tpu_custom_call.1} parent=11 // pred_region
          %s697 = ssub.s32 128, 128
          %698 = vsyncadd [#allocation9], %s697
          %s699 = sshll.u32 [#allocation10], 4
          %s700 = int_to_ptr.vmem [resolvable:$true] %s699
          %705 = dma.hbm_to_vmem [thread:$0]  %s5, 128, %s700, [#allocation9], 64, 64, 4
        $region24: #{tpu_custom_call.1} parent=11 // pred_fallthru
          _
        // Predicated region
        $region25: #{tpu_custom_call.1} parent=11 // pred_check
          %p706 = pneg %p210
        $region26: #{tpu_custom_call.1} parent=11 // pred_check_branch
          %708 = sbr.rel (%p706) target = $region28
        $region27: #{tpu_custom_call.1} parent=11 // pred_region
          %s710 = ssub.s32 16, 16
          %711 = vsyncadd [#allocation12], %s710
          %s713 = sshll.u32 [#allocation11], 4
          %s714 = int_to_ptr.vmem [resolvable:$true] %s713
          %716 = dma.hbm_to_vmem [thread:$0]  %s6, 16, %s714, [#allocation12]
        $region28: #{tpu_custom_call.1} parent=11 // pred_fallthru
          _
        // Predicated region
        $region29: #{tpu_custom_call.1} parent=11 // pred_check
          %p717 = pneg %p231
        $region30: #{tpu_custom_call.1} parent=11 // pred_check_branch
          %719 = sbr.rel (%p717) target = $region32
        $region31: #{tpu_custom_call.1} parent=11 // pred_region
          %s721 = ssub.s32 16, 16
          %722 = vsyncadd [#allocation12], %s721
          %s724 = sshll.u32 [#allocation13], 4
          %s725 = int_to_ptr.vmem [resolvable:$true] %s724
          %727 = dma.hbm_to_vmem [thread:$0]  %s7, 16, %s725, [#allocation12]
        $region32: #{tpu_custom_call.1} parent=11 // pred_fallthru
          _
        // Predicated region
        $region33: #{tpu_custom_call.1} parent=11 // pred_check
          %p728 = pneg %p252
        $region34: #{tpu_custom_call.1} parent=11 // pred_check_branch
          %730 = sbr.rel (%p728) target = $region36
        $region35: #{tpu_custom_call.1} parent=11 // pred_region
          %s732 = ssub.s32 16, 16
          %733 = vsyncadd [#allocation15], %s732
          %s735 = sshll.u32 [#allocation14], 4
          %s736 = int_to_ptr.vmem [resolvable:$true] %s735
          %738 = dma.hbm_to_vmem [thread:$0]  %s8, 16, %s736, [#allocation15]
        $region36: #{tpu_custom_call.1} parent=11 // pred_fallthru
          _
        // Predicated region
        $region37: #{tpu_custom_call.1} parent=11 // pred_check
          %p739 = pneg %p273
        $region38: #{tpu_custom_call.1} parent=11 // pred_check_branch
          %741 = sbr.rel (%p739) target = $region40
        $region39: #{tpu_custom_call.1} parent=11 // pred_region
          _
        $region40: #{tpu_custom_call.1} parent=11 // pred_fallthru
          _
        // Predicated region
        $region41: #{tpu_custom_call.1} parent=11 // pred_check
          %p742 = pneg %p294
        $region42: #{tpu_custom_call.1} parent=11 // pred_check_branch
          %744 = sbr.rel (%p742) target = $region44
        $region43: #{tpu_custom_call.1} parent=11 // pred_region
          %s746 = ssub.s32 16, 16
          %747 = vsyncadd [#allocation15], %s746
          %s749 = sshll.u32 [#allocation16], 4
          %s750 = int_to_ptr.vmem [resolvable:$true] %s749
          %752 = dma.hbm_to_vmem [thread:$0]  %s10, 16, %s750, [#allocation15]
        $region44: #{tpu_custom_call.1} parent=11 // pred_fallthru
          _
        // Predicated region
        $region45: #{tpu_custom_call.1} parent=11 // pred_check
          %p753 = pneg %p315
        $region46: #{tpu_custom_call.1} parent=11 // pred_check_branch
          %755 = sbr.rel (%p753) target = $region48
        $region47: #{tpu_custom_call.1} parent=11 // pred_region
          _
        $region48: #{tpu_custom_call.1} parent=11 // pred_fallthru
          _
        // Predicated region
        $region49: #{tpu_custom_call.1} parent=11 // pred_check
          %p756 = pneg %p336
        $region50: #{tpu_custom_call.1} parent=11 // pred_check_branch
          %758 = sbr.rel (%p756) target = $region52
        $region51: #{tpu_custom_call.1} parent=11 // pred_region
          %s760 = ssub.s32 16, 16
          %761 = vsyncadd [#allocation18], %s760
          %s763 = sshll.u32 [#allocation17], 4
          %s764 = int_to_ptr.vmem [resolvable:$true] %s763
          %766 = dma.hbm_to_vmem [thread:$0]  %s12, 16, %s764, [#allocation18]
        $region52: #{tpu_custom_call.1} parent=11 // pred_fallthru
          _
        // Predicated region
        $region53: #{tpu_custom_call.1} parent=11 // pred_check
          %p767 = pneg %p357
        $region54: #{tpu_custom_call.1} parent=11 // pred_check_branch
          %769 = sbr.rel (%p767) target = $region56
        $region55: #{tpu_custom_call.1} parent=11 // pred_region
          _
        $region56: #{tpu_custom_call.1} parent=11 // pred_fallthru
          _
        // Predicated region
        $region57: #{tpu_custom_call.1} parent=11 // pred_check
          %p770 = pneg %p378
        $region58: #{tpu_custom_call.1} parent=11 // pred_check_branch
          %772 = sbr.rel (%p770) target = $region60
        $region59: #{tpu_custom_call.1} parent=11 // pred_region
          %s774 = ssub.s32 16, 16
          %775 = vsyncadd [#allocation18], %s774
          %s777 = sshll.u32 [#allocation19], 4
          %s778 = int_to_ptr.vmem [resolvable:$true] %s777
          %780 = dma.hbm_to_vmem [thread:$0]  %s14, 16, %s778, [#allocation18]
        $region60: #{tpu_custom_call.1} parent=11 // pred_fallthru
          _
        // Predicated region
        $region61: #{tpu_custom_call.1} parent=11 // pred_check
          %p781 = pneg %p399
        $region62: #{tpu_custom_call.1} parent=11 // pred_check_branch
          %783 = sbr.rel (%p781) target = $region64
        $region63: #{tpu_custom_call.1} parent=11 // pred_region
          _
        $region64: #{tpu_custom_call.1} parent=11 // pred_fallthru
          _
        // Predicated region
        $region65: #{tpu_custom_call.1} parent=11 // pred_check
          %p784 = pneg %p420
        $region66: #{tpu_custom_call.1} parent=11 // pred_check_branch
          %786 = sbr.rel (%p784) target = $region68
        $region67: #{tpu_custom_call.1} parent=11 // pred_region
          %s788 = ssub.s32 16, 16
          %789 = vsyncadd [#allocation21], %s788
          %s791 = sshll.u32 [#allocation20], 4
          %s792 = int_to_ptr.vmem [resolvable:$true] %s791
          %794 = dma.hbm_to_vmem [thread:$0]  %s16, 16, %s792, [#allocation21]
        $region68: #{tpu_custom_call.1} parent=11 // pred_fallthru
          _
        // Predicated region
        $region69: #{tpu_custom_call.1} parent=11 // pred_check
          %p795 = pneg %p441
        $region70: #{tpu_custom_call.1} parent=11 // pred_check_branch
          %797 = sbr.rel (%p795) target = $region72
        $region71: #{tpu_custom_call.1} parent=11 // pred_region
          _
        $region72: #{tpu_custom_call.1} parent=11 // pred_fallthru
          _
        // Predicated region
        $region73: #{tpu_custom_call.1} parent=11 // pred_check
          %p798 = pneg %p462
        $region74: #{tpu_custom_call.1} parent=11 // pred_check_branch
          %800 = sbr.rel (%p798) target = $region76
        $region75: #{tpu_custom_call.1} parent=11 // pred_region
          %s802 = ssub.s32 16, 16
          %803 = vsyncadd [#allocation21], %s802
          %s805 = sshll.u32 [#allocation22], 4
          %s806 = int_to_ptr.vmem [resolvable:$true] %s805
          %808 = dma.hbm_to_vmem [thread:$0]  %s18, 16, %s806, [#allocation21]
        $region76: #{tpu_custom_call.1} parent=11 // pred_fallthru
          _
        // Predicated region
        $region77: #{tpu_custom_call.1} parent=11 // pred_check
          %p809 = pneg %p483
        $region78: #{tpu_custom_call.1} parent=11 // pred_check_branch
          %811 = sbr.rel (%p809) target = $region80
        $region79: #{tpu_custom_call.1} parent=11 // pred_region
          %s813 = ssub.s32 16, 16
          %814 = vsyncadd [#allocation24], %s813
          %s816 = sshll.u32 [#allocation23], 4
          %s817 = int_to_ptr.vmem [resolvable:$true] %s816
          %819 = dma.hbm_to_vmem [thread:$0]  %s19, 16, %s817, [#allocation24]
        $region80: #{tpu_custom_call.1} parent=11 // pred_fallthru
          _
        // Predicated region
        $region81: #{tpu_custom_call.1} parent=11 // pred_check
          %p820 = pneg %p504
        $region82: #{tpu_custom_call.1} parent=11 // pred_check_branch
          %822 = sbr.rel (%p820) target = $region84
        $region83: #{tpu_custom_call.1} parent=11 // pred_region
          %s824 = ssub.s32 16, 16
          %825 = vsyncadd [#allocation24], %s824
          %s827 = sshll.u32 [#allocation25], 4
          %s828 = int_to_ptr.vmem [resolvable:$true] %s827
          %830 = dma.hbm_to_vmem [thread:$0]  %s20, 16, %s828, [#allocation24]
        $region84: #{tpu_custom_call.1} parent=11 // pred_fallthru
          _
        // Predicated region
        $region85: #{tpu_custom_call.1} parent=11 // pred_check
          %p831 = pneg %p525
        $region86: #{tpu_custom_call.1} parent=11 // pred_check_branch
          %833 = sbr.rel (%p831) target = $region88
        $region87: #{tpu_custom_call.1} parent=11 // pred_region
          _
        $region88: #{tpu_custom_call.1} parent=11 // pred_fallthru
          _
        // Predicated region
        $region89: #{tpu_custom_call.1} parent=11 // pred_check
          %p834 = pneg %p546
        $region90: #{tpu_custom_call.1} parent=11 // pred_check_branch
          %836 = sbr.rel (%p834) target = $region92
        $region91: #{tpu_custom_call.1} parent=11 // pred_region
          _
        $region92: #{tpu_custom_call.1} parent=11 // pred_fallthru
          _
        // Predicated region
        $region93: #{tpu_custom_call.1} parent=11 // pred_check
          %p837 = pneg %p567
        $region94: #{tpu_custom_call.1} parent=11 // pred_check_branch
          %839 = sbr.rel (%p837) target = $region96
        $region95: #{tpu_custom_call.1} parent=11 // pred_region
          _
        $region96: #{tpu_custom_call.1} parent=11 // pred_fallthru
          _
        // Predicated region
        $region97: #{tpu_custom_call.1} parent=11 // pred_check
          %p840 = pneg %p588
        $region98: #{tpu_custom_call.1} parent=11 // pred_check_branch
          %842 = sbr.rel (%p840) target = $region100
        $region99: #{tpu_custom_call.1} parent=11 // pred_region
          _
        $region100: #{tpu_custom_call.1} parent=11 // pred_fallthru
          _
        // Predicated region
        $region101: #{tpu_custom_call.1} parent=11 // pred_check
          %p843 = pneg %p609
        $region102: #{tpu_custom_call.1} parent=11 // pred_check_branch
          %845 = sbr.rel (%p843) target = $region104
        $region103: #{tpu_custom_call.1} parent=11 // pred_region
          _
        $region104: #{tpu_custom_call.1} parent=11 // pred_fallthru
          _
        // Predicated region
        $region105: #{tpu_custom_call.1} parent=11 // pred_check
          %p846 = pneg %p630
        $region106: #{tpu_custom_call.1} parent=11 // pred_check_branch
          %848 = sbr.rel (%p846) target = $region108
        $region107: #{tpu_custom_call.1} parent=11 // pred_region
          _
        $region108: #{tpu_custom_call.1} parent=11 // pred_fallthru
          _
      $region12: #{tpu_custom_call.1} parent=5 // pred_fallthru
        _
      %p849 = scmp.lt.s32.totalorder %s48, 2
      // Predicated region
      $region109: #{tpu_custom_call.1} parent=5 // pred_check
        %p850 = pneg %p849
      $region110: #{tpu_custom_call.1} parent=5 // pred_check_branch
        %852 = sbr.rel (%p850) target = $region112
      $region111: #{tpu_custom_call.1} parent=5 // pred_region
        // Predicated region
        $region113: #{tpu_custom_call.1} parent=111 // pred_check
          %p853 = pneg %p68
        $region114: #{tpu_custom_call.1} parent=111 // pred_check_branch
          %855 = sbr.rel (%p853) target = $region116
        $region115: #{tpu_custom_call.1} parent=111 // pred_region
          %s856 = sand.u32 %s58, 1
          %s857 = scalar_lea.sflag [#allocation3], %s856
          %s858 = sand.u32 %s58, 1
          %s859 = smul.addr %s858, 4
          %s860 = scalar_lea.vmem [#allocation2], %s859
          %s862 = ssub.s32 64, 64
          %863 = vsyncadd %s857, %s862
          %s864 = smul.addr %s48, 64
          %s865 = scalar_lea.hbm %s0, %s864
          %s867 = sshll.u32 %s860, 4
          %s868 = int_to_ptr.vmem [resolvable:$true] %s867
          %870 = dma.hbm_to_vmem [thread:$0]  %s865, 64, %s868, %s857
        $region116: #{tpu_custom_call.1} parent=111 // pred_fallthru
          _
        // Predicated region
        $region117: #{tpu_custom_call.1} parent=111 // pred_check
          %p871 = pneg %p115
        $region118: #{tpu_custom_call.1} parent=111 // pred_check_branch
          %873 = sbr.rel (%p871) target = $region120
        $region119: #{tpu_custom_call.1} parent=111 // pred_region
          %p874 = scmp.lt.s32.totalorder %s48, 1
          %s875 = scalar_select %p874, %s48, 1
          %s876 = smul.addr %s875, 4
          %s877 = scalar_lea.vmem %s2, %s876
        $region120: #{tpu_custom_call.1} parent=111 // pred_fallthru
          _
        // Predicated region
        $region121: #{tpu_custom_call.1} parent=111 // pred_check
          %p878 = pneg %p162
        $region122: #{tpu_custom_call.1} parent=111 // pred_check_branch
          %880 = sbr.rel (%p878) target = $region124
        $region123: #{tpu_custom_call.1} parent=111 // pred_region
          %s881 = sand.u32 %s48, 1
          %s882 = scalar_lea.sflag [#allocation9], %s881
          %s883 = sand.u32 %s152, 1
          %s884 = scalar_lea.vmem [#allocation8], %s883
          %s886 = ssub.s32 16, 16
          %887 = vsyncadd %s882, %s886
          %s888 = smul.addr %s48, 16
          %s889 = scalar_lea.hbm %s4, %s888
          %s891 = sshll.u32 %s884, 4
          %s892 = int_to_ptr.vmem [resolvable:$true] %s891
          %894 = dma.hbm_to_vmem [thread:$0]  %s889, 16, %s892, %s882
        $region124: #{tpu_custom_call.1} parent=111 // pred_fallthru
          _
      $region112: #{tpu_custom_call.1} parent=5 // pred_fallthru
        _
      %p895 = scmp.le.s32.totalorder 1, %s48
      %p896 = scmp.lt.s32.totalorder %s48, 3
      %p897 = pnand %p895, %p896
      %p898 = pneg %p897
      // Predicated region
      $region125: #{tpu_custom_call.1} parent=5 // pred_check
        _
      $region126: #{tpu_custom_call.1} parent=5 // pred_check_branch
        %900 = sbr.rel (%p897) target = $region128
      $region127: #{tpu_custom_call.1} parent=5 // pred_region
        %s901 = ssub.s32 %s48, 1
        %s902 = sand.u32 %s61, 1
        %s903 = scalar_lea.sflag [#allocation3], %s902
        %s904 = sand.u32 %s61, 1
        %s905 = smul.addr %s904, 4
        %s906 = scalar_lea.vmem [#allocation2], %s905
        // Predicated region
        $region129: #{tpu_custom_call.1} parent=127 // pred_check
          %p907 = pneg %p74
        $region130: #{tpu_custom_call.1} parent=127 // pred_check_branch
          %909 = sbr.rel (%p907) target = $region132
        $region131: #{tpu_custom_call.1} parent=127 // pred_region
          %910 = dma.done %s903, 64
        $region132: #{tpu_custom_call.1} parent=127 // pred_fallthru
          _
        // Predicated region
        $region133: #{tpu_custom_call.1} parent=127 // pred_check
          %p911 = pneg %p95
        $region134: #{tpu_custom_call.1} parent=127 // pred_check_branch
          %913 = sbr.rel (%p911) target = $region136
        $region135: #{tpu_custom_call.1} parent=127 // pred_region
          %914 = dma.done [#allocation6], 128
        $region136: #{tpu_custom_call.1} parent=127 // pred_fallthru
          _
        // Predicated region
        $region137: #{tpu_custom_call.1} parent=127 // pred_check
          %p915 = pneg %p142
        $region138: #{tpu_custom_call.1} parent=127 // pred_check_branch
          %917 = sbr.rel (%p915) target = $region140
        $region139: #{tpu_custom_call.1} parent=127 // pred_region
          %918 = dma.done [#allocation6], 16
        $region140: #{tpu_custom_call.1} parent=127 // pred_fallthru
          _
        %s919 = sand.u32 %s53, 1
        %s920 = scalar_lea.sflag [#allocation9], %s919
        %s921 = sand.u32 %s155, 1
        %s922 = scalar_lea.vmem [#allocation8], %s921
        // Predicated region
        $region141: #{tpu_custom_call.1} parent=127 // pred_check
          %p923 = pneg %p168
        $region142: #{tpu_custom_call.1} parent=127 // pred_check_branch
          %925 = sbr.rel (%p923) target = $region144
        $region143: #{tpu_custom_call.1} parent=127 // pred_region
          %926 = dma.done %s920, 16
        $region144: #{tpu_custom_call.1} parent=127 // pred_fallthru
          _
        // Predicated region
        $region145: #{tpu_custom_call.1} parent=127 // pred_check
          %p927 = pneg %p189
        $region146: #{tpu_custom_call.1} parent=127 // pred_check_branch
          %929 = sbr.rel (%p927) target = $region148
        $region147: #{tpu_custom_call.1} parent=127 // pred_region
          %930 = dma.done [#allocation9], 128
        $region148: #{tpu_custom_call.1} parent=127 // pred_fallthru
          _
        // Predicated region
        $region149: #{tpu_custom_call.1} parent=127 // pred_check
          %p931 = pneg %p210
        $region150: #{tpu_custom_call.1} parent=127 // pred_check_branch
          %933 = sbr.rel (%p931) target = $region152
        $region151: #{tpu_custom_call.1} parent=127 // pred_region
          %934 = dma.done [#allocation12], 16
        $region152: #{tpu_custom_call.1} parent=127 // pred_fallthru
          _
        // Predicated region
        $region153: #{tpu_custom_call.1} parent=127 // pred_check
          %p935 = pneg %p231
        $region154: #{tpu_custom_call.1} parent=127 // pred_check_branch
          %937 = sbr.rel (%p935) target = $region156
        $region155: #{tpu_custom_call.1} parent=127 // pred_region
          %938 = dma.done [#allocation12], 16
        $region156: #{tpu_custom_call.1} parent=127 // pred_fallthru
          _
        // Predicated region
        $region157: #{tpu_custom_call.1} parent=127 // pred_check
          %p939 = pneg %p252
        $region158: #{tpu_custom_call.1} parent=127 // pred_check_branch
          %941 = sbr.rel (%p939) target = $region160
        $region159: #{tpu_custom_call.1} parent=127 // pred_region
          %942 = dma.done [#allocation15], 16
        $region160: #{tpu_custom_call.1} parent=127 // pred_fallthru
          _
        // Predicated region
        $region161: #{tpu_custom_call.1} parent=127 // pred_check
          %p943 = pneg %p294
        $region162: #{tpu_custom_call.1} parent=127 // pred_check_branch
          %945 = sbr.rel (%p943) target = $region164
        $region163: #{tpu_custom_call.1} parent=127 // pred_region
          %946 = dma.done [#allocation15], 16
        $region164: #{tpu_custom_call.1} parent=127 // pred_fallthru
          _
        // Predicated region
        $region165: #{tpu_custom_call.1} parent=127 // pred_check
          %p947 = pneg %p336
        $region166: #{tpu_custom_call.1} parent=127 // pred_check_branch
          %949 = sbr.rel (%p947) target = $region168
        $region167: #{tpu_custom_call.1} parent=127 // pred_region
          %950 = dma.done [#allocation18], 16
        $region168: #{tpu_custom_call.1} parent=127 // pred_fallthru
          _
        // Predicated region
        $region169: #{tpu_custom_call.1} parent=127 // pred_check
          %p951 = pneg %p378
        $region170: #{tpu_custom_call.1} parent=127 // pred_check_branch
          %953 = sbr.rel (%p951) target = $region172
        $region171: #{tpu_custom_call.1} parent=127 // pred_region
          %954 = dma.done [#allocation18], 16
        $region172: #{tpu_custom_call.1} parent=127 // pred_fallthru
          _
        // Predicated region
        $region173: #{tpu_custom_call.1} parent=127 // pred_check
          %p955 = pneg %p420
        $region174: #{tpu_custom_call.1} parent=127 // pred_check_branch
          %957 = sbr.rel (%p955) target = $region176
        $region175: #{tpu_custom_call.1} parent=127 // pred_region
          %958 = dma.done [#allocation21], 16
        $region176: #{tpu_custom_call.1} parent=127 // pred_fallthru
          _
        // Predicated region
        $region177: #{tpu_custom_call.1} parent=127 // pred_check
          %p959 = pneg %p462
        $region178: #{tpu_custom_call.1} parent=127 // pred_check_branch
          %961 = sbr.rel (%p959) target = $region180
        $region179: #{tpu_custom_call.1} parent=127 // pred_region
          %962 = dma.done [#allocation21], 16
        $region180: #{tpu_custom_call.1} parent=127 // pred_fallthru
          _
        // Predicated region
        $region181: #{tpu_custom_call.1} parent=127 // pred_check
          %p963 = pneg %p483
        $region182: #{tpu_custom_call.1} parent=127 // pred_check_branch
          %965 = sbr.rel (%p963) target = $region184
        $region183: #{tpu_custom_call.1} parent=127 // pred_region
          %966 = dma.done [#allocation24], 16
        $region184: #{tpu_custom_call.1} parent=127 // pred_fallthru
          _
        // Predicated region
        $region185: #{tpu_custom_call.1} parent=127 // pred_check
          %p967 = pneg %p504
        $region186: #{tpu_custom_call.1} parent=127 // pred_check_branch
          %969 = sbr.rel (%p967) target = $region188
        $region187: #{tpu_custom_call.1} parent=127 // pred_region
          %970 = dma.done [#allocation24], 16
        $region188: #{tpu_custom_call.1} parent=127 // pred_fallthru
          _
        %s971 = sand.u32 %s61, 1
        %s972 = scalar_lea.sflag [#allocation3], %s971
        %s973 = sand.u32 %s61, 1
        %s974 = smul.addr %s973, 4
        %s975 = scalar_lea.vmem [#allocation2], %s974
        %p976 = pneg %p74
        %p977 = pneg %p71
        %p978 = pneg %p95
        %p979 = pneg %p92
        %p980 = scmp.lt.s32.totalorder %s53, 1
        %s981 = scalar_select %p980, %s53, 1
        %s982 = smul.addr %s981, 4
        %s983 = scalar_lea.vmem %s2, %s982
        %p984 = pneg %p121
        %p985 = pneg %p118
        %p986 = pneg %p142
        %p987 = pneg %p139
        %s988 = sand.u32 %s53, 1
        %s989 = scalar_lea.sflag [#allocation9], %s988
        %s990 = sand.u32 %s155, 1
        %s991 = scalar_lea.vmem [#allocation8], %s990
        %p992 = pneg %p168
        %p993 = pneg %p165
        %p994 = pneg %p189
        %p995 = pneg %p186
        %p996 = pneg %p210
        %p997 = pneg %p207
        %p998 = pneg %p231
        %p999 = pneg %p228
        %p1000 = pneg %p252
        %p1001 = pneg %p249
        %p1002 = pneg %p273
        %p1003 = pneg %p270
        %p1004 = pneg %p294
        %p1005 = pneg %p291
        %p1006 = pneg %p315
        %p1007 = pneg %p312
        %p1008 = pneg %p336
        %p1009 = pneg %p333
        %p1010 = pneg %p357
        %p1011 = pneg %p354
        %p1012 = pneg %p378
        %p1013 = pneg %p375
        %p1014 = pneg %p399
        %p1015 = pneg %p396
        %p1016 = pneg %p420
        %p1017 = pneg %p417
        %p1018 = pneg %p441
        %p1019 = pneg %p438
        %p1020 = pneg %p462
        %p1021 = pneg %p459
        %p1022 = pneg %p483
        %p1023 = pneg %p480
        %p1024 = pneg %p504
        %p1025 = pneg %p501
        %p1026 = pneg %p525
        %p1027 = pneg %p522
        %p1028 = pneg %p546
        %p1029 = pneg %p543
        %p1030 = pneg %p567
        %p1031 = pneg %p564
        %p1032 = pneg %p588
        %p1033 = pneg %p585
        %p1034 = pneg %p609
        %p1035 = pneg %p606
        %p1036 = pneg %p630
        %p1037 = pneg %p627
        %p1038 = pneg %p656
        %p1039 = pneg %p653
        %s1040 = sand.u32 %s643, 1
        %s1041 = scalar_lea.sflag [#allocation4], %s1040
        %s1042 = sand.u32 %s643, 1
        %s1043 = smul.addr %s1042, 8
        %s1044 = scalar_lea.vmem [#allocation26], %s1043
        %p1045 = scmp.lt.s32.totalorder %s53, 1
        %s1046 = scalar_select %p1045, %s53, 1
        %s1047 = smul.addr %s1046, 4
        %s1048 = scalar_lea.vmem %s2, %s1047
        %v1050 = vld [vmem:[#allocation10] sm:$0xf]
        %v1051 = vld [vmem:[#allocation10 + $0x4] sm:$0xf]
        %v1052 = vld [vmem:[%s9] sm:$0xf]
        %v1053 = vld [vmem:[%s9 + $0x4] sm:$0xf]
        %v1054 = vld [vmem:[%s9 + $0x8] sm:$0xf]
        %v1055 = vld [vmem:[%s9 + $0xc] sm:$0xf]
        %v1056 = vld [vmem:[%s11] sm:$0xf]
        %v1057 = vld [vmem:[%s11 + $0x4] sm:$0xf]
        %v1058 = vld [vmem:[%s11 + $0x8] sm:$0xf]
        %v1059 = vld [vmem:[%s11 + $0xc] sm:$0xf]
        %v1060 = vld [vmem:[%s13] sm:$0xf]
        %v1061 = vld [vmem:[%s13 + $0x4] sm:$0xf]
        %v1062 = vld [vmem:[%s13 + $0x8] sm:$0xf]
        %v1063 = vld [vmem:[%s13 + $0xc] sm:$0xf]
        %v1064 = vld [vmem:[%s15] sm:$0xf]
        %v1065 = vld [vmem:[%s15 + $0x4] sm:$0xf]
        %v1066 = vld [vmem:[%s15 + $0x8] sm:$0xf]
        %v1067 = vld [vmem:[%s15 + $0xc] sm:$0xf]
        %v1068 = vld [vmem:[%s17] sm:$0xf]
        %v1069 = vld [vmem:[%s17 + $0x4] sm:$0xf]
        %v1070 = vld [vmem:[%s17 + $0x8] sm:$0xf]
        %v1071 = vld [vmem:[%s17 + $0xc] sm:$0xf]
        %v1072 = vld [vmem:[%s21] sm:$0xf]
        %v1073 = vld [vmem:[%s21 + $0x4] sm:$0xf]
        %v1074 = vld [vmem:[%s21 + $0x8] sm:$0xf]
        %v1075 = vld [vmem:[%s21 + $0xc] sm:$0xf]
        %v1076 = vld [vmem:[%s23] sm:$0xf]
        %v1077 = vld [vmem:[%s23 + $0x4] sm:$0xf]
        %v1078 = vld [vmem:[%s23 + $0x8] sm:$0xf]
        %v1079 = vld [vmem:[%s23 + $0xc] sm:$0xf]
        %v1080 = vld [vmem:[%s23 + $0x10] sm:$0xf]
        %v1081 = vld [vmem:[%s23 + $0x14] sm:$0xf]
        %v1082 = vld [vmem:[%s23 + $0x18] sm:$0xf]
        %v1083 = vld [vmem:[%s23 + $0x1c] sm:$0xf]
        %v1084 = vld [vmem:[#allocation16] sm:$0x1]
        %v1085 = vld [vmem:[#allocation17] sm:$0x1]
        %v1086 = vld [vmem:[#allocation19] sm:$0x1]
        %v1087 = vld [vmem:[#allocation20] sm:$0x1]
        %v1088 = vld [vmem:[#allocation22] sm:$0x1]
        %v1089 = vld [vmem:[%s22] sm:$0x1]
        %v1090 = vld [vmem:[%s24] sm:$0x1]
        %v1091 = vld [vmem:[#allocation13] sm:$0x1]
        %v1092 = vld [vmem:[#allocation14] sm:$0x1]
        %v1093 = vld [vmem:[#allocation23] sm:$0x1]
        %v1094 = vld [vmem:[#allocation25] sm:$0x1]
        %v1095 = vld [vmem:[%s25] sm:$0x1]
        %v1096 = vld [vmem:[%s26] sm:$0x1]
        %v1097 = vld [vmem:[%s906] sm:$0xf]
        %v1098 = vld [vmem:[#allocation11] sm:$0x1]
        %v1100 = vlaneseq
        %v1101 = vshrl.u32 %v1100, 7
        %v1102 = vsub.s32 0, %v1101
        %v1103 = vrot.slane %v1098, %v1102
        %v1107 = vunpack.c.l.b16 %v1050
        %v1108 = vunpack.c.l.b16 %v1051
        %v1109 = vpack.c.b16 %v1108, %v1107
        %vm1111 = vcmask 130048
        %v1113 = vsel %vm1111, %v1097, 0
        %1115 = vmatprep.subr.bf16.mxu0 0
        %1116 = vmatpush1.bf16.msra.mxu0 0
        %1117 = vmatprep.subr.bf16.mxu0 0
        %1118 = vmatpush1.bf16.msra.mxu0 0
        %1119 = vmatprep.subr.bf16.mxu0 0
        %1120 = vmatpush1.bf16.msra.mxu0 0
        %1121 = vmatprep.subr.bf16.mxu0 0
        %1122 = vmatpush1.bf16.msra.mxu0 0
        %1123 = vmatprep.subr.bf16.mxu0 0
        %1124 = vmatpush1.bf16.msra.mxu0 0
        %1125 = vmatprep.subr.bf16.mxu0 0
        %1126 = vmatpush1.bf16.msra.mxu0 0
        %1127 = vmatprep.subr.bf16.mxu0 0
        %1128 = vmatpush1.bf16.msra.mxu0 0
        %1129 = vmatprep.subr.bf16.mxu0 0
        %1130 = vmatpush1.bf16.msra.mxu0 %v1109
        %1131 = vmatprep.subr.bf16.mxu0 0
        %1132 = vmatpush2.bf16.msra.mxu0 0
        %1133 = vmatprep.subr.bf16.mxu0 0
        %1134 = vmatpush2.bf16.msra.mxu0 0
        %1135 = vmatprep.subr.bf16.mxu0 0
        %1136 = vmatpush2.bf16.msra.mxu0 0
        %1137 = vmatprep.subr.bf16.mxu0 0
        %1138 = vmatpush2.bf16.msra.mxu0 0
        %1139 = vmatprep.subr.bf16.mxu0 0
        %1140 = vmatpush2.bf16.msra.mxu0 0
        %1141 = vmatprep.subr.bf16.mxu0 0
        %1142 = vmatpush2.bf16.msra.mxu0 0
        %1143 = vmatprep.subr.bf16.mxu0 0
        %1144 = vmatpush2.bf16.msra.mxu0 0
        %1145 = vmatprep.subr.bf16.mxu0 0
        %1146 = vmatpush2.bf16.msra.mxu0 0
        %1147 = vmatprep.mubr.bf16.mxu0 0
        %1148 = vmatmul.mubr.bf16.gmra.mxu0 %v1113
        %v1149 = vpop.f32.mrf.mxu0
        %v1150 = vadd.f32 %v1103, %v1149
        %v1151 = vpop.f32.mrf.mxu0
        %v1152 = vpop.f32.mrf.mxu0
        %v1153 = vpop.f32.mrf.mxu0
        %1154 = vdwg.mxu0
        %v1155 = vld [vmem:[%s1048] sm:$0xf]
        %v1156 = vld [vmem:[#allocation7] sm:$0x1]
        %vm1157 = vcmask 15360
        %v1159 = vsel %vm1157, %v1155, 0
        %vm1161 = vcmask 1040384
        %v1163 = vsel %vm1161, %v1156, 0
        %1165 = vmatprep.subr.bf16.mxu0 0
        %1166 = vmatpush1.bf16.msra.mxu0 0
        %1167 = vmatprep.subr.bf16.mxu0 0
        %1168 = vmatpush1.bf16.msra.mxu0 0
        %1169 = vmatprep.subr.bf16.mxu0 0
        %1170 = vmatpush1.bf16.msra.mxu0 0
        %1171 = vmatprep.subr.bf16.mxu0 0
        %1172 = vmatpush1.bf16.msra.mxu0 0
        %1173 = vmatprep.subr.bf16.mxu0 0
        %1174 = vmatpush1.bf16.msra.mxu0 0
        %1175 = vmatprep.subr.bf16.mxu0 0
        %1176 = vmatpush1.bf16.msra.mxu0 0
        %1177 = vmatprep.subr.bf16.mxu0 0
        %1178 = vmatpush1.bf16.msra.mxu0 0
        %1179 = vmatprep.subr.bf16.mxu0 0
        %1180 = vmatpush1.bf16.msra.mxu0 %v1163
        %1181 = vmatprep.subr.bf16.mxu0 0
        %1182 = vmatpush2.bf16.msra.mxu0 0
        %1183 = vmatprep.subr.bf16.mxu0 0
        %1184 = vmatpush2.bf16.msra.mxu0 0
        %1185 = vmatprep.subr.bf16.mxu0 0
        %1186 = vmatpush2.bf16.msra.mxu0 0
        %1187 = vmatprep.subr.bf16.mxu0 0
        %1188 = vmatpush2.bf16.msra.mxu0 0
        %1189 = vmatprep.subr.bf16.mxu0 0
        %1190 = vmatpush2.bf16.msra.mxu0 0
        %1191 = vmatprep.subr.bf16.mxu0 0
        %1192 = vmatpush2.bf16.msra.mxu0 0
        %1193 = vmatprep.subr.bf16.mxu0 0
        %1194 = vmatpush2.bf16.msra.mxu0 0
        %1195 = vmatprep.subr.bf16.mxu0 0
        %1196 = vmatpush2.bf16.msra.mxu0 0
        %1197 = vmatprep.mubr.bf16.mxu0 0
        %1198 = vmatmul.mubr.bf16.gmra.mxu0 %v1159
        %v1199 = vpop.f32.mrf.mxu0
        %v1200 = vadd.f32 0.0, %v1199
        %v1201 = vpop.f32.mrf.mxu0
        %v1202 = vpop.f32.mrf.mxu0
        %v1203 = vpop.f32.mrf.mxu0
        %1204 = vdwg.mxu0
        %v1205 = vld [vmem:[#allocation5] sm:$0xff]
        %v1206 = vadd.f32 %v1150, %v1205
        %v1207 = vadd.f32 %v1206, %v1200
        %vm1208 = vcmask 261120
        %v1209 = vsel %vm1208, %v1207, 0.0
        %1210 = vadd.xlane.f32.xlu0 %v1209
        %v1211 = vpop.xlane.xlu0 %1210
        %v1212 = vrcp.pop 32.0
        %v1213 = vmul.f32 %v1211, %v1212
        %v1214 = vsub.f32 %v1207, %v1213
        %v1215 = vmul.f32 %v1214, %v1214
        %v1216 = vsel %vm1208, %v1215, 0.0
        %1217 = vadd.xlane.f32.xlu0 %v1216
        %v1218 = vpop.xlane.xlu0 %1217
        %v1219 = vmul.f32 %v1218, %v1212
        %v1220 = vadd.f32 %v1219, 1e-05
        %v1221 = vrsqrt.pop %v1220
        %v1222 = vmul.f32 %v1214, %v1221
        %v1224 = vlaneseq
        %v1225 = vshrl.u32 %v1224, 7
        %v1226 = vsub.s32 0, %v1225
        %v1227 = vrot.slane %v1091, %v1226
        %v1229 = vmul.f32 %v1222, %v1227
        %v1231 = vlaneseq
        %v1232 = vshrl.u32 %v1231, 7
        %v1233 = vsub.s32 0, %v1232
        %v1234 = vrot.slane %v1092, %v1233
        %v1236 = vadd.f32 %v1229, %v1234
        %v1237 = vld [vmem:[%s922] sm:$0x1]
        loop: start=0, step=1, limit=2
        $region189: #{tpu_custom_call.1} parent=127 // loop_pre_header
          _
        $region190: #{tpu_custom_call.1} parent=127 // loop_header
          %s1239 = sphi 0, %s1243
          %p1240 = scmp.ge.s32.totalorder %s1239, 2
          %v1244 = vphi %v1236, %v1856
        $region191: #{tpu_custom_call.1} parent=127 // loop_header_branch
          %1242 = sbr.rel (%p1240) target = $region195
        $region192: #{tpu_custom_call.1} parent=127 // loop_body
          %v1245 = vpack.c.bf16 %v1244, %v1244
          %v1247 = vlaneseq
          %v1248 = vshrl.u32 %v1247, 7
          %v1249 = vsub.s32 0, %v1248
          %v1250 = vrot.slane %v1084, %v1249
          %v1256 = vunpack.c.l.b16 %v1052
          %v1257 = vunpack.c.l.b16 %v1053
          %v1258 = vunpack.c.l.b16 %v1054
          %v1259 = vunpack.c.l.b16 %v1055
          %v1260 = vpack.c.b16 %v1257, %v1256
          %v1261 = vpack.c.b16 %v1259, %v1258
          %v1265 = vsel %vm1208, %v1245, 0
          %1267 = vmatprep.subr.bf16.mxu0 0
          %1268 = vmatpush1.bf16.msra.mxu0 0
          %1269 = vmatprep.subr.bf16.mxu0 0
          %1270 = vmatpush1.bf16.msra.mxu0 0
          %1271 = vmatprep.subr.bf16.mxu0 0
          %1272 = vmatpush1.bf16.msra.mxu0 0
          %1273 = vmatprep.subr.bf16.mxu0 0
          %1274 = vmatpush1.bf16.msra.mxu0 0
          %1275 = vmatprep.subr.bf16.mxu0 0
          %1276 = vmatpush1.bf16.msra.mxu0 0
          %1277 = vmatprep.subr.bf16.mxu0 0
          %1278 = vmatpush1.bf16.msra.mxu0 0
          %1279 = vmatprep.subr.bf16.mxu0 0
          %1280 = vmatpush1.bf16.msra.mxu0 %v1261
          %1281 = vmatprep.subr.bf16.mxu0 0
          %1282 = vmatpush1.bf16.msra.mxu0 %v1260
          %1283 = vmatprep.subr.bf16.mxu0 0
          %1284 = vmatpush2.bf16.msra.mxu0 0
          %1285 = vmatprep.subr.bf16.mxu0 0
          %1286 = vmatpush2.bf16.msra.mxu0 0
          %1287 = vmatprep.subr.bf16.mxu0 0
          %1288 = vmatpush2.bf16.msra.mxu0 0
          %1289 = vmatprep.subr.bf16.mxu0 0
          %1290 = vmatpush2.bf16.msra.mxu0 0
          %1291 = vmatprep.subr.bf16.mxu0 0
          %1292 = vmatpush2.bf16.msra.mxu0 0
          %1293 = vmatprep.subr.bf16.mxu0 0
          %1294 = vmatpush2.bf16.msra.mxu0 0
          %1295 = vmatprep.subr.bf16.mxu0 0
          %1296 = vmatpush2.bf16.msra.mxu0 0
          %1297 = vmatprep.subr.bf16.mxu0 0
          %1298 = vmatpush2.bf16.msra.mxu0 0
          %1299 = vmatprep.mubr.bf16.mxu0 0
          %1300 = vmatmul.mubr.bf16.gmra.mxu0 %v1265
          %v1301 = vpop.f32.mrf.mxu0
          %v1302 = vadd.f32 %v1250, %v1301
          %v1303 = vpop.f32.mrf.mxu0
          %v1304 = vpop.f32.mrf.mxu0
          %v1305 = vpop.f32.mrf.mxu0
          %1306 = vdwg.mxu0
          %v1307 = vmul.f32 %v1302, 0.17677669
          %v1308 = vpack.c.bf16 %v1307, %v1307
          %v1310 = vlaneseq
          %v1311 = vshrl.u32 %v1310, 7
          %v1312 = vsub.s32 0, %v1311
          %v1313 = vrot.slane %v1085, %v1312
          %v1319 = vunpack.c.l.b16 %v1056
          %v1320 = vunpack.c.l.b16 %v1057
          %v1321 = vunpack.c.l.b16 %v1058
          %v1322 = vunpack.c.l.b16 %v1059
          %v1323 = vpack.c.b16 %v1320, %v1319
          %v1324 = vpack.c.b16 %v1322, %v1321
          %1327 = vmatprep.subr.bf16.mxu0 0
          %1328 = vmatpush1.bf16.msra.mxu0 0
          %1329 = vmatprep.subr.bf16.mxu0 0
          %1330 = vmatpush1.bf16.msra.mxu0 0
          %1331 = vmatprep.subr.bf16.mxu0 0
          %1332 = vmatpush1.bf16.msra.mxu0 0
          %1333 = vmatprep.subr.bf16.mxu0 0
          %1334 = vmatpush1.bf16.msra.mxu0 0
          %1335 = vmatprep.subr.bf16.mxu0 0
          %1336 = vmatpush1.bf16.msra.mxu0 0
          %1337 = vmatprep.subr.bf16.mxu0 0
          %1338 = vmatpush1.bf16.msra.mxu0 0
          %1339 = vmatprep.subr.bf16.mxu0 0
          %1340 = vmatpush1.bf16.msra.mxu0 %v1324
          %1341 = vmatprep.subr.bf16.mxu0 0
          %1342 = vmatpush1.bf16.msra.mxu0 %v1323
          %1343 = vmatprep.subr.bf16.mxu0 0
          %1344 = vmatpush2.bf16.msra.mxu0 0
          %1345 = vmatprep.subr.bf16.mxu0 0
          %1346 = vmatpush2.bf16.msra.mxu0 0
          %1347 = vmatprep.subr.bf16.mxu0 0
          %1348 = vmatpush2.bf16.msra.mxu0 0
          %1349 = vmatprep.subr.bf16.mxu0 0
          %1350 = vmatpush2.bf16.msra.mxu0 0
          %1351 = vmatprep.subr.bf16.mxu0 0
          %1352 = vmatpush2.bf16.msra.mxu0 0
          %1353 = vmatprep.subr.bf16.mxu0 0
          %1354 = vmatpush2.bf16.msra.mxu0 0
          %1355 = vmatprep.subr.bf16.mxu0 0
          %1356 = vmatpush2.bf16.msra.mxu0 0
          %1357 = vmatprep.subr.bf16.mxu0 0
          %1358 = vmatpush2.bf16.msra.mxu0 0
          %1359 = vmatprep.mubr.bf16.mxu0 0
          %1360 = vmatmul.mubr.bf16.gmra.mxu0 %v1265
          %v1361 = vpop.f32.mrf.mxu0
          %v1362 = vadd.f32 %v1313, %v1361
          %v1363 = vpop.f32.mrf.mxu0
          %v1364 = vpop.f32.mrf.mxu0
          %v1365 = vpop.f32.mrf.mxu0
          %1366 = vdwg.mxu0
          %v1367 = vpack.c.bf16 %v1362, %v1362
          %v1369 = vlaneseq
          %v1370 = vshrl.u32 %v1369, 7
          %v1371 = vsub.s32 0, %v1370
          %v1372 = vrot.slane %v1086, %v1371
          %v1378 = vunpack.c.l.b16 %v1060
          %v1379 = vunpack.c.l.b16 %v1061
          %v1380 = vunpack.c.l.b16 %v1062
          %v1381 = vunpack.c.l.b16 %v1063
          %v1382 = vpack.c.b16 %v1379, %v1378
          %v1383 = vpack.c.b16 %v1381, %v1380
          %1386 = vmatprep.subr.bf16.mxu0 0
          %1387 = vmatpush1.bf16.msra.mxu0 0
          %1388 = vmatprep.subr.bf16.mxu0 0
          %1389 = vmatpush1.bf16.msra.mxu0 0
          %1390 = vmatprep.subr.bf16.mxu0 0
          %1391 = vmatpush1.bf16.msra.mxu0 0
          %1392 = vmatprep.subr.bf16.mxu0 0
          %1393 = vmatpush1.bf16.msra.mxu0 0
          %1394 = vmatprep.subr.bf16.mxu0 0
          %1395 = vmatpush1.bf16.msra.mxu0 0
          %1396 = vmatprep.subr.bf16.mxu0 0
          %1397 = vmatpush1.bf16.msra.mxu0 0
          %1398 = vmatprep.subr.bf16.mxu0 0
          %1399 = vmatpush1.bf16.msra.mxu0 %v1383
          %1400 = vmatprep.subr.bf16.mxu0 0
          %1401 = vmatpush1.bf16.msra.mxu0 %v1382
          %1402 = vmatprep.subr.bf16.mxu0 0
          %1403 = vmatpush2.bf16.msra.mxu0 0
          %1404 = vmatprep.subr.bf16.mxu0 0
          %1405 = vmatpush2.bf16.msra.mxu0 0
          %1406 = vmatprep.subr.bf16.mxu0 0
          %1407 = vmatpush2.bf16.msra.mxu0 0
          %1408 = vmatprep.subr.bf16.mxu0 0
          %1409 = vmatpush2.bf16.msra.mxu0 0
          %1410 = vmatprep.subr.bf16.mxu0 0
          %1411 = vmatpush2.bf16.msra.mxu0 0
          %1412 = vmatprep.subr.bf16.mxu0 0
          %1413 = vmatpush2.bf16.msra.mxu0 0
          %1414 = vmatprep.subr.bf16.mxu0 0
          %1415 = vmatpush2.bf16.msra.mxu0 0
          %1416 = vmatprep.subr.bf16.mxu0 0
          %1417 = vmatpush2.bf16.msra.mxu0 0
          %1418 = vmatprep.mubr.bf16.mxu0 0
          %1419 = vmatmul.mubr.bf16.gmra.mxu0 %v1265
          %v1420 = vpop.f32.mrf.mxu0
          %v1421 = vadd.f32 %v1372, %v1420
          %v1422 = vpop.f32.mrf.mxu0
          %v1423 = vpop.f32.mrf.mxu0
          %v1424 = vpop.f32.mrf.mxu0
          %1425 = vdwg.mxu0
          %v1426 = vpack.c.bf16 %v1421, %v1421
          %v1428 = vlaneseq
          %v1429 = vshrl.u32 %v1428, 7
          %v1430 = vsub.s32 0, %v1429
          %v1431 = vrot.slane %v1237, %v1430
          %v1434 = vsel %vm1208, %v1308, 0
          %v1437 = vsel %vm1208, %v1367, 0
          %1439 = vmatprep.subr.bf16.mxu0 0
          %1440 = vmatpush1.bf16.xpose.msra.mxu0 0
          %1441 = vmatprep.subr.bf16.mxu0 0
          %1442 = vmatpush1.bf16.xpose.msra.mxu0 0
          %1443 = vmatprep.subr.bf16.mxu0 0
          %1444 = vmatpush1.bf16.xpose.msra.mxu0 0
          %1445 = vmatprep.subr.bf16.mxu0 0
          %1446 = vmatpush1.bf16.xpose.msra.mxu0 0
          %1447 = vmatprep.subr.bf16.mxu0 0
          %1448 = vmatpush1.bf16.xpose.msra.mxu0 0
          %1449 = vmatprep.subr.bf16.mxu0 0
          %1450 = vmatpush1.bf16.xpose.msra.mxu0 0
          %1451 = vmatprep.subr.bf16.mxu0 0
          %1452 = vmatpush1.bf16.xpose.msra.mxu0 0
          %1453 = vmatprep.subr.bf16.mxu0 0
          %1454 = vmatpush1.bf16.xpose.msra.mxu0 %v1437
          %1455 = vmatprep.subr.bf16.mxu0 0
          %1456 = vmatpush2.bf16.xpose.msra.mxu0 0
          %1457 = vmatprep.subr.bf16.mxu0 0
          %1458 = vmatpush2.bf16.xpose.msra.mxu0 0
          %1459 = vmatprep.subr.bf16.mxu0 0
          %1460 = vmatpush2.bf16.xpose.msra.mxu0 0
          %1461 = vmatprep.subr.bf16.mxu0 0
          %1462 = vmatpush2.bf16.xpose.msra.mxu0 0
          %1463 = vmatprep.subr.bf16.mxu0 0
          %1464 = vmatpush2.bf16.xpose.msra.mxu0 0
          %1465 = vmatprep.subr.bf16.mxu0 0
          %1466 = vmatpush2.bf16.xpose.msra.mxu0 0
          %1467 = vmatprep.subr.bf16.mxu0 0
          %1468 = vmatpush2.bf16.xpose.msra.mxu0 0
          %1469 = vmatprep.subr.bf16.mxu0 0
          %1470 = vmatpush2.bf16.xpose.msra.mxu0 0
          %1471 = vmatprep.mubr.bf16.mxu0 0
          %1472 = vmatmul.mubr.bf16.gmra.mxu0 %v1434
          %v1473 = vpop.f32.mrf.mxu0
          %v1474 = vadd.f32 %v1431, %v1473
          %v1475 = vpop.f32.mrf.mxu0
          %v1476 = vpop.f32.mrf.mxu0
          %v1477 = vpop.f32.mrf.mxu0
          %1478 = vdwg.mxu0
          %vm1479 = vcmask 64512
          %v1480 = vsel %vm1479, %v1474, -inf
          %1481 = vmax.xlane.f32.xlu0 %v1480
          %v1482 = vpop.xlane.xlu0 %1481
          %v1483 = vsub.f32 %v1474, %v1482
          %v1484 = vmul.f32 %v1483, 1.442695
          %v1485 = vpow.pop %v1484
          %v1486 = vsel %vm1479, %v1485, 0.0
          %1487 = vadd.xlane.f32.xlu0 %v1486
          %v1488 = vpop.xlane.xlu0 %1487
          %v1489 = vpack.c.bf16 %v1485, %v1485
          %v1490 = vrcp.pop %v1488
          %v1492 = vsel %vm1479, %v1489, 0
          %vm1494 = vcmask 1043456
          %v1496 = vsel %vm1494, %v1426, 0
          %1498 = vmatprep.subr.bf16.mxu0 0
          %1499 = vmatpush1.bf16.msra.mxu0 0
          %1500 = vmatprep.subr.bf16.mxu0 0
          %1501 = vmatpush1.bf16.msra.mxu0 0
          %1502 = vmatprep.subr.bf16.mxu0 0
          %1503 = vmatpush1.bf16.msra.mxu0 0
          %1504 = vmatprep.subr.bf16.mxu0 0
          %1505 = vmatpush1.bf16.msra.mxu0 0
          %1506 = vmatprep.subr.bf16.mxu0 0
          %1507 = vmatpush1.bf16.msra.mxu0 0
          %1508 = vmatprep.subr.bf16.mxu0 0
          %1509 = vmatpush1.bf16.msra.mxu0 0
          %1510 = vmatprep.subr.bf16.mxu0 0
          %1511 = vmatpush1.bf16.msra.mxu0 0
          %1512 = vmatprep.subr.bf16.mxu0 0
          %1513 = vmatpush1.bf16.msra.mxu0 %v1496
          %1514 = vmatprep.subr.bf16.mxu0 0
          %1515 = vmatpush2.bf16.msra.mxu0 0
          %1516 = vmatprep.subr.bf16.mxu0 0
          %1517 = vmatpush2.bf16.msra.mxu0 0
          %1518 = vmatprep.subr.bf16.mxu0 0
          %1519 = vmatpush2.bf16.msra.mxu0 0
          %1520 = vmatprep.subr.bf16.mxu0 0
          %1521 = vmatpush2.bf16.msra.mxu0 0
          %1522 = vmatprep.subr.bf16.mxu0 0
          %1523 = vmatpush2.bf16.msra.mxu0 0
          %1524 = vmatprep.subr.bf16.mxu0 0
          %1525 = vmatpush2.bf16.msra.mxu0 0
          %1526 = vmatprep.subr.bf16.mxu0 0
          %1527 = vmatpush2.bf16.msra.mxu0 0
          %1528 = vmatprep.subr.bf16.mxu0 0
          %1529 = vmatpush2.bf16.msra.mxu0 0
          %1530 = vmatprep.mubr.bf16.mxu0 0
          %1531 = vmatmul.mubr.bf16.gmra.mxu0 %v1492
          %v1532 = vpop.f32.mrf.mxu0
          %v1533 = vadd.f32 0.0, %v1532
          %v1534 = vpop.f32.mrf.mxu0
          %v1535 = vpop.f32.mrf.mxu0
          %v1536 = vpop.f32.mrf.mxu0
          %1537 = vdwg.mxu0
          %v1538 = vmul.f32 %v1533, %v1490
          %v1539 = vpack.c.bf16 %v1538, %v1538
          %v1541 = vlaneseq
          %v1542 = vshrl.u32 %v1541, 7
          %v1543 = vsub.s32 0, %v1542
          %v1544 = vrot.slane %v1087, %v1543
          %v1550 = vunpack.c.l.b16 %v1064
          %v1551 = vunpack.c.l.b16 %v1065
          %v1552 = vunpack.c.l.b16 %v1066
          %v1553 = vunpack.c.l.b16 %v1067
          %v1554 = vpack.c.b16 %v1551, %v1550
          %v1555 = vpack.c.b16 %v1553, %v1552
          %v1559 = vsel %vm1208, %v1539, 0
          %1561 = vmatprep.subr.bf16.mxu0 0
          %1562 = vmatpush1.bf16.msra.mxu0 0
          %1563 = vmatprep.subr.bf16.mxu0 0
          %1564 = vmatpush1.bf16.msra.mxu0 0
          %1565 = vmatprep.subr.bf16.mxu0 0
          %1566 = vmatpush1.bf16.msra.mxu0 0
          %1567 = vmatprep.subr.bf16.mxu0 0
          %1568 = vmatpush1.bf16.msra.mxu0 0
          %1569 = vmatprep.subr.bf16.mxu0 0
          %1570 = vmatpush1.bf16.msra.mxu0 0
          %1571 = vmatprep.subr.bf16.mxu0 0
          %1572 = vmatpush1.bf16.msra.mxu0 0
          %1573 = vmatprep.subr.bf16.mxu0 0
          %1574 = vmatpush1.bf16.msra.mxu0 %v1555
          %1575 = vmatprep.subr.bf16.mxu0 0
          %1576 = vmatpush1.bf16.msra.mxu0 %v1554
          %1577 = vmatprep.subr.bf16.mxu0 0
          %1578 = vmatpush2.bf16.msra.mxu0 0
          %1579 = vmatprep.subr.bf16.mxu0 0
          %1580 = vmatpush2.bf16.msra.mxu0 0
          %1581 = vmatprep.subr.bf16.mxu0 0
          %1582 = vmatpush2.bf16.msra.mxu0 0
          %1583 = vmatprep.subr.bf16.mxu0 0
          %1584 = vmatpush2.bf16.msra.mxu0 0
          %1585 = vmatprep.subr.bf16.mxu0 0
          %1586 = vmatpush2.bf16.msra.mxu0 0
          %1587 = vmatprep.subr.bf16.mxu0 0
          %1588 = vmatpush2.bf16.msra.mxu0 0
          %1589 = vmatprep.subr.bf16.mxu0 0
          %1590 = vmatpush2.bf16.msra.mxu0 0
          %1591 = vmatprep.subr.bf16.mxu0 0
          %1592 = vmatpush2.bf16.msra.mxu0 0
          %1593 = vmatprep.mubr.bf16.mxu0 0
          %1594 = vmatmul.mubr.bf16.gmra.mxu0 %v1559
          %v1595 = vpop.f32.mrf.mxu0
          %v1596 = vadd.f32 %v1544, %v1595
          %v1597 = vpop.f32.mrf.mxu0
          %v1598 = vpop.f32.mrf.mxu0
          %v1599 = vpop.f32.mrf.mxu0
          %1600 = vdwg.mxu0
          %v1601 = vpack.c.bf16 %v1596, %v1596
          %v1603 = vlaneseq
          %v1604 = vshrl.u32 %v1603, 7
          %v1605 = vsub.s32 0, %v1604
          %v1606 = vrot.slane %v1088, %v1605
          %v1612 = vunpack.c.l.b16 %v1068
          %v1613 = vunpack.c.l.b16 %v1069
          %v1614 = vunpack.c.l.b16 %v1070
          %v1615 = vunpack.c.l.b16 %v1071
          %v1616 = vpack.c.b16 %v1613, %v1612
          %v1617 = vpack.c.b16 %v1615, %v1614
          %v1621 = vsel %vm1208, %v1601, 0
          %1623 = vmatprep.subr.bf16.mxu0 0
          %1624 = vmatpush1.bf16.msra.mxu0 0
          %1625 = vmatprep.subr.bf16.mxu0 0
          %1626 = vmatpush1.bf16.msra.mxu0 0
          %1627 = vmatprep.subr.bf16.mxu0 0
          %1628 = vmatpush1.bf16.msra.mxu0 0
          %1629 = vmatprep.subr.bf16.mxu0 0
          %1630 = vmatpush1.bf16.msra.mxu0 0
          %1631 = vmatprep.subr.bf16.mxu0 0
          %1632 = vmatpush1.bf16.msra.mxu0 0
          %1633 = vmatprep.subr.bf16.mxu0 0
          %1634 = vmatpush1.bf16.msra.mxu0 0
          %1635 = vmatprep.subr.bf16.mxu0 0
          %1636 = vmatpush1.bf16.msra.mxu0 %v1617
          %1637 = vmatprep.subr.bf16.mxu0 0
          %1638 = vmatpush1.bf16.msra.mxu0 %v1616
          %1639 = vmatprep.subr.bf16.mxu0 0
          %1640 = vmatpush2.bf16.msra.mxu0 0
          %1641 = vmatprep.subr.bf16.mxu0 0
          %1642 = vmatpush2.bf16.msra.mxu0 0
          %1643 = vmatprep.subr.bf16.mxu0 0
          %1644 = vmatpush2.bf16.msra.mxu0 0
          %1645 = vmatprep.subr.bf16.mxu0 0
          %1646 = vmatpush2.bf16.msra.mxu0 0
          %1647 = vmatprep.subr.bf16.mxu0 0
          %1648 = vmatpush2.bf16.msra.mxu0 0
          %1649 = vmatprep.subr.bf16.mxu0 0
          %1650 = vmatpush2.bf16.msra.mxu0 0
          %1651 = vmatprep.subr.bf16.mxu0 0
          %1652 = vmatpush2.bf16.msra.mxu0 0
          %1653 = vmatprep.subr.bf16.mxu0 0
          %1654 = vmatpush2.bf16.msra.mxu0 0
          %1655 = vmatprep.mubr.bf16.mxu0 0
          %1656 = vmatmul.mubr.bf16.gmra.mxu0 %v1621
          %v1657 = vpop.f32.mrf.mxu0
          %v1658 = vadd.f32 %v1606, %v1657
          %v1659 = vpop.f32.mrf.mxu0
          %v1660 = vpop.f32.mrf.mxu0
          %v1661 = vpop.f32.mrf.mxu0
          %1662 = vdwg.mxu0
          %v1663 = vadd.f32 %v1596, %v1658
          %v1664 = vsel %vm1208, %v1663, 0.0
          %1665 = vadd.xlane.f32.xlu0 %v1664
          %v1666 = vpop.xlane.xlu0 %1665
          %v1667 = vmul.f32 %v1666, %v1212
          %v1668 = vsub.f32 %v1663, %v1667
          %v1669 = vmul.f32 %v1668, %v1668
          %v1670 = vsel %vm1208, %v1669, 0.0
          %1671 = vadd.xlane.f32.xlu0 %v1670
          %v1672 = vpop.xlane.xlu0 %1671
          %v1673 = vmul.f32 %v1672, %v1212
          %v1674 = vadd.f32 %v1673, 1e-05
          %v1675 = vrsqrt.pop %v1674
          %v1676 = vmul.f32 %v1668, %v1675
          %v1678 = vlaneseq
          %v1679 = vshrl.u32 %v1678, 7
          %v1680 = vsub.s32 0, %v1679
          %v1681 = vrot.slane %v1093, %v1680
          %v1683 = vmul.f32 %v1676, %v1681
          %v1685 = vlaneseq
          %v1686 = vshrl.u32 %v1685, 7
          %v1687 = vsub.s32 0, %v1686
          %v1688 = vrot.slane %v1094, %v1687
          %v1690 = vadd.f32 %v1683, %v1688
          %v1691 = vpack.c.bf16 %v1690, %v1690
          %v1693 = vlaneseq
          %v1694 = vshrl.u32 %v1693, 7
          %v1695 = vsub.s32 0, %v1694
          %v1696 = vrot.slane %v1089, %v1695
          %v1702 = vunpack.c.l.b16 %v1072
          %v1703 = vunpack.c.l.b16 %v1073
          %v1704 = vunpack.c.l.b16 %v1074
          %v1705 = vunpack.c.l.b16 %v1075
          %v1706 = vpack.c.b16 %v1703, %v1702
          %v1707 = vpack.c.b16 %v1705, %v1704
          %v1711 = vsel %vm1208, %v1691, 0
          %1713 = vmatprep.subr.bf16.mxu0 0
          %1714 = vmatpush1.bf16.msra.mxu0 0
          %1715 = vmatprep.subr.bf16.mxu0 0
          %1716 = vmatpush1.bf16.msra.mxu0 0
          %1717 = vmatprep.subr.bf16.mxu0 0
          %1718 = vmatpush1.bf16.msra.mxu0 0
          %1719 = vmatprep.subr.bf16.mxu0 0
          %1720 = vmatpush1.bf16.msra.mxu0 0
          %1721 = vmatprep.subr.bf16.mxu0 0
          %1722 = vmatpush1.bf16.msra.mxu0 0
          %1723 = vmatprep.subr.bf16.mxu0 0
          %1724 = vmatpush1.bf16.msra.mxu0 0
          %1725 = vmatprep.subr.bf16.mxu0 0
          %1726 = vmatpush1.bf16.msra.mxu0 %v1707
          %1727 = vmatprep.subr.bf16.mxu0 0
          %1728 = vmatpush1.bf16.msra.mxu0 %v1706
          %1729 = vmatprep.subr.bf16.mxu0 0
          %1730 = vmatpush2.bf16.msra.mxu0 0
          %1731 = vmatprep.subr.bf16.mxu0 0
          %1732 = vmatpush2.bf16.msra.mxu0 0
          %1733 = vmatprep.subr.bf16.mxu0 0
          %1734 = vmatpush2.bf16.msra.mxu0 0
          %1735 = vmatprep.subr.bf16.mxu0 0
          %1736 = vmatpush2.bf16.msra.mxu0 0
          %1737 = vmatprep.subr.bf16.mxu0 0
          %1738 = vmatpush2.bf16.msra.mxu0 0
          %1739 = vmatprep.subr.bf16.mxu0 0
          %1740 = vmatpush2.bf16.msra.mxu0 0
          %1741 = vmatprep.subr.bf16.mxu0 0
          %1742 = vmatpush2.bf16.msra.mxu0 0
          %1743 = vmatprep.subr.bf16.mxu0 0
          %1744 = vmatpush2.bf16.msra.mxu0 0
          %1745 = vmatprep.mubr.bf16.mxu0 0
          %1746 = vmatmul.mubr.bf16.gmra.mxu0 %v1711
          %v1747 = vpop.f32.mrf.mxu0
          %v1748 = vadd.f32 %v1696, %v1747
          %v1749 = vpop.f32.mrf.mxu0
          %v1750 = vpop.f32.mrf.mxu0
          %v1751 = vpop.f32.mrf.mxu0
          %1752 = vdwg.mxu0
          %v1753 = vmax.f32 %v1748, 0.0
          %v1754 = vpack.c.bf16 %v1753, %v1753
          %v1756 = vlaneseq
          %v1757 = vshrl.u32 %v1756, 7
          %v1758 = vsub.s32 0, %v1757
          %v1759 = vrot.slane %v1090, %v1758
          %v1769 = vunpack.c.l.b16 %v1076
          %v1770 = vunpack.c.l.b16 %v1077
          %v1771 = vunpack.c.l.b16 %v1078
          %v1772 = vunpack.c.l.b16 %v1079
          %v1773 = vunpack.c.l.b16 %v1080
          %v1774 = vunpack.c.l.b16 %v1081
          %v1775 = vunpack.c.l.b16 %v1082
          %v1776 = vunpack.c.l.b16 %v1083
          %v1777 = vpack.c.b16 %v1770, %v1769
          %v1778 = vpack.c.b16 %v1772, %v1771
          %v1779 = vpack.c.b16 %v1774, %v1773
          %v1780 = vpack.c.b16 %v1776, %v1775
          %vm1785 = vcmask 523264
          %v1787 = vsel %vm1785, %v1754, 0
          %1789 = vmatprep.subr.bf16.mxu0 0
          %1790 = vmatpush1.bf16.msra.mxu0 0
          %1791 = vmatprep.subr.bf16.mxu0 0
          %1792 = vmatpush1.bf16.msra.mxu0 0
          %1793 = vmatprep.subr.bf16.mxu0 0
          %1794 = vmatpush1.bf16.msra.mxu0 0
          %1795 = vmatprep.subr.bf16.mxu0 0
          %1796 = vmatpush1.bf16.msra.mxu0 0
          %1797 = vmatprep.subr.bf16.mxu0 0
          %1798 = vmatpush1.bf16.msra.mxu0 %v1780
          %1799 = vmatprep.subr.bf16.mxu0 0
          %1800 = vmatpush1.bf16.msra.mxu0 %v1779
          %1801 = vmatprep.subr.bf16.mxu0 0
          %1802 = vmatpush1.bf16.msra.mxu0 %v1778
          %1803 = vmatprep.subr.bf16.mxu0 0
          %1804 = vmatpush1.bf16.msra.mxu0 %v1777
          %1805 = vmatprep.subr.bf16.mxu0 0
          %1806 = vmatpush2.bf16.msra.mxu0 0
          %1807 = vmatprep.subr.bf16.mxu0 0
          %1808 = vmatpush2.bf16.msra.mxu0 0
          %1809 = vmatprep.subr.bf16.mxu0 0
          %1810 = vmatpush2.bf16.msra.mxu0 0
          %1811 = vmatprep.subr.bf16.mxu0 0
          %1812 = vmatpush2.bf16.msra.mxu0 0
          %1813 = vmatprep.subr.bf16.mxu0 0
          %1814 = vmatpush2.bf16.msra.mxu0 0
          %1815 = vmatprep.subr.bf16.mxu0 0
          %1816 = vmatpush2.bf16.msra.mxu0 0
          %1817 = vmatprep.subr.bf16.mxu0 0
          %1818 = vmatpush2.bf16.msra.mxu0 0
          %1819 = vmatprep.subr.bf16.mxu0 0
          %1820 = vmatpush2.bf16.msra.mxu0 0
          %1821 = vmatprep.mubr.bf16.mxu0 0
          %1822 = vmatmul.mubr.bf16.gmra.mxu0 %v1787
          %v1823 = vpop.f32.mrf.mxu0
          %v1824 = vadd.f32 %v1759, %v1823
          %v1825 = vpop.f32.mrf.mxu0
          %v1826 = vpop.f32.mrf.mxu0
          %v1827 = vpop.f32.mrf.mxu0
          %1828 = vdwg.mxu0
          %v1829 = vadd.f32 %v1690, %v1824
          %v1830 = vsel %vm1208, %v1829, 0.0
          %1831 = vadd.xlane.f32.xlu0 %v1830
          %v1832 = vpop.xlane.xlu0 %1831
          %v1833 = vmul.f32 %v1832, %v1212
          %v1834 = vsub.f32 %v1829, %v1833
          %v1835 = vmul.f32 %v1834, %v1834
          %v1836 = vsel %vm1208, %v1835, 0.0
          %1837 = vadd.xlane.f32.xlu0 %v1836
          %v1838 = vpop.xlane.xlu0 %1837
          %v1839 = vmul.f32 %v1838, %v1212
          %v1840 = vadd.f32 %v1839, 1e-05
          %v1841 = vrsqrt.pop %v1840
          %v1842 = vmul.f32 %v1834, %v1841
          %v1844 = vlaneseq
          %v1845 = vshrl.u32 %v1844, 7
          %v1846 = vsub.s32 0, %v1845
          %v1847 = vrot.slane %v1095, %v1846
          %v1849 = vmul.f32 %v1842, %v1847
          %v1851 = vlaneseq
          %v1852 = vshrl.u32 %v1851, 7
          %v1853 = vsub.s32 0, %v1852
          %v1854 = vrot.slane %v1096, %v1853
          %v1856 = vadd.f32 %v1849, %v1854
        $region193: #{tpu_custom_call.1} parent=127 // loop_footer
          %s1243 = sadd.s32 1, %s1239
        $region194: #{tpu_custom_call.1} parent=127 // loop_footer_branch
          %1238 = sbr.rel target = $region190
        $region195: #{tpu_custom_call.1} parent=127 // loop_exit
          _
        %1857 = vst.msk [vmem:[%s1044] sm:$0xff] %vm1208, %v1244
        %s1858 = sand.u32 %s643, 1
        %s1859 = scalar_lea.sflag [#allocation4], %s1858
        %s1860 = sand.u32 %s643, 1
        %s1861 = smul.addr %s1860, 8
        %s1862 = scalar_lea.vmem [#allocation26], %s1861
        // Predicated region
        $region196: #{tpu_custom_call.1} parent=127 // pred_check
          %p1863 = pneg %p653
        $region197: #{tpu_custom_call.1} parent=127 // pred_check_branch
          %1865 = sbr.rel (%p1863) target = $region199
        $region198: #{tpu_custom_call.1} parent=127 // pred_region
          %s1867 = ssub.s32 128, 128
          %1868 = vsyncadd %s1859, %s1867
          %s1869 = smul.addr %s53, 128
          %s1870 = scalar_lea.hbm %s27, %s1869
          %s1872 = sshll.u32 %s1862, 4
          %s1873 = int_to_ptr.vmem [resolvable:$true] %s1872
          %1875 = dma.vmem_to_hbm [thread:$0]  %s1873, 128, %s1870, %s1859
        $region199: #{tpu_custom_call.1} parent=127 // pred_fallthru
          _
      $region128: #{tpu_custom_call.1} parent=5 // pred_fallthru
        _
      %p1876 = scmp.le.s32.totalorder 2, %s48
      // Predicated region
      $region200: #{tpu_custom_call.1} parent=5 // pred_check
        %p1877 = pneg %p1876
      $region201: #{tpu_custom_call.1} parent=5 // pred_check_branch
        %1879 = sbr.rel (%p1877) target = $region203
      $region202: #{tpu_custom_call.1} parent=5 // pred_region
        %s1880 = ssub.s32 %s48, 2
        // Predicated region
        $region204: #{tpu_custom_call.1} parent=202 // pred_check
          %p1881 = pneg %p659
        $region205: #{tpu_custom_call.1} parent=202 // pred_check_branch
          %1883 = sbr.rel (%p1881) target = $region207
        $region206: #{tpu_custom_call.1} parent=202 // pred_region
          %s1884 = sand.u32 %s644, 1
          %s1885 = scalar_lea.sflag [#allocation4], %s1884
          %s1886 = sand.u32 %s644, 1
          %s1887 = smul.addr %s1886, 8
          %s1888 = scalar_lea.vmem [#allocation26], %s1887
          %1889 = dma.done %s1885, 128
        $region207: #{tpu_custom_call.1} parent=202 // pred_fallthru
          _
      $region203: #{tpu_custom_call.1} parent=5 // pred_fallthru
        _
    $region6: #{tpu_custom_call.1} parent=1 // loop_footer
      %s52 = sadd.s32 1, %s48
    $region7: #{tpu_custom_call.1} parent=1 // loop_footer_branch
      %47 = sbr.rel target = $region3
    $region8: #{tpu_custom_call.1} parent=1 // loop_exit
      _
    %1890 = vsyncpa [#allocation3], 1
    %s1891 = scalar_lea.sflag [#allocation3], 1
    %1892 = vsyncpa %s1891, 1
    %1893 = vsyncpa [#allocation6], 1
    %1894 = vsyncpa [#allocation9], 1
    %s1895 = scalar_lea.sflag [#allocation9], 1
    %1896 = vsyncpa %s1895, 1
    %1897 = vsyncpa [#allocation12], 1
    %1898 = vsyncpa [#allocation15], 1
    %1899 = vsyncpa [#allocation18], 1
    %1900 = vsyncpa [#allocation21], 1
    %1901 = vsyncpa [#allocation24], 1
    %1902 = vsyncpa [#allocation4], 1
    %s1903 = scalar_lea.sflag [#allocation4], 1
    %1904 = vsyncpa %s1903, 1

</llo_original>
